<compile_context>
chip_gen: v7x
topology: tpu7x:2x2x1
jax: 0.10.0
libtpu: 0.0.40
codegen_flags: <defaults>
</compile_context>

<pallas_src>
import functools

import jax
import jax.numpy as jnp
from jax import lax
from jax.experimental import pallas as pl
from jax.experimental.pallas import tpu as pltpu


_VMEM_SPEC = pl.BlockSpec(memory_space=pltpu.MemorySpace.VMEM)


# ---------------------------------------------------------------------------
# Fused forward kernel (whole arrays resident in VMEM; shapes are tiny)
# ---------------------------------------------------------------------------
def _wide_forward_kernel(x_ref, w1_ref, b1_ref, w2_ref, b2_ref, wc_ref, bc_ref,
                         o_ref, a2f_ref, *, N, H):
    # x_ref   : (N*H, W*C1) f32   lane-dense input (NHWC collapsed on W,C)
    # w1_ref  : (3, W*C1, W*C2) bf16  banded conv weight, section 1 (branches fused)
    # b1_ref  : (1, W*C2) f32         bias tiled across W
    # w2_ref  : (3, W*C2, W*C2) bf16  banded conv weight, section 2 (branches fused)
    # b2_ref  : (1, W*C2) f32
    # wc_ref  : (OP, H*W*C2) bf16     classifier weight, NHWC-permuted, O padded->OP
    # bc_ref  : (1, OP) f32
    # o_ref   : (N, OP) f32           logits (first 10 columns valid)
    # a2f_ref : (N, H*W*C2) bf16      scratch: classifier LHS relayout
    NH, _ = x_ref.shape
    WC2 = b1_ref.shape[-1]

    # Height-padding / batch-boundary masks for the roll-based row shifts.
    # Activation rows live on sublanes as r = n*H + h.
    h_idx = lax.broadcasted_iota(jnp.int32, (NH, 1), 0) % H
    top_mask = h_idx != 0          # dy=0 tap reads row h-1 -> invalid at h == 0
    bot_mask = h_idx != H - 1      # dy=2 tap reads row h+1 -> invalid at h == H-1

    def conv3x3_relu(x, w_ref, b_ref):
        # x: (N*H, W*Cin) f32.  Width taps + width zero-padding are folded into
        # the banded weights; height taps are XLU sublane rolls + edge masks
        # (masks also kill the batch-boundary wraparound of the roll).
        x_up = jnp.where(top_mask, pltpu.roll(x, shift=1, axis=0), 0.0)
        # shift=NH-1 == shift=-1 (row r gets row r+1), kept positive for safety.
        x_dn = jnp.where(bot_mask, pltpu.roll(x, shift=NH - 1, axis=0), 0.0)
        acc = jnp.dot(x_up.astype(jnp.bfloat16), w_ref[0],
                      preferred_element_type=jnp.float32)
        acc = acc + jnp.dot(x.astype(jnp.bfloat16), w_ref[1],
                            preferred_element_type=jnp.float32)
        acc = acc + jnp.dot(x_dn.astype(jnp.bfloat16), w_ref[2],
                            preferred_element_type=jnp.float32)
        return jnp.maximum(acc + b_ref[...], 0.0)

    # ---- section 1 + section 2: fused 2-branch Conv3x3(pad=1) + ReLU -------
    a1 = conv3x3_relu(x_ref[...], w1_ref, b1_ref)       # (N*H, W*C2)
    a2 = conv3x3_relu(a1, w2_ref, b2_ref)                # (N*H, W*C2)

    # ---- classifier: relayout (H on sublanes -> H on lanes), 1 long-K matmul
    a2_3d = a2.reshape(N, H, WC2)                        # tile-aligned split
    for h in range(H):                                   # 16 lane-aligned stores
        a2f_ref[:, h * WC2:(h + 1) * WC2] = a2_3d[:, h, :].astype(jnp.bfloat16)

    logits = lax.dot_general(
        a2f_ref[...], wc_ref[...],                       # (N, HWC2) x (OP, HWC2)^T
        dimension_numbers=(((1,), (1,)), ((), ())),
        preferred_element_type=jnp.float32)
    o_ref[...] = logits + bc_ref[...]


# ---------------------------------------------------------------------------
# Host-side one-time parameter preparation
# ---------------------------------------------------------------------------
def _fuse_branches(section):
    """Concatenate branch conv weights/biases along Cout (== torch.cat(.., 1))."""
    ws = [w for (w, _) in section]
    bs = [b for (_, b) in section]
    return jnp.concatenate(ws, axis=0), jnp.concatenate(bs, axis=0)


def _banded_conv_weights(w_oihw, b, W):
    """Fold 3x3 width taps + width zero-padding into 3 (W*Cin, W*Cout) bands."""
    Cout, Cin, KH, KW = w_oihw.shape
    k = jnp.transpose(w_oihw, (2, 3, 1, 0)).astype(jnp.float32)   # (KH,KW,Cin,Cout)
    pad = (KW - 1) // 2
    # sel[dx, w_in, w_out] = 1 iff w_in == w_out + dx - pad (zero outside => padding)
    sel = jnp.stack([jnp.eye(W, k=pad - dx, dtype=jnp.float32) for dx in range(KW)])
    band = jnp.einsum("xab,yxio->yaibo", sel, k)                  # (KH,W,Cin,W,Cout)
    band = band.reshape(KH, W * Cin, W * Cout)
    b_row = jnp.tile(b.astype(jnp.float32), W).reshape(1, W * Cout)
    return band.astype(jnp.bfloat16), b_row


def prepare_kernel_params(params, H, W):
    sec1, sec2 = params["feature_layers"]
    w1_oihw, b1 = _fuse_branches(sec1)
    w2_oihw, b2 = _fuse_branches(sec2)
    w1_band, b1_row = _banded_conv_weights(w1_oihw, b1, W)
    w2_band, b2_row = _banded_conv_weights(w2_oihw, b2, W)

    w_cls, b_cls = params["classifier"]
    C2 = w2_oihw.shape[0]                       # channels after section-2 concat
    O = w_cls.shape[0]
    OP = ((O + 7) // 8) * 8                     # sublane-friendly padding (10 -> 16)
    # Permute classifier columns from NCHW-flatten order to the kernel's
    # (h*W*C2 + w*C2 + c) order; keep O on the sublane axis (no lane blowup).
    wc = w_cls.reshape(O, C2, H, W)
    wc = jnp.transpose(wc, (0, 2, 3, 1)).reshape(O, H * W * C2)
    wc = jnp.pad(wc, ((0, OP - O), (0, 0))).astype(jnp.bfloat16)
    bc = jnp.pad(b_cls, (0, OP - O)).reshape(1, OP).astype(jnp.float32)

    kp = {"w1": w1_band, "b1": b1_row, "w2": w2_band, "b2": b2_row,
          "wc": wc, "bc": bc}
    return kp, O


# ---------------------------------------------------------------------------
# Forward wrapper: one layout op -> one pallas_call -> one slice
# ---------------------------------------------------------------------------
@functools.partial(jax.jit, static_argnames=("num_classes",))
def wide_model_forward(x_nchw, kp, *, num_classes):
    N, C1, H, W = x_nchw.shape
    WC1 = W * C1
    WC2 = kp["b1"].shape[-1]
    OP = kp["bc"].shape[-1]

    # single boundary layout op: NCHW -> (N*H, W*C)
    x_prep = jnp.transpose(x_nchw, (0, 2, 3, 1)).reshape(N * H, WC1)

    kern = functools.partial(_wide_forward_kernel, N=N, H=H)
    out = pl.pallas_call(
        kern,
        out_shape=jax.ShapeDtypeStruct((N, OP), jnp.float32),
        in_specs=[_VMEM_SPEC] * 7,
        out_specs=_VMEM_SPEC,
        scratch_shapes=[
            pltpu.VMEM((N, H * WC2), jnp.bfloat16),   # classifier LHS relayout
        ],
    )(x_prep, kp["w1"], kp["b1"], kp["w2"], kp["b2"], kp["wc"], kp["bc"])
    return out[:, :num_classes]


# ---------------------------------------------------------------------------
# Pure-JAX reference (mirrors the PyTorch forward exactly, full f32)
# ---------------------------------------------------------------------------
def _ref_conv_relu(x, w, b):
    y = lax.conv_general_dilated(
        x, w, window_strides=(1, 1), padding="SAME",
        dimension_numbers=("NCHW", "OIHW", "NCHW"))
    return jnp.maximum(y + b[None, :, None, None], 0.0)


def _ref_forward(x, params):
    inp = x
    for section in params["feature_layers"]:
        outs = [_ref_conv_relu(inp, w, b) for (w, b) in section]
        inp = outs[0] if len(outs) == 1 else jnp.concatenate(outs, axis=1)
    inp = inp.reshape(inp.shape[0], -1)
    w_cls, b_cls = params["classifier"]
    return inp @ w_cls.T + b_cls[None, :]


# ---------------------------------------------------------------------------
# Parameter init + main
# ---------------------------------------------------------------------------
def make_params(key):
    def conv_params(k, cin, cout):
        k1, k2 = jax.random.split(k)
        w = jax.random.normal(k1, (cout, cin, 3, 3), jnp.float32) * 0.1   # OIHW
        b = jax.random.normal(k2, (cout,), jnp.float32) * 0.1
        return (w, b)

    keys = jax.random.split(key, 6)
    sec1 = [conv_params(keys[0], 4, 8), conv_params(keys[1], 4, 8)]
    sec2 = [conv_params(keys[2], 16, 8), conv_params(keys[3], 16, 8)]
    feat_dim = 16 * 16 * 16
    w_cls = jax.random.normal(keys[4], (10, feat_dim), jnp.float32) * 0.02
    b_cls = jax.random.normal(keys[5], (10,), jnp.float32) * 0.02
    return {"feature_layers": [sec1, sec2], "classifier": (w_cls, b_cls)}


if __name__ == "__main__":
    key = jax.random.PRNGKey(0)
    k_x, k_p = jax.random.split(key)
    x = jax.random.normal(k_x, (2, 4, 16, 16), jnp.float32)    # NCHW input
    params = make_params(k_p)

    kp, num_classes = prepare_kernel_params(params, H=16, W=16)
    out = wide_model_forward(x, kp, num_classes=num_classes)
    out = jax.block_until_ready(out)

    ref = _ref_forward(x, params)
    assert out.shape == (2, 10), out.shape
    max_err = float(jnp.max(jnp.abs(out - ref)))
    # bf16 weights/activations with f32 accumulation: tolerance loosened to 2e-2.
    assert jnp.allclose(out, ref, atol=2e-2, rtol=2e-2), max_err
    print("KERNEL_OK")
</pallas_src>

<mosaic_0001>
module attributes {stable_mosaic.version = 11 : i64} {
  func.func @_wide_forward_kernel(%arg0: memref<32x64xf32, #tpu.memory_space<vmem>>, %arg1: memref<3x64x256xbf16, #tpu.memory_space<vmem>>, %arg2: memref<1x256xf32, #tpu.memory_space<vmem>>, %arg3: memref<3x256x256xbf16, #tpu.memory_space<vmem>>, %arg4: memref<1x256xf32, #tpu.memory_space<vmem>>, %arg5: memref<16x4096xbf16, #tpu.memory_space<vmem>>, %arg6: memref<1x16xf32, #tpu.memory_space<vmem>>, %arg7: memref<2x16xf32, #tpu.memory_space<vmem>>, %arg8: memref<2x4096xbf16, #tpu.memory_space<vmem>>) attributes {dimension_semantics = [], scalar_prefetch = 0 : i64, scratch_operands = 1 : i64, tpu.core_type = #tpu.core_type<tc>} {
    %0 = tpu.iota {dimensions = array<i32: 0>} : vector<32x1xi32>
    %c16_i32 = arith.constant 16 : i32
    %c0_i32 = arith.constant 0 : i32
    %1 = arith.cmpi eq, %c16_i32, %c0_i32 : i32
    %c1_i32 = arith.constant 1 : i32
    %2 = arith.select %1, %c1_i32, %c16_i32 : i32
    %3 = vector.broadcast %2 : i32 to vector<32x1xi32>
    %4 = arith.remsi %0, %3 : vector<32x1xi32>
    %c0_i32_0 = arith.constant 0 : i32
    %5 = vector.broadcast %c0_i32_0 : i32 to vector<32x1xi32>
    %6 = arith.cmpi ne, %4, %5 : vector<32x1xi32>
    %c0_i32_1 = arith.constant 0 : i32
    %7 = vector.broadcast %c0_i32_1 : i32 to vector<32x1xi32>
    %8 = arith.cmpi slt, %4, %7 : vector<32x1xi32>
    %c0_i32_2 = arith.constant 0 : i32
    %9 = arith.cmpi slt, %2, %c0_i32_2 : i32
    %10 = vector.broadcast %9 : i1 to vector<32x1xi1>
    %11 = vector.broadcast %10 : vector<32x1xi1> to vector<32x1xi1>
    %12 = arith.xori %8, %11 : vector<32x1xi1>
    %13 = arith.andi %12, %6 : vector<32x1xi1>
    %14 = vector.broadcast %2 : i32 to vector<32x1xi32>
    %15 = arith.addi %4, %14 : vector<32x1xi32>
    %16 = arith.select %13, %15, %4 : vector<32x1xi1>, vector<32x1xi32>
    %c0_i32_3 = arith.constant 0 : i32
    %17 = vector.broadcast %c0_i32_3 : i32 to vector<32x1xi32>
    %18 = arith.cmpi ne, %16, %17 : vector<32x1xi32>
    %c15_i32 = arith.constant 15 : i32
    %19 = vector.broadcast %c15_i32 : i32 to vector<32x1xi32>
    %20 = arith.cmpi ne, %16, %19 : vector<32x1xi32>
    %c0 = arith.constant 0 : index
    %c0_4 = arith.constant 0 : index
    %21 = vector.load %arg0[%c0, %c0_4] : memref<32x64xf32, #tpu.memory_space<vmem>>, vector<32x64xf32>
    %c1_i32_5 = arith.constant 1 : i32
    %22 = tpu.dynamic_rotate %21 by %c1_i32_5 dim 0 : vector<32x64xf32>, i32 -> vector<32x64xf32>
    %cst = arith.constant 0.000000e+00 : f32
    %23 = vector.shape_cast %18 : vector<32x1xi1> to vector<32x1xi1>
    %24 = vector.broadcast %23 : vector<32x1xi1> to vector<32x64xi1>
    %25 = vector.broadcast %cst : f32 to vector<32x64xf32>
    %26 = arith.select %24, %22, %25 : vector<32x64xi1>, vector<32x64xf32>
    %c31_i32 = arith.constant 31 : i32
    %27 = tpu.dynamic_rotate %21 by %c31_i32 dim 0 : vector<32x64xf32>, i32 -> vector<32x64xf32>
    %cst_6 = arith.constant 0.000000e+00 : f32
    %28 = vector.shape_cast %20 : vector<32x1xi1> to vector<32x1xi1>
    %29 = vector.broadcast %28 : vector<32x1xi1> to vector<32x64xi1>
    %30 = vector.broadcast %cst_6 : f32 to vector<32x64xf32>
    %31 = arith.select %29, %27, %30 : vector<32x64xi1>, vector<32x64xf32>
    %32 = arith.truncf %26 : vector<32x64xf32> to vector<32x64xbf16>
    %c0_7 = arith.constant 0 : index
    %c0_8 = arith.constant 0 : index
    %c0_9 = arith.constant 0 : index
    %33 = vector.load %arg1[%c0_7, %c0_8, %c0_9] : memref<3x64x256xbf16, #tpu.memory_space<vmem>>, vector<1x64x256xbf16>
    %34 = vector.shape_cast %33 : vector<1x64x256xbf16> to vector<64x256xbf16>
    %cst_10 = arith.constant dense<0.000000e+00> : vector<32x256xf32>
    %35 = tpu.matmul %32, %34, %cst_10 {dimension_numbers = #tpu.dot_dimension_numbers<[1], [0], [0], [1], [0, 0, 1, 1], [], []>} : vector<32x64xbf16>, vector<64x256xbf16>, vector<32x256xf32> -> vector<32x256xf32>
    %36 = arith.truncf %21 : vector<32x64xf32> to vector<32x64xbf16>
    %c1 = arith.constant 1 : index
    %c0_11 = arith.constant 0 : index
    %c0_12 = arith.constant 0 : index
    %37 = vector.load %arg1[%c1, %c0_11, %c0_12] : memref<3x64x256xbf16, #tpu.memory_space<vmem>>, vector<1x64x256xbf16>
    %38 = vector.shape_cast %37 : vector<1x64x256xbf16> to vector<64x256xbf16>
    %cst_13 = arith.constant dense<0.000000e+00> : vector<32x256xf32>
    %39 = tpu.matmul %36, %38, %cst_13 {dimension_numbers = #tpu.dot_dimension_numbers<[1], [0], [0], [1], [0, 0, 1, 1], [], []>} : vector<32x64xbf16>, vector<64x256xbf16>, vector<32x256xf32> -> vector<32x256xf32>
    %40 = arith.addf %35, %39 : vector<32x256xf32>
    %41 = arith.truncf %31 : vector<32x64xf32> to vector<32x64xbf16>
    %c2 = arith.constant 2 : index
    %c0_14 = arith.constant 0 : index
    %c0_15 = arith.constant 0 : index
    %42 = vector.load %arg1[%c2, %c0_14, %c0_15] : memref<3x64x256xbf16, #tpu.memory_space<vmem>>, vector<1x64x256xbf16>
    %43 = vector.shape_cast %42 : vector<1x64x256xbf16> to vector<64x256xbf16>
    %cst_16 = arith.constant dense<0.000000e+00> : vector<32x256xf32>
    %44 = tpu.matmul %41, %43, %cst_16 {dimension_numbers = #tpu.dot_dimension_numbers<[1], [0], [0], [1], [0, 0, 1, 1], [], []>} : vector<32x64xbf16>, vector<64x256xbf16>, vector<32x256xf32> -> vector<32x256xf32>
    %45 = arith.addf %40, %44 : vector<32x256xf32>
    %c0_17 = arith.constant 0 : index
    %c0_18 = arith.constant 0 : index
    %46 = vector.load %arg2[%c0_17, %c0_18] : memref<1x256xf32, #tpu.memory_space<vmem>>, vector<1x256xf32>
    %47 = vector.broadcast %46 : vector<1x256xf32> to vector<32x256xf32>
    %48 = arith.addf %45, %47 : vector<32x256xf32>
    %cst_19 = arith.constant 0.000000e+00 : f32
    %49 = vector.broadcast %cst_19 : f32 to vector<32x256xf32>
    %50 = arith.maximumf %48, %49 : vector<32x256xf32>
    %c1_i32_20 = arith.constant 1 : i32
    %51 = tpu.dynamic_rotate %50 by %c1_i32_20 dim 0 : vector<32x256xf32>, i32 -> vector<32x256xf32>
    %cst_21 = arith.constant 0.000000e+00 : f32
    %52 = vector.shape_cast %18 : vector<32x1xi1> to vector<32x1xi1>
    %53 = vector.broadcast %52 : vector<32x1xi1> to vector<32x256xi1>
    %54 = vector.broadcast %cst_21 : f32 to vector<32x256xf32>
    %55 = arith.select %53, %51, %54 : vector<32x256xi1>, vector<32x256xf32>
    %c31_i32_22 = arith.constant 31 : i32
    %56 = tpu.dynamic_rotate %50 by %c31_i32_22 dim 0 : vector<32x256xf32>, i32 -> vector<32x256xf32>
    %cst_23 = arith.constant 0.000000e+00 : f32
    %57 = vector.shape_cast %20 : vector<32x1xi1> to vector<32x1xi1>
    %58 = vector.broadcast %57 : vector<32x1xi1> to vector<32x256xi1>
    %59 = vector.broadcast %cst_23 : f32 to vector<32x256xf32>
    %60 = arith.select %58, %56, %59 : vector<32x256xi1>, vector<32x256xf32>
    %61 = arith.truncf %55 : vector<32x256xf32> to vector<32x256xbf16>
    %c0_24 = arith.constant 0 : index
    %c0_25 = arith.constant 0 : index
    %c0_26 = arith.constant 0 : index
    %62 = vector.load %arg3[%c0_24, %c0_25, %c0_26] : memref<3x256x256xbf16, #tpu.memory_space<vmem>>, vector<1x256x256xbf16>
    %63 = vector.shape_cast %62 : vector<1x256x256xbf16> to vector<256x256xbf16>
    %cst_27 = arith.constant dense<0.000000e+00> : vector<32x256xf32>
    %64 = tpu.matmul %61, %63, %cst_27 {dimension_numbers = #tpu.dot_dimension_numbers<[1], [0], [0], [1], [0, 0, 1, 1], [], []>} : vector<32x256xbf16>, vector<256x256xbf16>, vector<32x256xf32> -> vector<32x256xf32>
    %65 = arith.truncf %50 : vector<32x256xf32> to vector<32x256xbf16>
    %c1_28 = arith.constant 1 : index
    %c0_29 = arith.constant 0 : index
    %c0_30 = arith.constant 0 : index
    %66 = vector.load %arg3[%c1_28, %c0_29, %c0_30] : memref<3x256x256xbf16, #tpu.memory_space<vmem>>, vector<1x256x256xbf16>
    %67 = vector.shape_cast %66 : vector<1x256x256xbf16> to vector<256x256xbf16>
    %cst_31 = arith.constant dense<0.000000e+00> : vector<32x256xf32>
    %68 = tpu.matmul %65, %67, %cst_31 {dimension_numbers = #tpu.dot_dimension_numbers<[1], [0], [0], [1], [0, 0, 1, 1], [], []>} : vector<32x256xbf16>, vector<256x256xbf16>, vector<32x256xf32> -> vector<32x256xf32>
    %69 = arith.addf %64, %68 : vector<32x256xf32>
    %70 = arith.truncf %60 : vector<32x256xf32> to vector<32x256xbf16>
    %c2_32 = arith.constant 2 : index
    %c0_33 = arith.constant 0 : index
    %c0_34 = arith.constant 0 : index
    %71 = vector.load %arg3[%c2_32, %c0_33, %c0_34] : memref<3x256x256xbf16, #tpu.memory_space<vmem>>, vector<1x256x256xbf16>
    %72 = vector.shape_cast %71 : vector<1x256x256xbf16> to vector<256x256xbf16>
    %cst_35 = arith.constant dense<0.000000e+00> : vector<32x256xf32>
    %73 = tpu.matmul %70, %72, %cst_35 {dimension_numbers = #tpu.dot_dimension_numbers<[1], [0], [0], [1], [0, 0, 1, 1], [], []>} : vector<32x256xbf16>, vector<256x256xbf16>, vector<32x256xf32> -> vector<32x256xf32>
    %74 = arith.addf %69, %73 : vector<32x256xf32>
    %c0_36 = arith.constant 0 : index
    %c0_37 = arith.constant 0 : index
    %75 = vector.load %arg4[%c0_36, %c0_37] : memref<1x256xf32, #tpu.memory_space<vmem>>, vector<1x256xf32>
    %76 = vector.broadcast %75 : vector<1x256xf32> to vector<32x256xf32>
    %77 = arith.addf %74, %76 : vector<32x256xf32>
    %cst_38 = arith.constant 0.000000e+00 : f32
    %78 = vector.broadcast %cst_38 : f32 to vector<32x256xf32>
    %79 = arith.maximumf %77, %78 : vector<32x256xf32>
    %80 = vector.shape_cast %79 : vector<32x256xf32> to vector<2x16x256xf32>
    %81 = vector.extract_strided_slice %80 {offsets = [0, 0, 0], sizes = [2, 1, 256], strides = [1, 1, 1]} : vector<2x16x256xf32> to vector<2x1x256xf32>
    %82 = vector.shape_cast %81 : vector<2x1x256xf32> to vector<2x256xf32>
    %83 = arith.truncf %82 : vector<2x256xf32> to vector<2x256xbf16>
    %c0_39 = arith.constant 0 : index
    %c0_40 = arith.constant 0 : index
    %84 = vector.load %arg8[%c0_39, %c0_40] : memref<2x4096xbf16, #tpu.memory_space<vmem>>, vector<2x256xbf16>
    tpu.vector_store %arg8[%c0_39, %c0_40], %83 {strides = array<i32>} : memref<2x4096xbf16, #tpu.memory_space<vmem>>, vector<2x256xbf16>,
    %85 = vector.extract_strided_slice %80 {offsets = [0, 1, 0], sizes = [2, 1, 256], strides = [1, 1, 1]} : vector<2x16x256xf32> to vector<2x1x256xf32>
    %86 = vector.shape_cast %85 : vector<2x1x256xf32> to vector<2x256xf32>
    %87 = arith.truncf %86 : vector<2x256xf32> to vector<2x256xbf16>
    %c0_41 = arith.constant 0 : index
    %c256 = arith.constant 256 : index
    %88 = vector.load %arg8[%c0_41, %c256] : memref<2x4096xbf16, #tpu.memory_space<vmem>>, vector<2x256xbf16>
    tpu.vector_store %arg8[%c0_41, %c256], %87 {strides = array<i32>} : memref<2x4096xbf16, #tpu.memory_space<vmem>>, vector<2x256xbf16>,
    %89 = vector.extract_strided_slice %80 {offsets = [0, 2, 0], sizes = [2, 1, 256], strides = [1, 1, 1]} : vector<2x16x256xf32> to vector<2x1x256xf32>
    %90 = vector.shape_cast %89 : vector<2x1x256xf32> to vector<2x256xf32>
    %91 = arith.truncf %90 : vector<2x256xf32> to vector<2x256xbf16>
    %c0_42 = arith.constant 0 : index
    %c512 = arith.constant 512 : index
    %92 = vector.load %arg8[%c0_42, %c512] : memref<2x4096xbf16, #tpu.memory_space<vmem>>, vector<2x256xbf16>
    tpu.vector_store %arg8[%c0_42, %c512], %91 {strides = array<i32>} : memref<2x4096xbf16, #tpu.memory_space<vmem>>, vector<2x256xbf16>,
    %93 = vector.extract_strided_slice %80 {offsets = [0, 3, 0], sizes = [2, 1, 256], strides = [1, 1, 1]} : vector<2x16x256xf32> to vector<2x1x256xf32>
    %94 = vector.shape_cast %93 : vector<2x1x256xf32> to vector<2x256xf32>
    %95 = arith.truncf %94 : vector<2x256xf32> to vector<2x256xbf16>
    %c0_43 = arith.constant 0 : index
    %c768 = arith.constant 768 : index
    %96 = vector.load %arg8[%c0_43, %c768] : memref<2x4096xbf16, #tpu.memory_space<vmem>>, vector<2x256xbf16>
    tpu.vector_store %arg8[%c0_43, %c768], %95 {strides = array<i32>} : memref<2x4096xbf16, #tpu.memory_space<vmem>>, vector<2x256xbf16>,
    %97 = vector.extract_strided_slice %80 {offsets = [0, 4, 0], sizes = [2, 1, 256], strides = [1, 1, 1]} : vector<2x16x256xf32> to vector<2x1x256xf32>
    %98 = vector.shape_cast %97 : vector<2x1x256xf32> to vector<2x256xf32>
    %99 = arith.truncf %98 : vector<2x256xf32> to vector<2x256xbf16>
    %c0_44 = arith.constant 0 : index
    %c1024 = arith.constant 1024 : index
    %100 = vector.load %arg8[%c0_44, %c1024] : memref<2x4096xbf16, #tpu.memory_space<vmem>>, vector<2x256xbf16>
    tpu.vector_store %arg8[%c0_44, %c1024], %99 {strides = array<i32>} : memref<2x4096xbf16, #tpu.memory_space<vmem>>, vector<2x256xbf16>,
    %101 = vector.extract_strided_slice %80 {offsets = [0, 5, 0], sizes = [2, 1, 256], strides = [1, 1, 1]} : vector<2x16x256xf32> to vector<2x1x256xf32>
    %102 = vector.shape_cast %101 : vector<2x1x256xf32> to vector<2x256xf32>
    %103 = arith.truncf %102 : vector<2x256xf32> to vector<2x256xbf16>
    %c0_45 = arith.constant 0 : index
    %c1280 = arith.constant 1280 : index
    %104 = vector.load %arg8[%c0_45, %c1280] : memref<2x4096xbf16, #tpu.memory_space<vmem>>, vector<2x256xbf16>
    tpu.vector_store %arg8[%c0_45, %c1280], %103 {strides = array<i32>} : memref<2x4096xbf16, #tpu.memory_space<vmem>>, vector<2x256xbf16>,
    %105 = vector.extract_strided_slice %80 {offsets = [0, 6, 0], sizes = [2, 1, 256], strides = [1, 1, 1]} : vector<2x16x256xf32> to vector<2x1x256xf32>
    %106 = vector.shape_cast %105 : vector<2x1x256xf32> to vector<2x256xf32>
    %107 = arith.truncf %106 : vector<2x256xf32> to vector<2x256xbf16>
    %c0_46 = arith.constant 0 : index
    %c1536 = arith.constant 1536 : index
    %108 = vector.load %arg8[%c0_46, %c1536] : memref<2x4096xbf16, #tpu.memory_space<vmem>>, vector<2x256xbf16>
    tpu.vector_store %arg8[%c0_46, %c1536], %107 {strides = array<i32>} : memref<2x4096xbf16, #tpu.memory_space<vmem>>, vector<2x256xbf16>,
    %109 = vector.extract_strided_slice %80 {offsets = [0, 7, 0], sizes = [2, 1, 256], strides = [1, 1, 1]} : vector<2x16x256xf32> to vector<2x1x256xf32>
    %110 = vector.shape_cast %109 : vector<2x1x256xf32> to vector<2x256xf32>
    %111 = arith.truncf %110 : vector<2x256xf32> to vector<2x256xbf16>
    %c0_47 = arith.constant 0 : index
    %c1792 = arith.constant 1792 : index
    %112 = vector.load %arg8[%c0_47, %c1792] : memref<2x4096xbf16, #tpu.memory_space<vmem>>, vector<2x256xbf16>
    tpu.vector_store %arg8[%c0_47, %c1792], %111 {strides = array<i32>} : memref<2x4096xbf16, #tpu.memory_space<vmem>>, vector<2x256xbf16>,
    %113 = vector.extract_strided_slice %80 {offsets = [0, 8, 0], sizes = [2, 1, 256], strides = [1, 1, 1]} : vector<2x16x256xf32> to vector<2x1x256xf32>
    %114 = vector.shape_cast %113 : vector<2x1x256xf32> to vector<2x256xf32>
    %115 = arith.truncf %114 : vector<2x256xf32> to vector<2x256xbf16>
    %c0_48 = arith.constant 0 : index
    %c2048 = arith.constant 2048 : index
    %116 = vector.load %arg8[%c0_48, %c2048] : memref<2x4096xbf16, #tpu.memory_space<vmem>>, vector<2x256xbf16>
    tpu.vector_store %arg8[%c0_48, %c2048], %115 {strides = array<i32>} : memref<2x4096xbf16, #tpu.memory_space<vmem>>, vector<2x256xbf16>,
    %117 = vector.extract_strided_slice %80 {offsets = [0, 9, 0], sizes = [2, 1, 256], strides = [1, 1, 1]} : vector<2x16x256xf32> to vector<2x1x256xf32>
    %118 = vector.shape_cast %117 : vector<2x1x256xf32> to vector<2x256xf32>
    %119 = arith.truncf %118 : vector<2x256xf32> to vector<2x256xbf16>
    %c0_49 = arith.constant 0 : index
    %c2304 = arith.constant 2304 : index
    %120 = vector.load %arg8[%c0_49, %c2304] : memref<2x4096xbf16, #tpu.memory_space<vmem>>, vector<2x256xbf16>
    tpu.vector_store %arg8[%c0_49, %c2304], %119 {strides = array<i32>} : memref<2x4096xbf16, #tpu.memory_space<vmem>>, vector<2x256xbf16>,
    %121 = vector.extract_strided_slice %80 {offsets = [0, 10, 0], sizes = [2, 1, 256], strides = [1, 1, 1]} : vector<2x16x256xf32> to vector<2x1x256xf32>
    %122 = vector.shape_cast %121 : vector<2x1x256xf32> to vector<2x256xf32>
    %123 = arith.truncf %122 : vector<2x256xf32> to vector<2x256xbf16>
    %c0_50 = arith.constant 0 : index
    %c2560 = arith.constant 2560 : index
    %124 = vector.load %arg8[%c0_50, %c2560] : memref<2x4096xbf16, #tpu.memory_space<vmem>>, vector<2x256xbf16>
    tpu.vector_store %arg8[%c0_50, %c2560], %123 {strides = array<i32>} : memref<2x4096xbf16, #tpu.memory_space<vmem>>, vector<2x256xbf16>,
    %125 = vector.extract_strided_slice %80 {offsets = [0, 11, 0], sizes = [2, 1, 256], strides = [1, 1, 1]} : vector<2x16x256xf32> to vector<2x1x256xf32>
    %126 = vector.shape_cast %125 : vector<2x1x256xf32> to vector<2x256xf32>
    %127 = arith.truncf %126 : vector<2x256xf32> to vector<2x256xbf16>
    %c0_51 = arith.constant 0 : index
    %c2816 = arith.constant 2816 : index
    %128 = vector.load %arg8[%c0_51, %c2816] : memref<2x4096xbf16, #tpu.memory_space<vmem>>, vector<2x256xbf16>
    tpu.vector_store %arg8[%c0_51, %c2816], %127 {strides = array<i32>} : memref<2x4096xbf16, #tpu.memory_space<vmem>>, vector<2x256xbf16>,
    %129 = vector.extract_strided_slice %80 {offsets = [0, 12, 0], sizes = [2, 1, 256], strides = [1, 1, 1]} : vector<2x16x256xf32> to vector<2x1x256xf32>
    %130 = vector.shape_cast %129 : vector<2x1x256xf32> to vector<2x256xf32>
    %131 = arith.truncf %130 : vector<2x256xf32> to vector<2x256xbf16>
    %c0_52 = arith.constant 0 : index
    %c3072 = arith.constant 3072 : index
    %132 = vector.load %arg8[%c0_52, %c3072] : memref<2x4096xbf16, #tpu.memory_space<vmem>>, vector<2x256xbf16>
    tpu.vector_store %arg8[%c0_52, %c3072], %131 {strides = array<i32>} : memref<2x4096xbf16, #tpu.memory_space<vmem>>, vector<2x256xbf16>,
    %133 = vector.extract_strided_slice %80 {offsets = [0, 13, 0], sizes = [2, 1, 256], strides = [1, 1, 1]} : vector<2x16x256xf32> to vector<2x1x256xf32>
    %134 = vector.shape_cast %133 : vector<2x1x256xf32> to vector<2x256xf32>
    %135 = arith.truncf %134 : vector<2x256xf32> to vector<2x256xbf16>
    %c0_53 = arith.constant 0 : index
    %c3328 = arith.constant 3328 : index
    %136 = vector.load %arg8[%c0_53, %c3328] : memref<2x4096xbf16, #tpu.memory_space<vmem>>, vector<2x256xbf16>
    tpu.vector_store %arg8[%c0_53, %c3328], %135 {strides = array<i32>} : memref<2x4096xbf16, #tpu.memory_space<vmem>>, vector<2x256xbf16>,
    %137 = vector.extract_strided_slice %80 {offsets = [0, 14, 0], sizes = [2, 1, 256], strides = [1, 1, 1]} : vector<2x16x256xf32> to vector<2x1x256xf32>
    %138 = vector.shape_cast %137 : vector<2x1x256xf32> to vector<2x256xf32>
    %139 = arith.truncf %138 : vector<2x256xf32> to vector<2x256xbf16>
    %c0_54 = arith.constant 0 : index
    %c3584 = arith.constant 3584 : index
    %140 = vector.load %arg8[%c0_54, %c3584] : memref<2x4096xbf16, #tpu.memory_space<vmem>>, vector<2x256xbf16>
    tpu.vector_store %arg8[%c0_54, %c3584], %139 {strides = array<i32>} : memref<2x4096xbf16, #tpu.memory_space<vmem>>, vector<2x256xbf16>,
    %141 = vector.extract_strided_slice %80 {offsets = [0, 15, 0], sizes = [2, 1, 256], strides = [1, 1, 1]} : vector<2x16x256xf32> to vector<2x1x256xf32>
    %142 = vector.shape_cast %141 : vector<2x1x256xf32> to vector<2x256xf32>
    %143 = arith.truncf %142 : vector<2x256xf32> to vector<2x256xbf16>
    %c0_55 = arith.constant 0 : index
    %c3840 = arith.constant 3840 : index
    %144 = vector.load %arg8[%c0_55, %c3840] : memref<2x4096xbf16, #tpu.memory_space<vmem>>, vector<2x256xbf16>
    tpu.vector_store %arg8[%c0_55, %c3840], %143 {strides = array<i32>} : memref<2x4096xbf16, #tpu.memory_space<vmem>>, vector<2x256xbf16>,
    %c0_56 = arith.constant 0 : index
    %c0_57 = arith.constant 0 : index
    %145 = vector.load %arg8[%c0_56, %c0_57] : memref<2x4096xbf16, #tpu.memory_space<vmem>>, vector<2x4096xbf16>
    %c0_58 = arith.constant 0 : index
    %c0_59 = arith.constant 0 : index
    %146 = vector.load %arg5[%c0_58, %c0_59] : memref<16x4096xbf16, #tpu.memory_space<vmem>>, vector<16x4096xbf16>
    %cst_60 = arith.constant dense<0.000000e+00> : vector<2x16xf32>
    %147 = tpu.matmul %145, %146, %cst_60 {dimension_numbers = #tpu.dot_dimension_numbers<[1], [1], [0], [0], [0, 0, 1, 0], [], []>} : vector<2x4096xbf16>, vector<16x4096xbf16>, vector<2x16xf32> -> vector<2x16xf32>
    %c0_61 = arith.constant 0 : index
    %c0_62 = arith.constant 0 : index
    %148 = vector.load %arg6[%c0_61, %c0_62] : memref<1x16xf32, #tpu.memory_space<vmem>>, vector<1x16xf32>
    %149 = vector.broadcast %148 : vector<1x16xf32> to vector<2x16xf32>
    %150 = arith.addf %147, %149 : vector<2x16xf32>
    %c0_63 = arith.constant 0 : index
    %c0_64 = arith.constant 0 : index
    %151 = vector.load %arg7[%c0_63, %c0_64] : memref<2x16xf32, #tpu.memory_space<vmem>>, vector<2x16xf32>
    tpu.vector_store %arg7[%c0_63, %c0_64], %150 {strides = array<i32>} : memref<2x16xf32, #tpu.memory_space<vmem>>, vector<2x16xf32>,
    return
  }
}

</mosaic_0001>

<llo_original>
// kernel: wide_model_forward.1
$region0: #{wide_model_forward.1}
  #allocation0 [shape = 'u32[]', space=smem, size = 0x4, offset = 0x4, fixed_abs, tag = 'smem constant byte address 0x4 - core index']
  #allocation1 [shape = 'u32[144,128]{1,0:T(1,128)}', space=vmem, size = 0x12000, scoped, tag = 'internal scratch']
  #allocation2 [shape = 'bf16[2,4096]{1,0:T(2,128)(2,1)}', space=vmem, size = 0x4000, scoped, tag = 'scratch operand']
  %s0 = inlined_call_operand.vmem [shape: f32[32,64], index: 0, kind: input, shape index: {}]
  %s1 = inlined_call_operand.vmem [shape: bf16[3,64,256], index: 1, kind: input, shape index: {}]
  %s2 = inlined_call_operand.vmem [shape: f32[1,256], index: 2, kind: input, shape index: {}]
  %s3 = inlined_call_operand.hbm [shape: bf16[3,256,256], index: 3, kind: input, shape index: {}]
  %s4 = inlined_call_operand.vmem [shape: f32[1,256], index: 4, kind: input, shape index: {}]
  %s5 = inlined_call_operand.vmem [shape: bf16[16,4096], index: 5, kind: input, shape index: {}]
  %s6 = inlined_call_operand.vmem [shape: f32[1,16], index: 6, kind: input, shape index: {}]
  %s7 = inlined_call_operand.hbm [shape: f32[2,16], index: 7, kind: output, shape index: {}]
  %s8 = sld [smem:[#allocation0]]
  $region42: #{wide_model_forward.1} parent=0
    _
  %s10 = ssub.s32 1, %s8
  %s11 = scalar_select 0, %s10, %s8
  $region1: #{wide_model_forward.1} parent=0
    #allocation3 [shape = 'u8[393216]{0}', space=vmem, size = 0x60000, scoped, tag = 'input window, operand 3, single buffered']
    #allocation4 [shape = 's32[1]{0}', space=sflag, size = 0x4, scoped, tag = 'scoped memory for wide_model_forward.1']
    #allocation5 [shape = 's32[1]{0}', space=sflag, size = 0x4, scoped, tag = 'scoped memory for wide_model_forward.1']
    #allocation6 [shape = 'u8[1024]{0}', space=vmem, size = 0x400, scoped, tag = 'output window, operand 0, single buffered']
    %12 = vsyncpa [#allocation4], 0
    %13 = vsyncpa [#allocation5], 0
    // Predicated region
    $region2: #{wide_model_forward.1} parent=1 // pred_check
      _
    $region3: #{wide_model_forward.1} parent=1 // pred_check_branch
      %15 = sbr.rel (0) target = $region5
    $region4: #{wide_model_forward.1} parent=1 // pred_region
      _
    $region5: #{wide_model_forward.1} parent=1 // pred_fallthru
      _
    // Predicated region
    $region6: #{wide_model_forward.1} parent=1 // pred_check
      _
    $region7: #{wide_model_forward.1} parent=1 // pred_check_branch
      %17 = sbr.rel (0) target = $region9
    $region8: #{wide_model_forward.1} parent=1 // pred_region
      _
    $region9: #{wide_model_forward.1} parent=1 // pred_fallthru
      _
    // Predicated region
    $region10: #{wide_model_forward.1} parent=1 // pred_check
      _
    $region11: #{wide_model_forward.1} parent=1 // pred_check_branch
      %19 = sbr.rel (0) target = $region13
    $region12: #{wide_model_forward.1} parent=1 // pred_region
      _
    $region13: #{wide_model_forward.1} parent=1 // pred_fallthru
      _
    // Predicated region
    $region14: #{wide_model_forward.1} parent=1 // pred_check
      _
    $region15: #{wide_model_forward.1} parent=1 // pred_check_branch
      %21 = sbr.rel (0) target = $region17
    $region16: #{wide_model_forward.1} parent=1 // pred_region
      %s23 = ssub.s32 12288, 12288
      %24 = vsyncadd [#allocation4], %s23
      %s25 = sshll.u32 [#allocation3], 4
      %s26 = int_to_ptr.vmem [resolvable:$true] %s25
      %31 = dma.hbm_to_vmem [thread:$0]  %s3, 12288, %s26, [#allocation4], 128, 128, 8
    $region17: #{wide_model_forward.1} parent=1 // pred_fallthru
      _
    // Predicated region
    $region18: #{wide_model_forward.1} parent=1 // pred_check
      _
    $region19: #{wide_model_forward.1} parent=1 // pred_check_branch
      %33 = sbr.rel (0) target = $region21
    $region20: #{wide_model_forward.1} parent=1 // pred_region
      _
    $region21: #{wide_model_forward.1} parent=1 // pred_fallthru
      _
    // Predicated region
    $region22: #{wide_model_forward.1} parent=1 // pred_check
      _
    $region23: #{wide_model_forward.1} parent=1 // pred_check_branch
      %35 = sbr.rel (0) target = $region25
    $region24: #{wide_model_forward.1} parent=1 // pred_region
      _
    $region25: #{wide_model_forward.1} parent=1 // pred_fallthru
      _
    // Predicated region
    $region26: #{wide_model_forward.1} parent=1 // pred_check
      _
    $region27: #{wide_model_forward.1} parent=1 // pred_check_branch
      %37 = sbr.rel (0) target = $region29
    $region28: #{wide_model_forward.1} parent=1 // pred_region
      _
    $region29: #{wide_model_forward.1} parent=1 // pred_fallthru
      _
    // Predicated region
    $region30: #{wide_model_forward.1} parent=1 // pred_check
      _
    $region31: #{wide_model_forward.1} parent=1 // pred_check_branch
      %39 = sbr.rel (0) target = $region33
    $region32: #{wide_model_forward.1} parent=1 // pred_region
      %40 = dma.done [#allocation4], 12288
    $region33: #{wide_model_forward.1} parent=1 // pred_fallthru
      _
    %v42 = vlaneseq
    %v43 = vshrl.u32 %v42, 7
    %v44 = vadd.s32 %v43, 8
    %v45 = vadd.s32 %v43, 16
    %v46 = vadd.s32 %v43, 24
    %vm47 = vcmp.lt.s32.totalorder %v43, 0
    %v48 = vsub.s32 0, %v43
    %v49 = vsel %vm47, %v48, %v43
    %v50 = vshrl.u32 %v49, 4
    %v51 = vand.u32 %v49, 15
    %v52 = vsub.s32 0, %v51
    %v53 = vsel %vm47, %v52, %v51
    %vm54 = vcmp.lt.s32.totalorder %v44, 0
    %v55 = vsub.s32 0, %v44
    %v56 = vsel %vm54, %v55, %v44
    %v57 = vshrl.u32 %v56, 4
    %v58 = vand.u32 %v56, 15
    %v59 = vsub.s32 0, %v58
    %v60 = vsel %vm54, %v59, %v58
    %vm61 = vcmp.lt.s32.totalorder %v45, 0
    %v62 = vsub.s32 0, %v45
    %v63 = vsel %vm61, %v62, %v45
    %v64 = vshrl.u32 %v63, 4
    %v65 = vand.u32 %v63, 15
    %v66 = vsub.s32 0, %v65
    %v67 = vsel %vm61, %v66, %v65
    %vm68 = vcmp.lt.s32.totalorder %v46, 0
    %v69 = vsub.s32 0, %v46
    %v70 = vsel %vm68, %v69, %v46
    %v71 = vshrl.u32 %v70, 4
    %v72 = vand.u32 %v70, 15
    %v73 = vsub.s32 0, %v72
    %v74 = vsel %vm68, %v73, %v72
    %vm75 = vcmp.ne.s32.totalorder %v53, 0
    %vm76 = vcmp.ne.s32.totalorder %v60, 0
    %vm77 = vcmp.ne.s32.totalorder %v67, 0
    %vm78 = vcmp.ne.s32.totalorder %v74, 0
    %vm79 = vcmp.lt.s32.totalorder %v53, 0
    %vm80 = vcmp.lt.s32.totalorder %v60, 0
    %vm81 = vcmp.lt.s32.totalorder %v67, 0
    %vm82 = vcmp.lt.s32.totalorder %v74, 0
    %vm83 = vmand %vm79, %vm75
    %vm84 = vmand %vm80, %vm76
    %vm85 = vmand %vm81, %vm77
    %vm86 = vmand %vm82, %vm78
    %v87 = vadd.s32 %v53, 16
    %v88 = vadd.s32 %v60, 16
    %v89 = vadd.s32 %v67, 16
    %v90 = vadd.s32 %v74, 16
    %v91 = vsel %vm83, %v87, %v53
    %v92 = vsel %vm84, %v88, %v60
    %v93 = vsel %vm85, %v89, %v67
    %v94 = vsel %vm86, %v90, %v74
    %vm95 = vcmp.ne.s32.totalorder %v91, 0
    %vm96 = vcmp.ne.s32.totalorder %v92, 0
    %vm97 = vcmp.ne.s32.totalorder %v93, 0
    %vm98 = vcmp.ne.s32.totalorder %v94, 0
    %vm99 = vcmp.ne.s32.totalorder %v91, 15
    %vm100 = vcmp.ne.s32.totalorder %v92, 15
    %vm101 = vcmp.ne.s32.totalorder %v93, 15
    %vm102 = vcmp.ne.s32.totalorder %v94, 15
    %v103 = vld [vmem:[%s0] sm:$0xff]
    %v104 = vld [vmem:[%s0 + $0x8] sm:$0xff]
    %v105 = vld [vmem:[%s0 + $0x10] sm:$0xff]
    %v106 = vld [vmem:[%s0 + $0x18] sm:$0xff]
    %v107 = vrot.slane %v103, 7
    %v108 = vrot.slane %v104, 7
    %v109 = vrot.slane %v105, 7
    %v110 = vrot.slane %v106, 7
    %vm111 = vcmp.lt.s32.totalorder %v43, 1
    %v112 = vsel %vm111, %v109, %v110
    %v113 = vsel %vm111, %v108, %v109
    %v114 = vsel %vm111, %v107, %v108
    %v115 = vsel %vm111, %v110, %v107
    %v116 = vsel %vm95, 1, 0
    %v117 = vsel %vm96, 1, 0
    %v118 = vsel %vm97, 1, 0
    %v119 = vsel %vm98, 1, 0
    %vm120 = vcmp.eq.s32.totalorder %v116, 1
    %vm121 = vcmp.eq.s32.totalorder %v117, 1
    %vm122 = vcmp.eq.s32.totalorder %v118, 1
    %vm123 = vcmp.eq.s32.totalorder %v119, 1
    %v124 = vsel %vm120, %v115, 0.0
    %v125 = vsel %vm121, %v114, 0.0
    %v126 = vsel %vm122, %v113, 0.0
    %v127 = vsel %vm123, %v112, 0.0
    %v128 = vrot.slane %v103, 1
    %v129 = vrot.slane %v104, 1
    %v130 = vrot.slane %v105, 1
    %v131 = vrot.slane %v106, 1
    %vm132 = vcmp.lt.s32.totalorder %v43, 7
    %v133 = vsel %vm132, %v130, %v131
    %v134 = vsel %vm132, %v129, %v130
    %v135 = vsel %vm132, %v128, %v129
    %v136 = vsel %vm132, %v131, %v128
    %v137 = vsel %vm99, 1, 0
    %v138 = vsel %vm100, 1, 0
    %v139 = vsel %vm101, 1, 0
    %v140 = vsel %vm102, 1, 0
    %vm141 = vcmp.eq.s32.totalorder %v137, 1
    %vm142 = vcmp.eq.s32.totalorder %v138, 1
    %vm143 = vcmp.eq.s32.totalorder %v139, 1
    %vm144 = vcmp.eq.s32.totalorder %v140, 1
    %v145 = vsel %vm141, %v135, 0.0
    %v146 = vsel %vm142, %v134, 0.0
    %v147 = vsel %vm143, %v133, 0.0
    %v148 = vsel %vm144, %v136, 0.0
    %v149 = vpack.c.bf16 %v125, %v124
    %v150 = vpack.c.bf16 %v127, %v126
    %v151 = vld [vmem:[%s1] sm:$0xff]
    %v152 = vld [vmem:[%s1 + $0x8] sm:$0xff]
    %v153 = vld [vmem:[%s1 + $0x10] sm:$0xff]
    %v154 = vld [vmem:[%s1 + $0x18] sm:$0xff]
    %v155 = vld [vmem:[%s1 + $0x20] sm:$0xff]
    %v156 = vld [vmem:[%s1 + $0x28] sm:$0xff]
    %v157 = vld [vmem:[%s1 + $0x30] sm:$0xff]
    %v158 = vld [vmem:[%s1 + $0x38] sm:$0xff]
    %v159 = vpack.c.bf16 %v104, %v103
    %v160 = vpack.c.bf16 %v106, %v105
    %s161 = scalar_lea.vmem %s1, 64
    %v162 = vld [vmem:[%s161] sm:$0xff]
    %v163 = vld [vmem:[%s161 + $0x8] sm:$0xff]
    %v164 = vld [vmem:[%s161 + $0x10] sm:$0xff]
    %v165 = vld [vmem:[%s161 + $0x18] sm:$0xff]
    %v166 = vld [vmem:[%s161 + $0x20] sm:$0xff]
    %v167 = vld [vmem:[%s161 + $0x28] sm:$0xff]
    %v168 = vld [vmem:[%s161 + $0x30] sm:$0xff]
    %v169 = vld [vmem:[%s161 + $0x38] sm:$0xff]
    %v178 = vunpack.c.l.b16 %v162
    %v179 = vunpack.c.h.b16 %v162
    %v180 = vunpack.c.l.b16 %v163
    %v181 = vunpack.c.h.b16 %v163
    %v182 = vunpack.c.l.b16 %v164
    %v183 = vunpack.c.h.b16 %v164
    %v184 = vunpack.c.l.b16 %v165
    %v185 = vunpack.c.h.b16 %v165
    %v186 = vunpack.c.l.b16 %v166
    %v187 = vunpack.c.h.b16 %v166
    %v188 = vunpack.c.l.b16 %v167
    %v189 = vunpack.c.h.b16 %v167
    %v190 = vunpack.c.l.b16 %v168
    %v191 = vunpack.c.h.b16 %v168
    %v192 = vunpack.c.l.b16 %v169
    %v193 = vunpack.c.h.b16 %v169
    %v194 = vpack.c.b16 %v180, %v178
    %v195 = vpack.c.b16 %v181, %v179
    %v196 = vpack.c.b16 %v184, %v182
    %v197 = vpack.c.b16 %v185, %v183
    %v198 = vpack.c.b16 %v188, %v186
    %v199 = vpack.c.b16 %v189, %v187
    %v200 = vpack.c.b16 %v192, %v190
    %v201 = vpack.c.b16 %v193, %v191
    %vm210 = vcmask 523264
    %v212 = vsel %vm210, %v159, 0
    %v215 = vsel %vm210, %v160, 0
    %217 = vmatprep.subr.bf16.mxu0 %v195
    %218 = vmatpush1.bf16.msra.mxu0 %v194
    %219 = vmatprep.subr.bf16.mxu0 %v197
    %220 = vmatpush1.bf16.msra.mxu0 %v196
    %221 = vmatprep.subr.bf16.mxu0 %v199
    %222 = vmatpush1.bf16.msra.mxu0 %v198
    %223 = vmatprep.subr.bf16.mxu0 %v201
    %224 = vmatpush1.bf16.msra.mxu0 %v200
    %225 = vmatprep.subr.bf16.mxu0 0
    %226 = vmatpush1.bf16.msra.mxu0 0
    %227 = vmatprep.subr.bf16.mxu0 0
    %228 = vmatpush1.bf16.msra.mxu0 0
    %229 = vmatprep.subr.bf16.mxu0 0
    %230 = vmatpush1.bf16.msra.mxu0 0
    %231 = vmatprep.subr.bf16.mxu0 0
    %232 = vmatpush1.bf16.msra.mxu0 0
    %233 = vmatprep.subr.bf16.mxu0 0
    %234 = vmatpush1.bf16.msra.mxu0 0
    %235 = vmatprep.subr.bf16.mxu0 0
    %236 = vmatpush1.bf16.msra.mxu0 0
    %237 = vmatprep.subr.bf16.mxu0 0
    %238 = vmatpush1.bf16.msra.mxu0 0
    %239 = vmatprep.subr.bf16.mxu0 0
    %240 = vmatpush1.bf16.msra.mxu0 0
    %241 = vmatprep.subr.bf16.mxu0 0
    %242 = vmatpush1.bf16.msra.mxu0 0
    %243 = vmatprep.subr.bf16.mxu0 0
    %244 = vmatpush1.bf16.msra.mxu0 0
    %245 = vmatprep.subr.bf16.mxu0 0
    %246 = vmatpush1.bf16.msra.mxu0 0
    %247 = vmatprep.subr.bf16.mxu0 0
    %248 = vmatpush1.bf16.msra.mxu0 0
    %249 = vmatprep.mubr.bf16.mxu0 0
    %250 = vmatmul.mubr.bf16.gmra.mrb[0].mxu0 %v212
    %v251 = vpop.f32.mrb[0].mxu0
    %v252 = vadd.f32 0.0, %v251
    %v253 = vpop.f32.mrb[0].mxu0
    %v254 = vadd.f32 0.0, %v253
    %v255 = vpop.f32.mrb[0].mxu0
    %v256 = vadd.f32 0.0, %v255
    %v257 = vpop.f32.mrb[0].mxu0
    %v258 = vadd.f32 0.0, %v257
    %259 = vmatprep.mubr.bf16.mxu0 0
    %260 = vmatmul.mubr.bf16.gmra.mrb[0].mxu0 %v215
    %v261 = vpop.f32.mrb[0].mxu0
    %v262 = vadd.f32 0.0, %v261
    %v263 = vpop.f32.mrb[0].mxu0
    %v264 = vadd.f32 0.0, %v263
    %v265 = vpop.f32.mrb[0].mxu0
    %v266 = vadd.f32 0.0, %v265
    %v267 = vpop.f32.mrb[0].mxu0
    %v268 = vadd.f32 0.0, %v267
    %269 = vdwg.mxu0
    %v278 = vunpack.c.l.b16 %v151
    %v279 = vunpack.c.h.b16 %v151
    %v280 = vunpack.c.l.b16 %v152
    %v281 = vunpack.c.h.b16 %v152
    %v282 = vunpack.c.l.b16 %v153
    %v283 = vunpack.c.h.b16 %v153
    %v284 = vunpack.c.l.b16 %v154
    %v285 = vunpack.c.h.b16 %v154
    %v286 = vunpack.c.l.b16 %v155
    %v287 = vunpack.c.h.b16 %v155
    %v288 = vunpack.c.l.b16 %v156
    %v289 = vunpack.c.h.b16 %v156
    %v290 = vunpack.c.l.b16 %v157
    %v291 = vunpack.c.h.b16 %v157
    %v292 = vunpack.c.l.b16 %v158
    %v293 = vunpack.c.h.b16 %v158
    %v294 = vpack.c.b16 %v280, %v278
    %v295 = vpack.c.b16 %v281, %v279
    %v296 = vpack.c.b16 %v284, %v282
    %v297 = vpack.c.b16 %v285, %v283
    %v298 = vpack.c.b16 %v288, %v286
    %v299 = vpack.c.b16 %v289, %v287
    %v300 = vpack.c.b16 %v292, %v290
    %v301 = vpack.c.b16 %v293, %v291
    %v311 = vsel %vm210, %v149, 0
    %v314 = vsel %vm210, %v150, 0
    %316 = vmatprep.subr.bf16.mxu0 %v295
    %317 = vmatpush1.bf16.msra.mxu0 %v294
    %318 = vmatprep.subr.bf16.mxu0 %v297
    %319 = vmatpush1.bf16.msra.mxu0 %v296
    %320 = vmatprep.subr.bf16.mxu0 %v299
    %321 = vmatpush1.bf16.msra.mxu0 %v298
    %322 = vmatprep.subr.bf16.mxu0 %v301
    %323 = vmatpush1.bf16.msra.mxu0 %v300
    %324 = vmatprep.subr.bf16.mxu0 0
    %325 = vmatpush1.bf16.msra.mxu0 0
    %326 = vmatprep.subr.bf16.mxu0 0
    %327 = vmatpush1.bf16.msra.mxu0 0
    %328 = vmatprep.subr.bf16.mxu0 0
    %329 = vmatpush1.bf16.msra.mxu0 0
    %330 = vmatprep.subr.bf16.mxu0 0
    %331 = vmatpush1.bf16.msra.mxu0 0
    %332 = vmatprep.subr.bf16.mxu0 0
    %333 = vmatpush1.bf16.msra.mxu0 0
    %334 = vmatprep.subr.bf16.mxu0 0
    %335 = vmatpush1.bf16.msra.mxu0 0
    %336 = vmatprep.subr.bf16.mxu0 0
    %337 = vmatpush1.bf16.msra.mxu0 0
    %338 = vmatprep.subr.bf16.mxu0 0
    %339 = vmatpush1.bf16.msra.mxu0 0
    %340 = vmatprep.subr.bf16.mxu0 0
    %341 = vmatpush1.bf16.msra.mxu0 0
    %342 = vmatprep.subr.bf16.mxu0 0
    %343 = vmatpush1.bf16.msra.mxu0 0
    %344 = vmatprep.subr.bf16.mxu0 0
    %345 = vmatpush1.bf16.msra.mxu0 0
    %346 = vmatprep.subr.bf16.mxu0 0
    %347 = vmatpush1.bf16.msra.mxu0 0
    %348 = vmatprep.mubr.bf16.mxu0 0
    %349 = vmatmul.mubr.bf16.gmra.mrb[0].mxu0 %v311
    %v350 = vpop.f32.mrb[0].mxu0
    %v351 = vadd.f32 %v252, %v350
    %v352 = vpop.f32.mrb[0].mxu0
    %v353 = vadd.f32 %v254, %v352
    %v354 = vpop.f32.mrb[0].mxu0
    %v355 = vadd.f32 %v256, %v354
    %v356 = vpop.f32.mrb[0].mxu0
    %v357 = vadd.f32 %v258, %v356
    %358 = vmatprep.mubr.bf16.mxu0 0
    %359 = vmatmul.mubr.bf16.gmra.mrb[0].mxu0 %v314
    %v360 = vpop.f32.mrb[0].mxu0
    %v361 = vadd.f32 %v262, %v360
    %v362 = vpop.f32.mrb[0].mxu0
    %v363 = vadd.f32 %v264, %v362
    %v364 = vpop.f32.mrb[0].mxu0
    %v365 = vadd.f32 %v266, %v364
    %v366 = vpop.f32.mrb[0].mxu0
    %v367 = vadd.f32 %v268, %v366
    %368 = vdwg.mxu0
    %v369 = vpack.c.bf16 %v146, %v145
    %v370 = vpack.c.bf16 %v148, %v147
    %s371 = scalar_lea.vmem %s1, 128
    %v372 = vld [vmem:[%s371] sm:$0xff]
    %v373 = vld [vmem:[%s371 + $0x8] sm:$0xff]
    %v374 = vld [vmem:[%s371 + $0x10] sm:$0xff]
    %v375 = vld [vmem:[%s371 + $0x18] sm:$0xff]
    %v376 = vld [vmem:[%s371 + $0x20] sm:$0xff]
    %v377 = vld [vmem:[%s371 + $0x28] sm:$0xff]
    %v378 = vld [vmem:[%s371 + $0x30] sm:$0xff]
    %v379 = vld [vmem:[%s371 + $0x38] sm:$0xff]
    %v388 = vunpack.c.l.b16 %v372
    %v389 = vunpack.c.h.b16 %v372
    %v390 = vunpack.c.l.b16 %v373
    %v391 = vunpack.c.h.b16 %v373
    %v392 = vunpack.c.l.b16 %v374
    %v393 = vunpack.c.h.b16 %v374
    %v394 = vunpack.c.l.b16 %v375
    %v395 = vunpack.c.h.b16 %v375
    %v396 = vunpack.c.l.b16 %v376
    %v397 = vunpack.c.h.b16 %v376
    %v398 = vunpack.c.l.b16 %v377
    %v399 = vunpack.c.h.b16 %v377
    %v400 = vunpack.c.l.b16 %v378
    %v401 = vunpack.c.h.b16 %v378
    %v402 = vunpack.c.l.b16 %v379
    %v403 = vunpack.c.h.b16 %v379
    %v404 = vpack.c.b16 %v390, %v388
    %v405 = vpack.c.b16 %v391, %v389
    %v406 = vpack.c.b16 %v394, %v392
    %v407 = vpack.c.b16 %v395, %v393
    %v408 = vpack.c.b16 %v398, %v396
    %v409 = vpack.c.b16 %v399, %v397
    %v410 = vpack.c.b16 %v402, %v400
    %v411 = vpack.c.b16 %v403, %v401
    %v421 = vsel %vm210, %v369, 0
    %v424 = vsel %vm210, %v370, 0
    %426 = vmatprep.subr.bf16.mxu0 %v405
    %427 = vmatpush1.bf16.msra.mxu0 %v404
    %428 = vmatprep.subr.bf16.mxu0 %v407
    %429 = vmatpush1.bf16.msra.mxu0 %v406
    %430 = vmatprep.subr.bf16.mxu0 %v409
    %431 = vmatpush1.bf16.msra.mxu0 %v408
    %432 = vmatprep.subr.bf16.mxu0 %v411
    %433 = vmatpush1.bf16.msra.mxu0 %v410
    %434 = vmatprep.subr.bf16.mxu0 0
    %435 = vmatpush1.bf16.msra.mxu0 0
    %436 = vmatprep.subr.bf16.mxu0 0
    %437 = vmatpush1.bf16.msra.mxu0 0
    %438 = vmatprep.subr.bf16.mxu0 0
    %439 = vmatpush1.bf16.msra.mxu0 0
    %440 = vmatprep.subr.bf16.mxu0 0
    %441 = vmatpush1.bf16.msra.mxu0 0
    %442 = vmatprep.subr.bf16.mxu0 0
    %443 = vmatpush1.bf16.msra.mxu0 0
    %444 = vmatprep.subr.bf16.mxu0 0
    %445 = vmatpush1.bf16.msra.mxu0 0
    %446 = vmatprep.subr.bf16.mxu0 0
    %447 = vmatpush1.bf16.msra.mxu0 0
    %448 = vmatprep.subr.bf16.mxu0 0
    %449 = vmatpush1.bf16.msra.mxu0 0
    %450 = vmatprep.subr.bf16.mxu0 0
    %451 = vmatpush1.bf16.msra.mxu0 0
    %452 = vmatprep.subr.bf16.mxu0 0
    %453 = vmatpush1.bf16.msra.mxu0 0
    %454 = vmatprep.subr.bf16.mxu0 0
    %455 = vmatpush1.bf16.msra.mxu0 0
    %456 = vmatprep.subr.bf16.mxu0 0
    %457 = vmatpush1.bf16.msra.mxu0 0
    %458 = vmatprep.mubr.bf16.mxu0 0
    %459 = vmatmul.mubr.bf16.gmra.mrb[0].mxu0 %v421
    %v460 = vpop.f32.mrb[0].mxu0
    %v461 = vadd.f32 0.0, %v460
    %v462 = vpop.f32.mrb[0].mxu0
    %v463 = vadd.f32 0.0, %v462
    %v464 = vpop.f32.mrb[0].mxu0
    %v465 = vadd.f32 0.0, %v464
    %v466 = vpop.f32.mrb[0].mxu0
    %v467 = vadd.f32 0.0, %v466
    %468 = vmatprep.mubr.bf16.mxu0 0
    %469 = vmatmul.mubr.bf16.gmra.mrb[0].mxu0 %v424
    %v470 = vpop.f32.mrb[0].mxu0
    %v471 = vadd.f32 0.0, %v470
    %v472 = vpop.f32.mrb[0].mxu0
    %v473 = vadd.f32 0.0, %v472
    %v474 = vpop.f32.mrb[0].mxu0
    %v475 = vadd.f32 0.0, %v474
    %v476 = vpop.f32.mrb[0].mxu0
    %v477 = vadd.f32 0.0, %v476
    %478 = vdwg.mxu0
    %v479 = vadd.f32 %v351, %v461
    %v480 = vadd.f32 %v353, %v463
    %v481 = vadd.f32 %v355, %v465
    %v482 = vadd.f32 %v357, %v467
    %v483 = vadd.f32 %v361, %v471
    %v484 = vadd.f32 %v363, %v473
    %v485 = vadd.f32 %v365, %v475
    %v486 = vadd.f32 %v367, %v477
    %v487 = vld [vmem:[%s2] sm:$0x3]
    %v489 = vlaneseq
    %v490 = vshrl.u32 %v489, 7
    %v491 = vsub.s32 0, %v490
    %v492 = vrot.slane %v487, %v491
    %v493 = vlaneseq
    %v494 = vshrl.u32 %v493, 7
    %v495 = vsub.s32 1, %v494
    %v496 = vrot.slane %v487, %v495
    %v499 = vadd.f32 %v479, %v492
    %v500 = vadd.f32 %v480, %v496
    %v501 = vadd.f32 %v481, %v492
    %v502 = vadd.f32 %v482, %v496
    %v503 = vadd.f32 %v483, %v492
    %v504 = vadd.f32 %v484, %v496
    %v505 = vadd.f32 %v485, %v492
    %v506 = vadd.f32 %v486, %v496
    %v507 = vmax.f32 %v499, 0.0
    %v508 = vmax.f32 %v500, 0.0
    %v509 = vmax.f32 %v501, 0.0
    %v510 = vmax.f32 %v502, 0.0
    %v511 = vmax.f32 %v503, 0.0
    %v512 = vmax.f32 %v504, 0.0
    %v513 = vmax.f32 %v505, 0.0
    %v514 = vmax.f32 %v506, 0.0
    %v515 = vrot.slane %v507, 7
    %v516 = vrot.slane %v508, 7
    %v517 = vrot.slane %v509, 7
    %v518 = vrot.slane %v510, 7
    %v519 = vrot.slane %v511, 7
    %v520 = vrot.slane %v512, 7
    %v521 = vrot.slane %v513, 7
    %v522 = vrot.slane %v514, 7
    %v523 = vsel %vm111, %v519, %v521
    %v524 = vsel %vm111, %v520, %v522
    %v525 = vsel %vm111, %v517, %v519
    %v526 = vsel %vm111, %v518, %v520
    %v527 = vsel %vm111, %v515, %v517
    %v528 = vsel %vm111, %v516, %v518
    %v529 = vsel %vm111, %v521, %v515
    %v530 = vsel %vm111, %v522, %v516
    %v531 = vsel %vm120, %v529, 0.0
    %v532 = vsel %vm120, %v530, 0.0
    %v533 = vsel %vm121, %v527, 0.0
    %v534 = vsel %vm121, %v528, 0.0
    %v535 = vsel %vm122, %v525, 0.0
    %v536 = vsel %vm122, %v526, 0.0
    %v537 = vsel %vm123, %v523, 0.0
    %v538 = vsel %vm123, %v524, 0.0
    %v539 = vrot.slane %v507, 1
    %v540 = vrot.slane %v508, 1
    %v541 = vrot.slane %v509, 1
    %v542 = vrot.slane %v510, 1
    %v543 = vrot.slane %v511, 1
    %v544 = vrot.slane %v512, 1
    %v545 = vrot.slane %v513, 1
    %v546 = vrot.slane %v514, 1
    %v547 = vsel %vm132, %v543, %v545
    %v548 = vsel %vm132, %v544, %v546
    %v549 = vsel %vm132, %v541, %v543
    %v550 = vsel %vm132, %v542, %v544
    %v551 = vsel %vm132, %v539, %v541
    %v552 = vsel %vm132, %v540, %v542
    %v553 = vsel %vm132, %v545, %v539
    %v554 = vsel %vm132, %v546, %v540
    %v555 = vsel %vm141, %v551, 0.0
    %v556 = vsel %vm141, %v552, 0.0
    %v557 = vsel %vm142, %v549, 0.0
    %v558 = vsel %vm142, %v550, 0.0
    %v559 = vsel %vm143, %v547, 0.0
    %v560 = vsel %vm143, %v548, 0.0
    %v561 = vsel %vm144, %v553, 0.0
    %v562 = vsel %vm144, %v554, 0.0
    %v563 = vpack.c.bf16 %v533, %v531
    %v564 = vpack.c.bf16 %v534, %v532
    %v565 = vpack.c.bf16 %v537, %v535
    %v566 = vpack.c.bf16 %v538, %v536
    %v567 = vld [vmem:[#allocation3] sm:$0xff]
    %v568 = vld [vmem:[#allocation3 + $0x8] sm:$0xff]
    %v569 = vld [vmem:[#allocation3 + $0x10] sm:$0xff]
    %v570 = vld [vmem:[#allocation3 + $0x18] sm:$0xff]
    %v571 = vld [vmem:[#allocation3 + $0x20] sm:$0xff]
    %v572 = vld [vmem:[#allocation3 + $0x28] sm:$0xff]
    %v573 = vld [vmem:[#allocation3 + $0x30] sm:$0xff]
    %v574 = vld [vmem:[#allocation3 + $0x38] sm:$0xff]
    %v575 = vld [vmem:[#allocation3 + $0x40] sm:$0xff]
    %v576 = vld [vmem:[#allocation3 + $0x48] sm:$0xff]
    %v577 = vld [vmem:[#allocation3 + $0x50] sm:$0xff]
    %v578 = vld [vmem:[#allocation3 + $0x58] sm:$0xff]
    %v579 = vld [vmem:[#allocation3 + $0x60] sm:$0xff]
    %v580 = vld [vmem:[#allocation3 + $0x68] sm:$0xff]
    %v581 = vld [vmem:[#allocation3 + $0x70] sm:$0xff]
    %v582 = vld [vmem:[#allocation3 + $0x78] sm:$0xff]
    %v583 = vld [vmem:[#allocation3 + $0x80] sm:$0xff]
    %v584 = vld [vmem:[#allocation3 + $0x88] sm:$0xff]
    %v585 = vld [vmem:[#allocation3 + $0x90] sm:$0xff]
    %v586 = vld [vmem:[#allocation3 + $0x98] sm:$0xff]
    %v587 = vld [vmem:[#allocation3 + $0xa0] sm:$0xff]
    %v588 = vld [vmem:[#allocation3 + $0xa8] sm:$0xff]
    %v589 = vld [vmem:[#allocation3 + $0xb0] sm:$0xff]
    %v590 = vld [vmem:[#allocation3 + $0xb8] sm:$0xff]
    %v591 = vld [vmem:[#allocation3 + $0xc0] sm:$0xff]
    %v592 = vld [vmem:[#allocation3 + $0xc8] sm:$0xff]
    %v593 = vld [vmem:[#allocation3 + $0xd0] sm:$0xff]
    %v594 = vld [vmem:[#allocation3 + $0xd8] sm:$0xff]
    %v595 = vld [vmem:[#allocation3 + $0xe0] sm:$0xff]
    %v596 = vld [vmem:[#allocation3 + $0xe8] sm:$0xff]
    %v597 = vld [vmem:[#allocation3 + $0xf0] sm:$0xff]
    %v598 = vld [vmem:[#allocation3 + $0xf8] sm:$0xff]
    %v599 = vpack.c.bf16 %v509, %v507
    %v600 = vpack.c.bf16 %v510, %v508
    %v601 = vpack.c.bf16 %v513, %v511
    %v602 = vpack.c.bf16 %v514, %v512
    %s603 = scalar_lea.vmem [#allocation3], 256
    %v604 = vld [vmem:[%s603] sm:$0xff]
    %v605 = vld [vmem:[%s603 + $0x8] sm:$0xff]
    %v606 = vld [vmem:[%s603 + $0x10] sm:$0xff]
    %v607 = vld [vmem:[%s603 + $0x18] sm:$0xff]
    %v608 = vld [vmem:[%s603 + $0x20] sm:$0xff]
    %v609 = vld [vmem:[%s603 + $0x28] sm:$0xff]
    %v610 = vld [vmem:[%s603 + $0x30] sm:$0xff]
    %v611 = vld [vmem:[%s603 + $0x38] sm:$0xff]
    %v612 = vld [vmem:[%s603 + $0x40] sm:$0xff]
    %v613 = vld [vmem:[%s603 + $0x48] sm:$0xff]
    %v614 = vld [vmem:[%s603 + $0x50] sm:$0xff]
    %v615 = vld [vmem:[%s603 + $0x58] sm:$0xff]
    %v616 = vld [vmem:[%s603 + $0x60] sm:$0xff]
    %v617 = vld [vmem:[%s603 + $0x68] sm:$0xff]
    %v618 = vld [vmem:[%s603 + $0x70] sm:$0xff]
    %v619 = vld [vmem:[%s603 + $0x78] sm:$0xff]
    %v620 = vld [vmem:[%s603 + $0x80] sm:$0xff]
    %v621 = vld [vmem:[%s603 + $0x88] sm:$0xff]
    %v622 = vld [vmem:[%s603 + $0x90] sm:$0xff]
    %v623 = vld [vmem:[%s603 + $0x98] sm:$0xff]
    %v624 = vld [vmem:[%s603 + $0xa0] sm:$0xff]
    %v625 = vld [vmem:[%s603 + $0xa8] sm:$0xff]
    %v626 = vld [vmem:[%s603 + $0xb0] sm:$0xff]
    %v627 = vld [vmem:[%s603 + $0xb8] sm:$0xff]
    %v628 = vld [vmem:[%s603 + $0xc0] sm:$0xff]
    %v629 = vld [vmem:[%s603 + $0xc8] sm:$0xff]
    %v630 = vld [vmem:[%s603 + $0xd0] sm:$0xff]
    %v631 = vld [vmem:[%s603 + $0xd8] sm:$0xff]
    %v632 = vld [vmem:[%s603 + $0xe0] sm:$0xff]
    %v633 = vld [vmem:[%s603 + $0xe8] sm:$0xff]
    %v634 = vld [vmem:[%s603 + $0xf0] sm:$0xff]
    %v635 = vld [vmem:[%s603 + $0xf8] sm:$0xff]
    %v668 = vunpack.c.l.b16 %v604
    %v669 = vunpack.c.h.b16 %v604
    %v670 = vunpack.c.l.b16 %v605
    %v671 = vunpack.c.h.b16 %v605
    %v672 = vunpack.c.l.b16 %v606
    %v673 = vunpack.c.h.b16 %v606
    %v674 = vunpack.c.l.b16 %v607
    %v675 = vunpack.c.h.b16 %v607
    %v676 = vunpack.c.l.b16 %v608
    %v677 = vunpack.c.h.b16 %v608
    %v678 = vunpack.c.l.b16 %v609
    %v679 = vunpack.c.h.b16 %v609
    %v680 = vunpack.c.l.b16 %v610
    %v681 = vunpack.c.h.b16 %v610
    %v682 = vunpack.c.l.b16 %v611
    %v683 = vunpack.c.h.b16 %v611
    %v684 = vunpack.c.l.b16 %v612
    %v685 = vunpack.c.h.b16 %v612
    %v686 = vunpack.c.l.b16 %v613
    %v687 = vunpack.c.h.b16 %v613
    %v688 = vunpack.c.l.b16 %v614
    %v689 = vunpack.c.h.b16 %v614
    %v690 = vunpack.c.l.b16 %v615
    %v691 = vunpack.c.h.b16 %v615
    %v692 = vunpack.c.l.b16 %v616
    %v693 = vunpack.c.h.b16 %v616
    %v694 = vunpack.c.l.b16 %v617
    %v695 = vunpack.c.h.b16 %v617
    %v696 = vunpack.c.l.b16 %v618
    %v697 = vunpack.c.h.b16 %v618
    %v698 = vunpack.c.l.b16 %v619
    %v699 = vunpack.c.h.b16 %v619
    %v700 = vunpack.c.l.b16 %v620
    %v701 = vunpack.c.h.b16 %v620
    %v702 = vunpack.c.l.b16 %v621
    %v703 = vunpack.c.h.b16 %v621
    %v704 = vunpack.c.l.b16 %v622
    %v705 = vunpack.c.h.b16 %v622
    %v706 = vunpack.c.l.b16 %v623
    %v707 = vunpack.c.h.b16 %v623
    %v708 = vunpack.c.l.b16 %v624
    %v709 = vunpack.c.h.b16 %v624
    %v710 = vunpack.c.l.b16 %v625
    %v711 = vunpack.c.h.b16 %v625
    %v712 = vunpack.c.l.b16 %v626
    %v713 = vunpack.c.h.b16 %v626
    %v714 = vunpack.c.l.b16 %v627
    %v715 = vunpack.c.h.b16 %v627
    %v716 = vunpack.c.l.b16 %v628
    %v717 = vunpack.c.h.b16 %v628
    %v718 = vunpack.c.l.b16 %v629
    %v719 = vunpack.c.h.b16 %v629
    %v720 = vunpack.c.l.b16 %v630
    %v721 = vunpack.c.h.b16 %v630
    %v722 = vunpack.c.l.b16 %v631
    %v723 = vunpack.c.h.b16 %v631
    %v724 = vunpack.c.l.b16 %v632
    %v725 = vunpack.c.h.b16 %v632
    %v726 = vunpack.c.l.b16 %v633
    %v727 = vunpack.c.h.b16 %v633
    %v728 = vunpack.c.l.b16 %v634
    %v729 = vunpack.c.h.b16 %v634
    %v730 = vunpack.c.l.b16 %v635
    %v731 = vunpack.c.h.b16 %v635
    %v732 = vpack.c.b16 %v670, %v668
    %v733 = vpack.c.b16 %v671, %v669
    %v734 = vpack.c.b16 %v674, %v672
    %v735 = vpack.c.b16 %v675, %v673
    %v736 = vpack.c.b16 %v678, %v676
    %v737 = vpack.c.b16 %v679, %v677
    %v738 = vpack.c.b16 %v682, %v680
    %v739 = vpack.c.b16 %v683, %v681
    %v740 = vpack.c.b16 %v686, %v684
    %v741 = vpack.c.b16 %v687, %v685
    %v742 = vpack.c.b16 %v690, %v688
    %v743 = vpack.c.b16 %v691, %v689
    %v744 = vpack.c.b16 %v694, %v692
    %v745 = vpack.c.b16 %v695, %v693
    %v746 = vpack.c.b16 %v698, %v696
    %v747 = vpack.c.b16 %v699, %v697
    %v748 = vpack.c.b16 %v702, %v700
    %v749 = vpack.c.b16 %v703, %v701
    %v750 = vpack.c.b16 %v706, %v704
    %v751 = vpack.c.b16 %v707, %v705
    %v752 = vpack.c.b16 %v710, %v708
    %v753 = vpack.c.b16 %v711, %v709
    %v754 = vpack.c.b16 %v714, %v712
    %v755 = vpack.c.b16 %v715, %v713
    %v756 = vpack.c.b16 %v718, %v716
    %v757 = vpack.c.b16 %v719, %v717
    %v758 = vpack.c.b16 %v722, %v720
    %v759 = vpack.c.b16 %v723, %v721
    %v760 = vpack.c.b16 %v726, %v724
    %v761 = vpack.c.b16 %v727, %v725
    %v762 = vpack.c.b16 %v730, %v728
    %v763 = vpack.c.b16 %v731, %v729
    %796 = vmatprep.subr.bf16.mxu0 %v733
    %797 = vmatpush1.bf16.msra.mxu0 %v732
    %798 = vmatprep.subr.bf16.mxu0 %v735
    %799 = vmatpush1.bf16.msra.mxu0 %v734
    %800 = vmatprep.subr.bf16.mxu0 %v737
    %801 = vmatpush1.bf16.msra.mxu0 %v736
    %802 = vmatprep.subr.bf16.mxu0 %v739
    %803 = vmatpush1.bf16.msra.mxu0 %v738
    %804 = vmatprep.subr.bf16.mxu0 %v741
    %805 = vmatpush1.bf16.msra.mxu0 %v740
    %806 = vmatprep.subr.bf16.mxu0 %v743
    %807 = vmatpush1.bf16.msra.mxu0 %v742
    %808 = vmatprep.subr.bf16.mxu0 %v745
    %809 = vmatpush1.bf16.msra.mxu0 %v744
    %810 = vmatprep.subr.bf16.mxu0 %v747
    %811 = vmatpush1.bf16.msra.mxu0 %v746
    %812 = vmatprep.subr.bf16.mxu0 %v749
    %813 = vmatpush1.bf16.msra.mxu0 %v748
    %814 = vmatprep.subr.bf16.mxu0 %v751
    %815 = vmatpush1.bf16.msra.mxu0 %v750
    %816 = vmatprep.subr.bf16.mxu0 %v753
    %817 = vmatpush1.bf16.msra.mxu0 %v752
    %818 = vmatprep.subr.bf16.mxu0 %v755
    %819 = vmatpush1.bf16.msra.mxu0 %v754
    %820 = vmatprep.subr.bf16.mxu0 %v757
    %821 = vmatpush1.bf16.msra.mxu0 %v756
    %822 = vmatprep.subr.bf16.mxu0 %v759
    %823 = vmatpush1.bf16.msra.mxu0 %v758
    %824 = vmatprep.subr.bf16.mxu0 %v761
    %825 = vmatpush1.bf16.msra.mxu0 %v760
    %826 = vmatprep.subr.bf16.mxu0 %v763
    %827 = vmatpush1.bf16.msra.mxu0 %v762
    %828 = vmatprep.mubr.bf16.mxu0 %v600
    %829 = vmatmul.mubr.bf16.gmra.mrb[0].mxu0 %v599
    %v830 = vpop.f32.mrb[0].mxu0
    %v831 = vadd.f32 0.0, %v830
    %v832 = vpop.f32.mrb[0].mxu0
    %v833 = vadd.f32 0.0, %v832
    %v834 = vpop.f32.mrb[0].mxu0
    %v835 = vadd.f32 0.0, %v834
    %v836 = vpop.f32.mrb[0].mxu0
    %v837 = vadd.f32 0.0, %v836
    %838 = vmatprep.mubr.bf16.mxu0 %v602
    %839 = vmatmul.mubr.bf16.gmra.mrb[0].mxu0 %v601
    %v840 = vpop.f32.mrb[0].mxu0
    %v841 = vadd.f32 0.0, %v840
    %v842 = vpop.f32.mrb[0].mxu0
    %v843 = vadd.f32 0.0, %v842
    %v844 = vpop.f32.mrb[0].mxu0
    %v845 = vadd.f32 0.0, %v844
    %v846 = vpop.f32.mrb[0].mxu0
    %v847 = vadd.f32 0.0, %v846
    %848 = vdwg.mxu0
    %v881 = vunpack.c.l.b16 %v567
    %v882 = vunpack.c.h.b16 %v567
    %v883 = vunpack.c.l.b16 %v568
    %v884 = vunpack.c.h.b16 %v568
    %v885 = vunpack.c.l.b16 %v569
    %v886 = vunpack.c.h.b16 %v569
    %v887 = vunpack.c.l.b16 %v570
    %v888 = vunpack.c.h.b16 %v570
    %v889 = vunpack.c.l.b16 %v571
    %v890 = vunpack.c.h.b16 %v571
    %v891 = vunpack.c.l.b16 %v572
    %v892 = vunpack.c.h.b16 %v572
    %v893 = vunpack.c.l.b16 %v573
    %v894 = vunpack.c.h.b16 %v573
    %v895 = vunpack.c.l.b16 %v574
    %v896 = vunpack.c.h.b16 %v574
    %v897 = vunpack.c.l.b16 %v575
    %v898 = vunpack.c.h.b16 %v575
    %v899 = vunpack.c.l.b16 %v576
    %v900 = vunpack.c.h.b16 %v576
    %v901 = vunpack.c.l.b16 %v577
    %v902 = vunpack.c.h.b16 %v577
    %v903 = vunpack.c.l.b16 %v578
    %v904 = vunpack.c.h.b16 %v578
    %v905 = vunpack.c.l.b16 %v579
    %v906 = vunpack.c.h.b16 %v579
    %v907 = vunpack.c.l.b16 %v580
    %v908 = vunpack.c.h.b16 %v580
    %v909 = vunpack.c.l.b16 %v581
    %v910 = vunpack.c.h.b16 %v581
    %v911 = vunpack.c.l.b16 %v582
    %v912 = vunpack.c.h.b16 %v582
    %v913 = vunpack.c.l.b16 %v583
    %v914 = vunpack.c.h.b16 %v583
    %v915 = vunpack.c.l.b16 %v584
    %v916 = vunpack.c.h.b16 %v584
    %v917 = vunpack.c.l.b16 %v585
    %v918 = vunpack.c.h.b16 %v585
    %v919 = vunpack.c.l.b16 %v586
    %v920 = vunpack.c.h.b16 %v586
    %v921 = vunpack.c.l.b16 %v587
    %v922 = vunpack.c.h.b16 %v587
    %v923 = vunpack.c.l.b16 %v588
    %v924 = vunpack.c.h.b16 %v588
    %v925 = vunpack.c.l.b16 %v589
    %v926 = vunpack.c.h.b16 %v589
    %v927 = vunpack.c.l.b16 %v590
    %v928 = vunpack.c.h.b16 %v590
    %v929 = vunpack.c.l.b16 %v591
    %v930 = vunpack.c.h.b16 %v591
    %v931 = vunpack.c.l.b16 %v592
    %v932 = vunpack.c.h.b16 %v592
    %v933 = vunpack.c.l.b16 %v593
    %v934 = vunpack.c.h.b16 %v593
    %v935 = vunpack.c.l.b16 %v594
    %v936 = vunpack.c.h.b16 %v594
    %v937 = vunpack.c.l.b16 %v595
    %v938 = vunpack.c.h.b16 %v595
    %v939 = vunpack.c.l.b16 %v596
    %v940 = vunpack.c.h.b16 %v596
    %v941 = vunpack.c.l.b16 %v597
    %v942 = vunpack.c.h.b16 %v597
    %v943 = vunpack.c.l.b16 %v598
    %v944 = vunpack.c.h.b16 %v598
    %v945 = vpack.c.b16 %v883, %v881
    %v946 = vpack.c.b16 %v884, %v882
    %v947 = vpack.c.b16 %v887, %v885
    %v948 = vpack.c.b16 %v888, %v886
    %v949 = vpack.c.b16 %v891, %v889
    %v950 = vpack.c.b16 %v892, %v890
    %v951 = vpack.c.b16 %v895, %v893
    %v952 = vpack.c.b16 %v896, %v894
    %v953 = vpack.c.b16 %v899, %v897
    %v954 = vpack.c.b16 %v900, %v898
    %v955 = vpack.c.b16 %v903, %v901
    %v956 = vpack.c.b16 %v904, %v902
    %v957 = vpack.c.b16 %v907, %v905
    %v958 = vpack.c.b16 %v908, %v906
    %v959 = vpack.c.b16 %v911, %v909
    %v960 = vpack.c.b16 %v912, %v910
    %v961 = vpack.c.b16 %v915, %v913
    %v962 = vpack.c.b16 %v916, %v914
    %v963 = vpack.c.b16 %v919, %v917
    %v964 = vpack.c.b16 %v920, %v918
    %v965 = vpack.c.b16 %v923, %v921
    %v966 = vpack.c.b16 %v924, %v922
    %v967 = vpack.c.b16 %v927, %v925
    %v968 = vpack.c.b16 %v928, %v926
    %v969 = vpack.c.b16 %v931, %v929
    %v970 = vpack.c.b16 %v932, %v930
    %v971 = vpack.c.b16 %v935, %v933
    %v972 = vpack.c.b16 %v936, %v934
    %v973 = vpack.c.b16 %v939, %v937
    %v974 = vpack.c.b16 %v940, %v938
    %v975 = vpack.c.b16 %v943, %v941
    %v976 = vpack.c.b16 %v944, %v942
    %1009 = vmatprep.subr.bf16.mxu0 %v946
    %1010 = vmatpush1.bf16.msra.mxu0 %v945
    %1011 = vmatprep.subr.bf16.mxu0 %v948
    %1012 = vmatpush1.bf16.msra.mxu0 %v947
    %1013 = vmatprep.subr.bf16.mxu0 %v950
    %1014 = vmatpush1.bf16.msra.mxu0 %v949
    %1015 = vmatprep.subr.bf16.mxu0 %v952
    %1016 = vmatpush1.bf16.msra.mxu0 %v951
    %1017 = vmatprep.subr.bf16.mxu0 %v954
    %1018 = vmatpush1.bf16.msra.mxu0 %v953
    %1019 = vmatprep.subr.bf16.mxu0 %v956
    %1020 = vmatpush1.bf16.msra.mxu0 %v955
    %1021 = vmatprep.subr.bf16.mxu0 %v958
    %1022 = vmatpush1.bf16.msra.mxu0 %v957
    %1023 = vmatprep.subr.bf16.mxu0 %v960
    %1024 = vmatpush1.bf16.msra.mxu0 %v959
    %1025 = vmatprep.subr.bf16.mxu0 %v962
    %1026 = vmatpush1.bf16.msra.mxu0 %v961
    %1027 = vmatprep.subr.bf16.mxu0 %v964
    %1028 = vmatpush1.bf16.msra.mxu0 %v963
    %1029 = vmatprep.subr.bf16.mxu0 %v966
    %1030 = vmatpush1.bf16.msra.mxu0 %v965
    %1031 = vmatprep.subr.bf16.mxu0 %v968
    %1032 = vmatpush1.bf16.msra.mxu0 %v967
    %1033 = vmatprep.subr.bf16.mxu0 %v970
    %1034 = vmatpush1.bf16.msra.mxu0 %v969
    %1035 = vmatprep.subr.bf16.mxu0 %v972
    %1036 = vmatpush1.bf16.msra.mxu0 %v971
    %1037 = vmatprep.subr.bf16.mxu0 %v974
    %1038 = vmatpush1.bf16.msra.mxu0 %v973
    %1039 = vmatprep.subr.bf16.mxu0 %v976
    %1040 = vmatpush1.bf16.msra.mxu0 %v975
    %1041 = vmatprep.mubr.bf16.mxu0 %v564
    %1042 = vmatmul.mubr.bf16.gmra.mrb[0].mxu0 %v563
    %v1043 = vpop.f32.mrb[0].mxu0
    %v1044 = vadd.f32 %v831, %v1043
    %v1045 = vpop.f32.mrb[0].mxu0
    %v1046 = vadd.f32 %v833, %v1045
    %v1047 = vpop.f32.mrb[0].mxu0
    %v1048 = vadd.f32 %v835, %v1047
    %v1049 = vpop.f32.mrb[0].mxu0
    %v1050 = vadd.f32 %v837, %v1049
    %1051 = vmatprep.mubr.bf16.mxu0 %v566
    %1052 = vmatmul.mubr.bf16.gmra.mrb[0].mxu0 %v565
    %v1053 = vpop.f32.mrb[0].mxu0
    %v1054 = vadd.f32 %v841, %v1053
    %v1055 = vpop.f32.mrb[0].mxu0
    %v1056 = vadd.f32 %v843, %v1055
    %v1057 = vpop.f32.mrb[0].mxu0
    %v1058 = vadd.f32 %v845, %v1057
    %v1059 = vpop.f32.mrb[0].mxu0
    %v1060 = vadd.f32 %v847, %v1059
    %1061 = vdwg.mxu0
    %v1062 = vpack.c.bf16 %v557, %v555
    %v1063 = vpack.c.bf16 %v558, %v556
    %v1064 = vpack.c.bf16 %v561, %v559
    %v1065 = vpack.c.bf16 %v562, %v560
    %s1066 = scalar_lea.vmem [#allocation3], 512
    %v1067 = vld [vmem:[%s1066] sm:$0xff]
    %v1068 = vld [vmem:[%s1066 + $0x8] sm:$0xff]
    %v1069 = vld [vmem:[%s1066 + $0x10] sm:$0xff]
    %v1070 = vld [vmem:[%s1066 + $0x18] sm:$0xff]
    %v1071 = vld [vmem:[%s1066 + $0x20] sm:$0xff]
    %v1072 = vld [vmem:[%s1066 + $0x28] sm:$0xff]
    %v1073 = vld [vmem:[%s1066 + $0x30] sm:$0xff]
    %v1074 = vld [vmem:[%s1066 + $0x38] sm:$0xff]
    %v1075 = vld [vmem:[%s1066 + $0x40] sm:$0xff]
    %v1076 = vld [vmem:[%s1066 + $0x48] sm:$0xff]
    %v1077 = vld [vmem:[%s1066 + $0x50] sm:$0xff]
    %v1078 = vld [vmem:[%s1066 + $0x58] sm:$0xff]
    %v1079 = vld [vmem:[%s1066 + $0x60] sm:$0xff]
    %v1080 = vld [vmem:[%s1066 + $0x68] sm:$0xff]
    %v1081 = vld [vmem:[%s1066 + $0x70] sm:$0xff]
    %v1082 = vld [vmem:[%s1066 + $0x78] sm:$0xff]
    %v1083 = vld [vmem:[%s1066 + $0x80] sm:$0xff]
    %v1084 = vld [vmem:[%s1066 + $0x88] sm:$0xff]
    %v1085 = vld [vmem:[%s1066 + $0x90] sm:$0xff]
    %v1086 = vld [vmem:[%s1066 + $0x98] sm:$0xff]
    %v1087 = vld [vmem:[%s1066 + $0xa0] sm:$0xff]
    %v1088 = vld [vmem:[%s1066 + $0xa8] sm:$0xff]
    %v1089 = vld [vmem:[%s1066 + $0xb0] sm:$0xff]
    %v1090 = vld [vmem:[%s1066 + $0xb8] sm:$0xff]
    %v1091 = vld [vmem:[%s1066 + $0xc0] sm:$0xff]
    %v1092 = vld [vmem:[%s1066 + $0xc8] sm:$0xff]
    %v1093 = vld [vmem:[%s1066 + $0xd0] sm:$0xff]
    %v1094 = vld [vmem:[%s1066 + $0xd8] sm:$0xff]
    %v1095 = vld [vmem:[%s1066 + $0xe0] sm:$0xff]
    %v1096 = vld [vmem:[%s1066 + $0xe8] sm:$0xff]
    %v1097 = vld [vmem:[%s1066 + $0xf0] sm:$0xff]
    %v1098 = vld [vmem:[%s1066 + $0xf8] sm:$0xff]
    %v1131 = vunpack.c.l.b16 %v1067
    %v1132 = vunpack.c.h.b16 %v1067
    %v1133 = vunpack.c.l.b16 %v1068
    %v1134 = vunpack.c.h.b16 %v1068
    %v1135 = vunpack.c.l.b16 %v1069
    %v1136 = vunpack.c.h.b16 %v1069
    %v1137 = vunpack.c.l.b16 %v1070
    %v1138 = vunpack.c.h.b16 %v1070
    %v1139 = vunpack.c.l.b16 %v1071
    %v1140 = vunpack.c.h.b16 %v1071
    %v1141 = vunpack.c.l.b16 %v1072
    %v1142 = vunpack.c.h.b16 %v1072
    %v1143 = vunpack.c.l.b16 %v1073
    %v1144 = vunpack.c.h.b16 %v1073
    %v1145 = vunpack.c.l.b16 %v1074
    %v1146 = vunpack.c.h.b16 %v1074
    %v1147 = vunpack.c.l.b16 %v1075
    %v1148 = vunpack.c.h.b16 %v1075
    %v1149 = vunpack.c.l.b16 %v1076
    %v1150 = vunpack.c.h.b16 %v1076
    %v1151 = vunpack.c.l.b16 %v1077
    %v1152 = vunpack.c.h.b16 %v1077
    %v1153 = vunpack.c.l.b16 %v1078
    %v1154 = vunpack.c.h.b16 %v1078
    %v1155 = vunpack.c.l.b16 %v1079
    %v1156 = vunpack.c.h.b16 %v1079
    %v1157 = vunpack.c.l.b16 %v1080
    %v1158 = vunpack.c.h.b16 %v1080
    %v1159 = vunpack.c.l.b16 %v1081
    %v1160 = vunpack.c.h.b16 %v1081
    %v1161 = vunpack.c.l.b16 %v1082
    %v1162 = vunpack.c.h.b16 %v1082
    %v1163 = vunpack.c.l.b16 %v1083
    %v1164 = vunpack.c.h.b16 %v1083
    %v1165 = vunpack.c.l.b16 %v1084
    %v1166 = vunpack.c.h.b16 %v1084
    %v1167 = vunpack.c.l.b16 %v1085
    %v1168 = vunpack.c.h.b16 %v1085
    %v1169 = vunpack.c.l.b16 %v1086
    %v1170 = vunpack.c.h.b16 %v1086
    %v1171 = vunpack.c.l.b16 %v1087
    %v1172 = vunpack.c.h.b16 %v1087
    %v1173 = vunpack.c.l.b16 %v1088
    %v1174 = vunpack.c.h.b16 %v1088
    %v1175 = vunpack.c.l.b16 %v1089
    %v1176 = vunpack.c.h.b16 %v1089
    %v1177 = vunpack.c.l.b16 %v1090
    %v1178 = vunpack.c.h.b16 %v1090
    %v1179 = vunpack.c.l.b16 %v1091
    %v1180 = vunpack.c.h.b16 %v1091
    %v1181 = vunpack.c.l.b16 %v1092
    %v1182 = vunpack.c.h.b16 %v1092
    %v1183 = vunpack.c.l.b16 %v1093
    %v1184 = vunpack.c.h.b16 %v1093
    %v1185 = vunpack.c.l.b16 %v1094
    %v1186 = vunpack.c.h.b16 %v1094
    %v1187 = vunpack.c.l.b16 %v1095
    %v1188 = vunpack.c.h.b16 %v1095
    %v1189 = vunpack.c.l.b16 %v1096
    %v1190 = vunpack.c.h.b16 %v1096
    %v1191 = vunpack.c.l.b16 %v1097
    %v1192 = vunpack.c.h.b16 %v1097
    %v1193 = vunpack.c.l.b16 %v1098
    %v1194 = vunpack.c.h.b16 %v1098
    %v1195 = vpack.c.b16 %v1133, %v1131
    %v1196 = vpack.c.b16 %v1134, %v1132
    %v1197 = vpack.c.b16 %v1137, %v1135
    %v1198 = vpack.c.b16 %v1138, %v1136
    %v1199 = vpack.c.b16 %v1141, %v1139
    %v1200 = vpack.c.b16 %v1142, %v1140
    %v1201 = vpack.c.b16 %v1145, %v1143
    %v1202 = vpack.c.b16 %v1146, %v1144
    %v1203 = vpack.c.b16 %v1149, %v1147
    %v1204 = vpack.c.b16 %v1150, %v1148
    %v1205 = vpack.c.b16 %v1153, %v1151
    %v1206 = vpack.c.b16 %v1154, %v1152
    %v1207 = vpack.c.b16 %v1157, %v1155
    %v1208 = vpack.c.b16 %v1158, %v1156
    %v1209 = vpack.c.b16 %v1161, %v1159
    %v1210 = vpack.c.b16 %v1162, %v1160
    %v1211 = vpack.c.b16 %v1165, %v1163
    %v1212 = vpack.c.b16 %v1166, %v1164
    %v1213 = vpack.c.b16 %v1169, %v1167
    %v1214 = vpack.c.b16 %v1170, %v1168
    %v1215 = vpack.c.b16 %v1173, %v1171
    %v1216 = vpack.c.b16 %v1174, %v1172
    %v1217 = vpack.c.b16 %v1177, %v1175
    %v1218 = vpack.c.b16 %v1178, %v1176
    %v1219 = vpack.c.b16 %v1181, %v1179
    %v1220 = vpack.c.b16 %v1182, %v1180
    %v1221 = vpack.c.b16 %v1185, %v1183
    %v1222 = vpack.c.b16 %v1186, %v1184
    %v1223 = vpack.c.b16 %v1189, %v1187
    %v1224 = vpack.c.b16 %v1190, %v1188
    %v1225 = vpack.c.b16 %v1193, %v1191
    %v1226 = vpack.c.b16 %v1194, %v1192
    %1259 = vmatprep.subr.bf16.mxu0 %v1196
    %1260 = vmatpush1.bf16.msra.mxu0 %v1195
    %1261 = vmatprep.subr.bf16.mxu0 %v1198
    %1262 = vmatpush1.bf16.msra.mxu0 %v1197
    %1263 = vmatprep.subr.bf16.mxu0 %v1200
    %1264 = vmatpush1.bf16.msra.mxu0 %v1199
    %1265 = vmatprep.subr.bf16.mxu0 %v1202
    %1266 = vmatpush1.bf16.msra.mxu0 %v1201
    %1267 = vmatprep.subr.bf16.mxu0 %v1204
    %1268 = vmatpush1.bf16.msra.mxu0 %v1203
    %1269 = vmatprep.subr.bf16.mxu0 %v1206
    %1270 = vmatpush1.bf16.msra.mxu0 %v1205
    %1271 = vmatprep.subr.bf16.mxu0 %v1208
    %1272 = vmatpush1.bf16.msra.mxu0 %v1207
    %1273 = vmatprep.subr.bf16.mxu0 %v1210
    %1274 = vmatpush1.bf16.msra.mxu0 %v1209
    %1275 = vmatprep.subr.bf16.mxu0 %v1212
    %1276 = vmatpush1.bf16.msra.mxu0 %v1211
    %1277 = vmatprep.subr.bf16.mxu0 %v1214
    %1278 = vmatpush1.bf16.msra.mxu0 %v1213
    %1279 = vmatprep.subr.bf16.mxu0 %v1216
    %1280 = vmatpush1.bf16.msra.mxu0 %v1215
    %1281 = vmatprep.subr.bf16.mxu0 %v1218
    %1282 = vmatpush1.bf16.msra.mxu0 %v1217
    %1283 = vmatprep.subr.bf16.mxu0 %v1220
    %1284 = vmatpush1.bf16.msra.mxu0 %v1219
    %1285 = vmatprep.subr.bf16.mxu0 %v1222
    %1286 = vmatpush1.bf16.msra.mxu0 %v1221
    %1287 = vmatprep.subr.bf16.mxu0 %v1224
    %1288 = vmatpush1.bf16.msra.mxu0 %v1223
    %1289 = vmatprep.subr.bf16.mxu0 %v1226
    %1290 = vmatpush1.bf16.msra.mxu0 %v1225
    %1291 = vmatprep.mubr.bf16.mxu0 %v1063
    %1292 = vmatmul.mubr.bf16.gmra.mrb[0].mxu0 %v1062
    %v1293 = vpop.f32.mrb[0].mxu0
    %v1294 = vadd.f32 0.0, %v1293
    %v1295 = vpop.f32.mrb[0].mxu0
    %v1296 = vadd.f32 0.0, %v1295
    %v1297 = vpop.f32.mrb[0].mxu0
    %v1298 = vadd.f32 0.0, %v1297
    %v1299 = vpop.f32.mrb[0].mxu0
    %v1300 = vadd.f32 0.0, %v1299
    %1301 = vmatprep.mubr.bf16.mxu0 %v1065
    %1302 = vmatmul.mubr.bf16.gmra.mrb[0].mxu0 %v1064
    %v1303 = vpop.f32.mrb[0].mxu0
    %v1304 = vadd.f32 0.0, %v1303
    %v1305 = vpop.f32.mrb[0].mxu0
    %v1306 = vadd.f32 0.0, %v1305
    %v1307 = vpop.f32.mrb[0].mxu0
    %v1308 = vadd.f32 0.0, %v1307
    %v1309 = vpop.f32.mrb[0].mxu0
    %v1310 = vadd.f32 0.0, %v1309
    %1311 = vdwg.mxu0
    %v1312 = vadd.f32 %v1044, %v1294
    %v1313 = vadd.f32 %v1046, %v1296
    %v1314 = vadd.f32 %v1048, %v1298
    %v1315 = vadd.f32 %v1050, %v1300
    %v1316 = vadd.f32 %v1054, %v1304
    %v1317 = vadd.f32 %v1056, %v1306
    %v1318 = vadd.f32 %v1058, %v1308
    %v1319 = vadd.f32 %v1060, %v1310
    %v1320 = vld [vmem:[%s4] sm:$0x3]
    %v1322 = vlaneseq
    %v1323 = vshrl.u32 %v1322, 7
    %v1324 = vsub.s32 0, %v1323
    %v1325 = vrot.slane %v1320, %v1324
    %v1326 = vlaneseq
    %v1327 = vshrl.u32 %v1326, 7
    %v1328 = vsub.s32 1, %v1327
    %v1329 = vrot.slane %v1320, %v1328
    %v1332 = vadd.f32 %v1312, %v1325
    %v1333 = vadd.f32 %v1313, %v1329
    %v1334 = vadd.f32 %v1314, %v1325
    %v1335 = vadd.f32 %v1315, %v1329
    %v1336 = vadd.f32 %v1316, %v1325
    %v1337 = vadd.f32 %v1317, %v1329
    %v1338 = vadd.f32 %v1318, %v1325
    %v1339 = vadd.f32 %v1319, %v1329
    %v1340 = vmax.f32 %v1332, 0.0
    %v1341 = vmax.f32 %v1333, 0.0
    %v1342 = vmax.f32 %v1334, 0.0
    %v1343 = vmax.f32 %v1335, 0.0
    %v1344 = vmax.f32 %v1336, 0.0
    %v1345 = vmax.f32 %v1337, 0.0
    %v1346 = vmax.f32 %v1338, 0.0
    %v1347 = vmax.f32 %v1339, 0.0
    %v1348 = vpack.c.bf16 %v1340, %v1340
    %v1349 = vpack.c.bf16 %v1341, %v1341
    %v1350 = vpack.c.bf16 %v1344, %v1344
    %v1351 = vpack.c.bf16 %v1345, %v1345
    %v1356 = vcombine.low %v1348, %v1349
    %v1358 = vunpack.c.l.s4 1966171168
    %v1359 = vunpack.c.0.s8 %v1358
    %v1360 = vlaneseq
    %v1361 = vshrl.u32 %v1360, 7
    %v1362 = vsub.s32 %v1359, %v1361
    %v1363 = vrot.slane %v1356, %v1362
    %v1365 = vunpack.c.l.s4 1966171168
    %v1366 = vunpack.c.0.s8 %v1365
    %v1367 = vlaneseq
    %v1368 = vshrl.u32 %v1367, 7
    %v1369 = vsub.s32 %v1366, %v1368
    %v1370 = vrot.slane %v1363, %v1369
    %v1371 = vcombine.low %v1350, %v1351
    %v1373 = vunpack.c.l.s4 1966171168
    %v1374 = vunpack.c.0.s8 %v1373
    %v1375 = vlaneseq
    %v1376 = vshrl.u32 %v1375, 7
    %v1377 = vsub.s32 %v1374, %v1376
    %v1378 = vrot.slane %v1371, %v1377
    %v1380 = vunpack.c.l.s4 1966171168
    %v1381 = vunpack.c.0.s8 %v1380
    %v1382 = vlaneseq
    %v1383 = vshrl.u32 %v1382, 7
    %v1384 = vsub.s32 %v1381, %v1383
    %v1385 = vrot.slane %v1378, %v1384
    %v1387 = vunpack.c.l.s4 1935823168
    %v1388 = vunpack.c.0.s8 %v1387
    %v1389 = vlaneseq
    %v1390 = vshrl.u32 %v1389, 7
    %v1391 = vsub.s32 %v1388, %v1390
    %v1392 = vrot.slane %v1370, %v1391
    %v1394 = vunpack.c.l.s4 1935823168
    %v1395 = vunpack.c.0.s8 %v1394
    %v1396 = vlaneseq
    %v1397 = vshrl.u32 %v1396, 7
    %v1398 = vsub.s32 %v1395, %v1397
    %v1399 = vrot.slane %v1392, %v1398
    %v1401 = vunpack.c.l.s4 1935823168
    %v1402 = vunpack.c.0.s8 %v1401
    %v1403 = vlaneseq
    %v1404 = vshrl.u32 %v1403, 7
    %v1405 = vsub.s32 %v1402, %v1404
    %v1406 = vrot.slane %v1385, %v1405
    %v1408 = vunpack.c.l.s4 1935823168
    %v1409 = vunpack.c.0.s8 %v1408
    %v1410 = vlaneseq
    %v1411 = vshrl.u32 %v1410, 7
    %v1412 = vsub.s32 %v1409, %v1411
    %v1413 = vrot.slane %v1406, %v1412
    %v1414 = vunpack.c.l.b16 %v1399
    %v1415 = vunpack.c.h.b16 %v1399
    %v1416 = vunpack.c.l.b16 %v1413
    %v1417 = vunpack.c.h.b16 %v1413
    %v1418 = vrot.slane %v1416, 7
    %vm1419 = vcmask 1041409
    %v1420 = vsel %vm1419, %v1418, %v1414
    %v1421 = vrot.slane %v1417, 7
    %v1422 = vsel %vm1419, %v1421, %v1415
    %v1423 = vpack.c.b16 %v1422, %v1420
    %v1425 = vunpack.c.l.s4 1966171168
    %v1426 = vunpack.c.0.s8 %v1425
    %v1427 = vlaneseq
    %v1428 = vshrl.u32 %v1427, 7
    %v1429 = vsub.s32 %v1426, %v1428
    %v1430 = vrot.slane %v1423, %v1429
    %v1432 = vunpack.c.l.s4 1966171168
    %v1433 = vunpack.c.0.s8 %v1432
    %v1434 = vlaneseq
    %v1435 = vshrl.u32 %v1434, 7
    %v1436 = vsub.s32 %v1433, %v1435
    %v1437 = vrot.slane %v1430, %v1436
    %1439 = vst [vmem:[#allocation2] sm:$0x3] %v1437
    %v1440 = vrot.slane %v1414, 1
    %v1441 = vsel %vm1419, %v1416, %v1440
    %v1442 = vrot.slane %v1415, 1
    %v1443 = vsel %vm1419, %v1417, %v1442
    %v1444 = vpack.c.b16 %v1443, %v1441
    %v1446 = vunpack.c.l.s4 1966171168
    %v1447 = vunpack.c.0.s8 %v1446
    %v1448 = vlaneseq
    %v1449 = vshrl.u32 %v1448, 7
    %v1450 = vsub.s32 %v1447, %v1449
    %v1451 = vrot.slane %v1444, %v1450
    %v1453 = vunpack.c.l.s4 1966171168
    %v1454 = vunpack.c.0.s8 %v1453
    %v1455 = vlaneseq
    %v1456 = vshrl.u32 %v1455, 7
    %v1457 = vsub.s32 %v1454, %v1456
    %v1458 = vrot.slane %v1451, %v1457
    %1460 = vst [vmem:[#allocation2 + $0x2] sm:$0x3] %v1458
    %v1461 = vcombine.high %v1363, %v1363
    %v1463 = vunpack.c.l.s4 1966171168
    %v1464 = vunpack.c.0.s8 %v1463
    %v1465 = vlaneseq
    %v1466 = vshrl.u32 %v1465, 7
    %v1467 = vsub.s32 %v1464, %v1466
    %v1468 = vrot.slane %v1461, %v1467
    %v1469 = vcombine.high %v1378, %v1378
    %v1471 = vunpack.c.l.s4 1966171168
    %v1472 = vunpack.c.0.s8 %v1471
    %v1473 = vlaneseq
    %v1474 = vshrl.u32 %v1473, 7
    %v1475 = vsub.s32 %v1472, %v1474
    %v1476 = vrot.slane %v1469, %v1475
    %v1478 = vunpack.c.l.s4 1935823168
    %v1479 = vunpack.c.0.s8 %v1478
    %v1480 = vlaneseq
    %v1481 = vshrl.u32 %v1480, 7
    %v1482 = vsub.s32 %v1479, %v1481
    %v1483 = vrot.slane %v1468, %v1482
    %v1485 = vunpack.c.l.s4 1935823168
    %v1486 = vunpack.c.0.s8 %v1485
    %v1487 = vlaneseq
    %v1488 = vshrl.u32 %v1487, 7
    %v1489 = vsub.s32 %v1486, %v1488
    %v1490 = vrot.slane %v1483, %v1489
    %v1492 = vunpack.c.l.s4 1935823168
    %v1493 = vunpack.c.0.s8 %v1492
    %v1494 = vlaneseq
    %v1495 = vshrl.u32 %v1494, 7
    %v1496 = vsub.s32 %v1493, %v1495
    %v1497 = vrot.slane %v1476, %v1496
    %v1499 = vunpack.c.l.s4 1935823168
    %v1500 = vunpack.c.0.s8 %v1499
    %v1501 = vlaneseq
    %v1502 = vshrl.u32 %v1501, 7
    %v1503 = vsub.s32 %v1500, %v1502
    %v1504 = vrot.slane %v1497, %v1503
    %v1505 = vunpack.c.l.b16 %v1490
    %v1506 = vunpack.c.h.b16 %v1490
    %v1507 = vunpack.c.l.b16 %v1504
    %v1508 = vunpack.c.h.b16 %v1504
    %v1509 = vrot.slane %v1507, 7
    %v1510 = vsel %vm1419, %v1509, %v1505
    %v1511 = vrot.slane %v1508, 7
    %v1512 = vsel %vm1419, %v1511, %v1506
    %v1513 = vpack.c.b16 %v1512, %v1510
    %v1515 = vunpack.c.l.s4 1966171168
    %v1516 = vunpack.c.0.s8 %v1515
    %v1517 = vlaneseq
    %v1518 = vshrl.u32 %v1517, 7
    %v1519 = vsub.s32 %v1516, %v1518
    %v1520 = vrot.slane %v1513, %v1519
    %v1522 = vunpack.c.l.s4 1966171168
    %v1523 = vunpack.c.0.s8 %v1522
    %v1524 = vlaneseq
    %v1525 = vshrl.u32 %v1524, 7
    %v1526 = vsub.s32 %v1523, %v1525
    %v1527 = vrot.slane %v1520, %v1526
    %1529 = vst [vmem:[#allocation2 + $0x4] sm:$0x3] %v1527
    %v1530 = vrot.slane %v1505, 1
    %v1531 = vsel %vm1419, %v1507, %v1530
    %v1532 = vrot.slane %v1506, 1
    %v1533 = vsel %vm1419, %v1508, %v1532
    %v1534 = vpack.c.b16 %v1533, %v1531
    %v1536 = vunpack.c.l.s4 1966171168
    %v1537 = vunpack.c.0.s8 %v1536
    %v1538 = vlaneseq
    %v1539 = vshrl.u32 %v1538, 7
    %v1540 = vsub.s32 %v1537, %v1539
    %v1541 = vrot.slane %v1534, %v1540
    %v1543 = vunpack.c.l.s4 1966171168
    %v1544 = vunpack.c.0.s8 %v1543
    %v1545 = vlaneseq
    %v1546 = vshrl.u32 %v1545, 7
    %v1547 = vsub.s32 %v1544, %v1546
    %v1548 = vrot.slane %v1541, %v1547
    %1550 = vst [vmem:[#allocation2 + $0x6] sm:$0x3] %v1548
    %v1551 = vcombine.high %v1370, %v1370
    %v1552 = vcombine.high %v1385, %v1385
    %v1554 = vunpack.c.l.s4 1935823168
    %v1555 = vunpack.c.0.s8 %v1554
    %v1556 = vlaneseq
    %v1557 = vshrl.u32 %v1556, 7
    %v1558 = vsub.s32 %v1555, %v1557
    %v1559 = vrot.slane %v1551, %v1558
    %v1561 = vunpack.c.l.s4 1935823168
    %v1562 = vunpack.c.0.s8 %v1561
    %v1563 = vlaneseq
    %v1564 = vshrl.u32 %v1563, 7
    %v1565 = vsub.s32 %v1562, %v1564
    %v1566 = vrot.slane %v1559, %v1565
    %v1568 = vunpack.c.l.s4 1935823168
    %v1569 = vunpack.c.0.s8 %v1568
    %v1570 = vlaneseq
    %v1571 = vshrl.u32 %v1570, 7
    %v1572 = vsub.s32 %v1569, %v1571
    %v1573 = vrot.slane %v1552, %v1572
    %v1575 = vunpack.c.l.s4 1935823168
    %v1576 = vunpack.c.0.s8 %v1575
    %v1577 = vlaneseq
    %v1578 = vshrl.u32 %v1577, 7
    %v1579 = vsub.s32 %v1576, %v1578
    %v1580 = vrot.slane %v1573, %v1579
    %v1581 = vunpack.c.l.b16 %v1566
    %v1582 = vunpack.c.h.b16 %v1566
    %v1583 = vunpack.c.l.b16 %v1580
    %v1584 = vunpack.c.h.b16 %v1580
    %v1585 = vrot.slane %v1583, 7
    %v1586 = vsel %vm1419, %v1585, %v1581
    %v1587 = vrot.slane %v1584, 7
    %v1588 = vsel %vm1419, %v1587, %v1582
    %v1589 = vpack.c.b16 %v1588, %v1586
    %v1591 = vunpack.c.l.s4 1966171168
    %v1592 = vunpack.c.0.s8 %v1591
    %v1593 = vlaneseq
    %v1594 = vshrl.u32 %v1593, 7
    %v1595 = vsub.s32 %v1592, %v1594
    %v1596 = vrot.slane %v1589, %v1595
    %v1598 = vunpack.c.l.s4 1966171168
    %v1599 = vunpack.c.0.s8 %v1598
    %v1600 = vlaneseq
    %v1601 = vshrl.u32 %v1600, 7
    %v1602 = vsub.s32 %v1599, %v1601
    %v1603 = vrot.slane %v1596, %v1602
    %1605 = vst [vmem:[#allocation2 + $0x8] sm:$0x3] %v1603
    %v1606 = vrot.slane %v1581, 1
    %v1607 = vsel %vm1419, %v1583, %v1606
    %v1608 = vrot.slane %v1582, 1
    %v1609 = vsel %vm1419, %v1584, %v1608
    %v1610 = vpack.c.b16 %v1609, %v1607
    %v1612 = vunpack.c.l.s4 1966171168
    %v1613 = vunpack.c.0.s8 %v1612
    %v1614 = vlaneseq
    %v1615 = vshrl.u32 %v1614, 7
    %v1616 = vsub.s32 %v1613, %v1615
    %v1617 = vrot.slane %v1610, %v1616
    %v1619 = vunpack.c.l.s4 1966171168
    %v1620 = vunpack.c.0.s8 %v1619
    %v1621 = vlaneseq
    %v1622 = vshrl.u32 %v1621, 7
    %v1623 = vsub.s32 %v1620, %v1622
    %v1624 = vrot.slane %v1617, %v1623
    %1626 = vst [vmem:[#allocation2 + $0xa] sm:$0x3] %v1624
    %v1627 = vcombine.high %v1468, %v1468
    %v1628 = vcombine.high %v1476, %v1476
    %v1630 = vunpack.c.l.s4 1935823168
    %v1631 = vunpack.c.0.s8 %v1630
    %v1632 = vlaneseq
    %v1633 = vshrl.u32 %v1632, 7
    %v1634 = vsub.s32 %v1631, %v1633
    %v1635 = vrot.slane %v1627, %v1634
    %v1637 = vunpack.c.l.s4 1935823168
    %v1638 = vunpack.c.0.s8 %v1637
    %v1639 = vlaneseq
    %v1640 = vshrl.u32 %v1639, 7
    %v1641 = vsub.s32 %v1638, %v1640
    %v1642 = vrot.slane %v1635, %v1641
    %v1644 = vunpack.c.l.s4 1935823168
    %v1645 = vunpack.c.0.s8 %v1644
    %v1646 = vlaneseq
    %v1647 = vshrl.u32 %v1646, 7
    %v1648 = vsub.s32 %v1645, %v1647
    %v1649 = vrot.slane %v1628, %v1648
    %v1651 = vunpack.c.l.s4 1935823168
    %v1652 = vunpack.c.0.s8 %v1651
    %v1653 = vlaneseq
    %v1654 = vshrl.u32 %v1653, 7
    %v1655 = vsub.s32 %v1652, %v1654
    %v1656 = vrot.slane %v1649, %v1655
    %v1657 = vunpack.c.l.b16 %v1642
    %v1658 = vunpack.c.h.b16 %v1642
    %v1659 = vunpack.c.l.b16 %v1656
    %v1660 = vunpack.c.h.b16 %v1656
    %v1661 = vrot.slane %v1659, 7
    %v1662 = vsel %vm1419, %v1661, %v1657
    %v1663 = vrot.slane %v1660, 7
    %v1664 = vsel %vm1419, %v1663, %v1658
    %v1665 = vpack.c.b16 %v1664, %v1662
    %v1667 = vunpack.c.l.s4 1966171168
    %v1668 = vunpack.c.0.s8 %v1667
    %v1669 = vlaneseq
    %v1670 = vshrl.u32 %v1669, 7
    %v1671 = vsub.s32 %v1668, %v1670
    %v1672 = vrot.slane %v1665, %v1671
    %v1674 = vunpack.c.l.s4 1966171168
    %v1675 = vunpack.c.0.s8 %v1674
    %v1676 = vlaneseq
    %v1677 = vshrl.u32 %v1676, 7
    %v1678 = vsub.s32 %v1675, %v1677
    %v1679 = vrot.slane %v1672, %v1678
    %1681 = vst [vmem:[#allocation2 + $0xc] sm:$0x3] %v1679
    %v1682 = vrot.slane %v1657, 1
    %v1683 = vsel %vm1419, %v1659, %v1682
    %v1684 = vrot.slane %v1658, 1
    %v1685 = vsel %vm1419, %v1660, %v1684
    %v1686 = vpack.c.b16 %v1685, %v1683
    %v1688 = vunpack.c.l.s4 1966171168
    %v1689 = vunpack.c.0.s8 %v1688
    %v1690 = vlaneseq
    %v1691 = vshrl.u32 %v1690, 7
    %v1692 = vsub.s32 %v1689, %v1691
    %v1693 = vrot.slane %v1686, %v1692
    %v1695 = vunpack.c.l.s4 1966171168
    %v1696 = vunpack.c.0.s8 %v1695
    %v1697 = vlaneseq
    %v1698 = vshrl.u32 %v1697, 7
    %v1699 = vsub.s32 %v1696, %v1698
    %v1700 = vrot.slane %v1693, %v1699
    %1702 = vst [vmem:[#allocation2 + $0xe] sm:$0x3] %v1700
    %v1703 = vpack.c.bf16 %v1342, %v1342
    %v1704 = vpack.c.bf16 %v1343, %v1343
    %v1705 = vpack.c.bf16 %v1346, %v1346
    %v1706 = vpack.c.bf16 %v1347, %v1347
    %v1711 = vcombine.low %v1703, %v1704
    %v1713 = vunpack.c.l.s4 1966171168
    %v1714 = vunpack.c.0.s8 %v1713
    %v1715 = vlaneseq
    %v1716 = vshrl.u32 %v1715, 7
    %v1717 = vsub.s32 %v1714, %v1716
    %v1718 = vrot.slane %v1711, %v1717
    %v1720 = vunpack.c.l.s4 1966171168
    %v1721 = vunpack.c.0.s8 %v1720
    %v1722 = vlaneseq
    %v1723 = vshrl.u32 %v1722, 7
    %v1724 = vsub.s32 %v1721, %v1723
    %v1725 = vrot.slane %v1718, %v1724
    %v1726 = vcombine.low %v1705, %v1706
    %v1728 = vunpack.c.l.s4 1966171168
    %v1729 = vunpack.c.0.s8 %v1728
    %v1730 = vlaneseq
    %v1731 = vshrl.u32 %v1730, 7
    %v1732 = vsub.s32 %v1729, %v1731
    %v1733 = vrot.slane %v1726, %v1732
    %v1735 = vunpack.c.l.s4 1966171168
    %v1736 = vunpack.c.0.s8 %v1735
    %v1737 = vlaneseq
    %v1738 = vshrl.u32 %v1737, 7
    %v1739 = vsub.s32 %v1736, %v1738
    %v1740 = vrot.slane %v1733, %v1739
    %v1742 = vunpack.c.l.s4 1935823168
    %v1743 = vunpack.c.0.s8 %v1742
    %v1744 = vlaneseq
    %v1745 = vshrl.u32 %v1744, 7
    %v1746 = vsub.s32 %v1743, %v1745
    %v1747 = vrot.slane %v1725, %v1746
    %v1749 = vunpack.c.l.s4 1935823168
    %v1750 = vunpack.c.0.s8 %v1749
    %v1751 = vlaneseq
    %v1752 = vshrl.u32 %v1751, 7
    %v1753 = vsub.s32 %v1750, %v1752
    %v1754 = vrot.slane %v1747, %v1753
    %v1756 = vunpack.c.l.s4 1935823168
    %v1757 = vunpack.c.0.s8 %v1756
    %v1758 = vlaneseq
    %v1759 = vshrl.u32 %v1758, 7
    %v1760 = vsub.s32 %v1757, %v1759
    %v1761 = vrot.slane %v1740, %v1760
    %v1763 = vunpack.c.l.s4 1935823168
    %v1764 = vunpack.c.0.s8 %v1763
    %v1765 = vlaneseq
    %v1766 = vshrl.u32 %v1765, 7
    %v1767 = vsub.s32 %v1764, %v1766
    %v1768 = vrot.slane %v1761, %v1767
    %v1769 = vunpack.c.l.b16 %v1754
    %v1770 = vunpack.c.h.b16 %v1754
    %v1771 = vunpack.c.l.b16 %v1768
    %v1772 = vunpack.c.h.b16 %v1768
    %v1773 = vrot.slane %v1771, 7
    %v1774 = vsel %vm1419, %v1773, %v1769
    %v1775 = vrot.slane %v1772, 7
    %v1776 = vsel %vm1419, %v1775, %v1770
    %v1777 = vpack.c.b16 %v1776, %v1774
    %v1779 = vunpack.c.l.s4 1966171168
    %v1780 = vunpack.c.0.s8 %v1779
    %v1781 = vlaneseq
    %v1782 = vshrl.u32 %v1781, 7
    %v1783 = vsub.s32 %v1780, %v1782
    %v1784 = vrot.slane %v1777, %v1783
    %v1786 = vunpack.c.l.s4 1966171168
    %v1787 = vunpack.c.0.s8 %v1786
    %v1788 = vlaneseq
    %v1789 = vshrl.u32 %v1788, 7
    %v1790 = vsub.s32 %v1787, %v1789
    %v1791 = vrot.slane %v1784, %v1790
    %1793 = vst [vmem:[#allocation2 + $0x10] sm:$0x3] %v1791
    %v1794 = vrot.slane %v1769, 1
    %v1795 = vsel %vm1419, %v1771, %v1794
    %v1796 = vrot.slane %v1770, 1
    %v1797 = vsel %vm1419, %v1772, %v1796
    %v1798 = vpack.c.b16 %v1797, %v1795
    %v1800 = vunpack.c.l.s4 1966171168
    %v1801 = vunpack.c.0.s8 %v1800
    %v1802 = vlaneseq
    %v1803 = vshrl.u32 %v1802, 7
    %v1804 = vsub.s32 %v1801, %v1803
    %v1805 = vrot.slane %v1798, %v1804
    %v1807 = vunpack.c.l.s4 1966171168
    %v1808 = vunpack.c.0.s8 %v1807
    %v1809 = vlaneseq
    %v1810 = vshrl.u32 %v1809, 7
    %v1811 = vsub.s32 %v1808, %v1810
    %v1812 = vrot.slane %v1805, %v1811
    %1814 = vst [vmem:[#allocation2 + $0x12] sm:$0x3] %v1812
    %v1815 = vcombine.high %v1718, %v1718
    %v1817 = vunpack.c.l.s4 1966171168
    %v1818 = vunpack.c.0.s8 %v1817
    %v1819 = vlaneseq
    %v1820 = vshrl.u32 %v1819, 7
    %v1821 = vsub.s32 %v1818, %v1820
    %v1822 = vrot.slane %v1815, %v1821
    %v1823 = vcombine.high %v1733, %v1733
    %v1825 = vunpack.c.l.s4 1966171168
    %v1826 = vunpack.c.0.s8 %v1825
    %v1827 = vlaneseq
    %v1828 = vshrl.u32 %v1827, 7
    %v1829 = vsub.s32 %v1826, %v1828
    %v1830 = vrot.slane %v1823, %v1829
    %v1832 = vunpack.c.l.s4 1935823168
    %v1833 = vunpack.c.0.s8 %v1832
    %v1834 = vlaneseq
    %v1835 = vshrl.u32 %v1834, 7
    %v1836 = vsub.s32 %v1833, %v1835
    %v1837 = vrot.slane %v1822, %v1836
    %v1839 = vunpack.c.l.s4 1935823168
    %v1840 = vunpack.c.0.s8 %v1839
    %v1841 = vlaneseq
    %v1842 = vshrl.u32 %v1841, 7
    %v1843 = vsub.s32 %v1840, %v1842
    %v1844 = vrot.slane %v1837, %v1843
    %v1846 = vunpack.c.l.s4 1935823168
    %v1847 = vunpack.c.0.s8 %v1846
    %v1848 = vlaneseq
    %v1849 = vshrl.u32 %v1848, 7
    %v1850 = vsub.s32 %v1847, %v1849
    %v1851 = vrot.slane %v1830, %v1850
    %v1853 = vunpack.c.l.s4 1935823168
    %v1854 = vunpack.c.0.s8 %v1853
    %v1855 = vlaneseq
    %v1856 = vshrl.u32 %v1855, 7
    %v1857 = vsub.s32 %v1854, %v1856
    %v1858 = vrot.slane %v1851, %v1857
    %v1859 = vunpack.c.l.b16 %v1844
    %v1860 = vunpack.c.h.b16 %v1844
    %v1861 = vunpack.c.l.b16 %v1858
    %v1862 = vunpack.c.h.b16 %v1858
    %v1863 = vrot.slane %v1861, 7
    %v1864 = vsel %vm1419, %v1863, %v1859
    %v1865 = vrot.slane %v1862, 7
    %v1866 = vsel %vm1419, %v1865, %v1860
    %v1867 = vpack.c.b16 %v1866, %v1864
    %v1869 = vunpack.c.l.s4 1966171168
    %v1870 = vunpack.c.0.s8 %v1869
    %v1871 = vlaneseq
    %v1872 = vshrl.u32 %v1871, 7
    %v1873 = vsub.s32 %v1870, %v1872
    %v1874 = vrot.slane %v1867, %v1873
    %v1876 = vunpack.c.l.s4 1966171168
    %v1877 = vunpack.c.0.s8 %v1876
    %v1878 = vlaneseq
    %v1879 = vshrl.u32 %v1878, 7
    %v1880 = vsub.s32 %v1877, %v1879
    %v1881 = vrot.slane %v1874, %v1880
    %1883 = vst [vmem:[#allocation2 + $0x14] sm:$0x3] %v1881
    %v1884 = vrot.slane %v1859, 1
    %v1885 = vsel %vm1419, %v1861, %v1884
    %v1886 = vrot.slane %v1860, 1
    %v1887 = vsel %vm1419, %v1862, %v1886
    %v1888 = vpack.c.b16 %v1887, %v1885
    %v1890 = vunpack.c.l.s4 1966171168
    %v1891 = vunpack.c.0.s8 %v1890
    %v1892 = vlaneseq
    %v1893 = vshrl.u32 %v1892, 7
    %v1894 = vsub.s32 %v1891, %v1893
    %v1895 = vrot.slane %v1888, %v1894
    %v1897 = vunpack.c.l.s4 1966171168
    %v1898 = vunpack.c.0.s8 %v1897
    %v1899 = vlaneseq
    %v1900 = vshrl.u32 %v1899, 7
    %v1901 = vsub.s32 %v1898, %v1900
    %v1902 = vrot.slane %v1895, %v1901
    %1904 = vst [vmem:[#allocation2 + $0x16] sm:$0x3] %v1902
    %v1905 = vcombine.high %v1725, %v1725
    %v1906 = vcombine.high %v1740, %v1740
    %v1908 = vunpack.c.l.s4 1935823168
    %v1909 = vunpack.c.0.s8 %v1908
    %v1910 = vlaneseq
    %v1911 = vshrl.u32 %v1910, 7
    %v1912 = vsub.s32 %v1909, %v1911
    %v1913 = vrot.slane %v1905, %v1912
    %v1915 = vunpack.c.l.s4 1935823168
    %v1916 = vunpack.c.0.s8 %v1915
    %v1917 = vlaneseq
    %v1918 = vshrl.u32 %v1917, 7
    %v1919 = vsub.s32 %v1916, %v1918
    %v1920 = vrot.slane %v1913, %v1919
    %v1922 = vunpack.c.l.s4 1935823168
    %v1923 = vunpack.c.0.s8 %v1922
    %v1924 = vlaneseq
    %v1925 = vshrl.u32 %v1924, 7
    %v1926 = vsub.s32 %v1923, %v1925
    %v1927 = vrot.slane %v1906, %v1926
    %v1929 = vunpack.c.l.s4 1935823168
    %v1930 = vunpack.c.0.s8 %v1929
    %v1931 = vlaneseq
    %v1932 = vshrl.u32 %v1931, 7
    %v1933 = vsub.s32 %v1930, %v1932
    %v1934 = vrot.slane %v1927, %v1933
    %v1935 = vunpack.c.l.b16 %v1920
    %v1936 = vunpack.c.h.b16 %v1920
    %v1937 = vunpack.c.l.b16 %v1934
    %v1938 = vunpack.c.h.b16 %v1934
    %v1939 = vrot.slane %v1937, 7
    %v1940 = vsel %vm1419, %v1939, %v1935
    %v1941 = vrot.slane %v1938, 7
    %v1942 = vsel %vm1419, %v1941, %v1936
    %v1943 = vpack.c.b16 %v1942, %v1940
    %v1945 = vunpack.c.l.s4 1966171168
    %v1946 = vunpack.c.0.s8 %v1945
    %v1947 = vlaneseq
    %v1948 = vshrl.u32 %v1947, 7
    %v1949 = vsub.s32 %v1946, %v1948
    %v1950 = vrot.slane %v1943, %v1949
    %v1952 = vunpack.c.l.s4 1966171168
    %v1953 = vunpack.c.0.s8 %v1952
    %v1954 = vlaneseq
    %v1955 = vshrl.u32 %v1954, 7
    %v1956 = vsub.s32 %v1953, %v1955
    %v1957 = vrot.slane %v1950, %v1956
    %1959 = vst [vmem:[#allocation2 + $0x18] sm:$0x3] %v1957
    %v1960 = vrot.slane %v1935, 1
    %v1961 = vsel %vm1419, %v1937, %v1960
    %v1962 = vrot.slane %v1936, 1
    %v1963 = vsel %vm1419, %v1938, %v1962
    %v1964 = vpack.c.b16 %v1963, %v1961
    %v1966 = vunpack.c.l.s4 1966171168
    %v1967 = vunpack.c.0.s8 %v1966
    %v1968 = vlaneseq
    %v1969 = vshrl.u32 %v1968, 7
    %v1970 = vsub.s32 %v1967, %v1969
    %v1971 = vrot.slane %v1964, %v1970
    %v1973 = vunpack.c.l.s4 1966171168
    %v1974 = vunpack.c.0.s8 %v1973
    %v1975 = vlaneseq
    %v1976 = vshrl.u32 %v1975, 7
    %v1977 = vsub.s32 %v1974, %v1976
    %v1978 = vrot.slane %v1971, %v1977
    %1980 = vst [vmem:[#allocation2 + $0x1a] sm:$0x3] %v1978
    %v1981 = vcombine.high %v1822, %v1822
    %v1982 = vcombine.high %v1830, %v1830
    %v1984 = vunpack.c.l.s4 1935823168
    %v1985 = vunpack.c.0.s8 %v1984
    %v1986 = vlaneseq
    %v1987 = vshrl.u32 %v1986, 7
    %v1988 = vsub.s32 %v1985, %v1987
    %v1989 = vrot.slane %v1981, %v1988
    %v1991 = vunpack.c.l.s4 1935823168
    %v1992 = vunpack.c.0.s8 %v1991
    %v1993 = vlaneseq
    %v1994 = vshrl.u32 %v1993, 7
    %v1995 = vsub.s32 %v1992, %v1994
    %v1996 = vrot.slane %v1989, %v1995
    %v1998 = vunpack.c.l.s4 1935823168
    %v1999 = vunpack.c.0.s8 %v1998
    %v2000 = vlaneseq
    %v2001 = vshrl.u32 %v2000, 7
    %v2002 = vsub.s32 %v1999, %v2001
    %v2003 = vrot.slane %v1982, %v2002
    %v2005 = vunpack.c.l.s4 1935823168
    %v2006 = vunpack.c.0.s8 %v2005
    %v2007 = vlaneseq
    %v2008 = vshrl.u32 %v2007, 7
    %v2009 = vsub.s32 %v2006, %v2008
    %v2010 = vrot.slane %v2003, %v2009
    %v2011 = vunpack.c.l.b16 %v1996
    %v2012 = vunpack.c.h.b16 %v1996
    %v2013 = vunpack.c.l.b16 %v2010
    %v2014 = vunpack.c.h.b16 %v2010
    %v2015 = vrot.slane %v2013, 7
    %v2016 = vsel %vm1419, %v2015, %v2011
    %v2017 = vrot.slane %v2014, 7
    %v2018 = vsel %vm1419, %v2017, %v2012
    %v2019 = vpack.c.b16 %v2018, %v2016
    %v2021 = vunpack.c.l.s4 1966171168
    %v2022 = vunpack.c.0.s8 %v2021
    %v2023 = vlaneseq
    %v2024 = vshrl.u32 %v2023, 7
    %v2025 = vsub.s32 %v2022, %v2024
    %v2026 = vrot.slane %v2019, %v2025
    %v2028 = vunpack.c.l.s4 1966171168
    %v2029 = vunpack.c.0.s8 %v2028
    %v2030 = vlaneseq
    %v2031 = vshrl.u32 %v2030, 7
    %v2032 = vsub.s32 %v2029, %v2031
    %v2033 = vrot.slane %v2026, %v2032
    %2035 = vst [vmem:[#allocation2 + $0x1c] sm:$0x3] %v2033
    %v2036 = vrot.slane %v2011, 1
    %v2037 = vsel %vm1419, %v2013, %v2036
    %v2038 = vrot.slane %v2012, 1
    %v2039 = vsel %vm1419, %v2014, %v2038
    %v2040 = vpack.c.b16 %v2039, %v2037
    %v2042 = vunpack.c.l.s4 1966171168
    %v2043 = vunpack.c.0.s8 %v2042
    %v2044 = vlaneseq
    %v2045 = vshrl.u32 %v2044, 7
    %v2046 = vsub.s32 %v2043, %v2045
    %v2047 = vrot.slane %v2040, %v2046
    %v2049 = vunpack.c.l.s4 1966171168
    %v2050 = vunpack.c.0.s8 %v2049
    %v2051 = vlaneseq
    %v2052 = vshrl.u32 %v2051, 7
    %v2053 = vsub.s32 %v2050, %v2052
    %v2054 = vrot.slane %v2047, %v2053
    %2056 = vst [vmem:[#allocation2 + $0x1e] sm:$0x3] %v2054
    %v2057 = vld [vmem:[#allocation2] sm:$0xff]
    %v2058 = vld [vmem:[#allocation2 + $0x8] sm:$0xff]
    %v2059 = vld [vmem:[#allocation2 + $0x10] sm:$0xff]
    %v2060 = vld [vmem:[#allocation2 + $0x18] sm:$0xff]
    %v2061 = vld [vmem:[%s5] sm:$0xff]
    %v2062 = vld [vmem:[%s5 + $0x8] sm:$0xff]
    %v2063 = vld [vmem:[%s5 + $0x10] sm:$0xff]
    %v2064 = vld [vmem:[%s5 + $0x18] sm:$0xff]
    %v2065 = vld [vmem:[%s5 + $0x20] sm:$0xff]
    %v2066 = vld [vmem:[%s5 + $0x28] sm:$0xff]
    %v2067 = vld [vmem:[%s5 + $0x30] sm:$0xff]
    %v2068 = vld [vmem:[%s5 + $0x38] sm:$0xff]
    %v2069 = vld [vmem:[%s5 + $0x40] sm:$0xff]
    %v2070 = vld [vmem:[%s5 + $0x48] sm:$0xff]
    %v2071 = vld [vmem:[%s5 + $0x50] sm:$0xff]
    %v2072 = vld [vmem:[%s5 + $0x58] sm:$0xff]
    %v2073 = vld [vmem:[%s5 + $0x60] sm:$0xff]
    %v2074 = vld [vmem:[%s5 + $0x68] sm:$0xff]
    %v2075 = vld [vmem:[%s5 + $0x70] sm:$0xff]
    %v2076 = vld [vmem:[%s5 + $0x78] sm:$0xff]
    %v2077 = vld [vmem:[%s5 + $0x80] sm:$0xff]
    %v2078 = vld [vmem:[%s5 + $0x88] sm:$0xff]
    %v2079 = vld [vmem:[%s5 + $0x90] sm:$0xff]
    %v2080 = vld [vmem:[%s5 + $0x98] sm:$0xff]
    %v2081 = vld [vmem:[%s5 + $0xa0] sm:$0xff]
    %v2082 = vld [vmem:[%s5 + $0xa8] sm:$0xff]
    %v2083 = vld [vmem:[%s5 + $0xb0] sm:$0xff]
    %v2084 = vld [vmem:[%s5 + $0xb8] sm:$0xff]
    %v2085 = vld [vmem:[%s5 + $0xc0] sm:$0xff]
    %v2086 = vld [vmem:[%s5 + $0xc8] sm:$0xff]
    %v2087 = vld [vmem:[%s5 + $0xd0] sm:$0xff]
    %v2088 = vld [vmem:[%s5 + $0xd8] sm:$0xff]
    %v2089 = vld [vmem:[%s5 + $0xe0] sm:$0xff]
    %v2090 = vld [vmem:[%s5 + $0xe8] sm:$0xff]
    %v2091 = vld [vmem:[%s5 + $0xf0] sm:$0xff]
    %v2092 = vld [vmem:[%s5 + $0xf8] sm:$0xff]
    %v2093 = vld [vmem:[%s6] sm:$0x1]
    %v2095 = vlaneseq
    %v2096 = vshrl.u32 %v2095, 7
    %v2097 = vsub.s32 0, %v2096
    %v2098 = vrot.slane %v2093, %v2097
    %v2104 = vcombine.high %v2057, %v2057
    %v2106 = vunpack.c.l.s4 1966171168
    %v2107 = vunpack.c.0.s8 %v2106
    %v2108 = vlaneseq
    %v2109 = vshrl.u32 %v2108, 7
    %v2110 = vsub.s32 %v2107, %v2109
    %v2111 = vrot.slane %v2057, %v2110
    %v2113 = vunpack.c.l.s4 1966171168
    %v2114 = vunpack.c.0.s8 %v2113
    %v2115 = vlaneseq
    %v2116 = vshrl.u32 %v2115, 7
    %v2117 = vsub.s32 %v2114, %v2116
    %v2118 = vrot.slane %v2104, %v2117
    %v2119 = vcombine.high %v2111, %v2111
    %v2120 = vcombine.high %v2118, %v2118
    %v2122 = vunpack.c.l.s4 1966171168
    %v2123 = vunpack.c.0.s8 %v2122
    %v2124 = vlaneseq
    %v2125 = vshrl.u32 %v2124, 7
    %v2126 = vsub.s32 %v2123, %v2125
    %v2127 = vrot.slane %v2111, %v2126
    %v2129 = vunpack.c.l.s4 1966171168
    %v2130 = vunpack.c.0.s8 %v2129
    %v2131 = vlaneseq
    %v2132 = vshrl.u32 %v2131, 7
    %v2133 = vsub.s32 %v2130, %v2132
    %v2134 = vrot.slane %v2118, %v2133
    %v2136 = vunpack.c.l.s4 1966171168
    %v2137 = vunpack.c.0.s8 %v2136
    %v2138 = vlaneseq
    %v2139 = vshrl.u32 %v2138, 7
    %v2140 = vsub.s32 %v2137, %v2139
    %v2141 = vrot.slane %v2119, %v2140
    %v2143 = vunpack.c.l.s4 1966171168
    %v2144 = vunpack.c.0.s8 %v2143
    %v2145 = vlaneseq
    %v2146 = vshrl.u32 %v2145, 7
    %v2147 = vsub.s32 %v2144, %v2146
    %v2148 = vrot.slane %v2120, %v2147
    %v2149 = vcombine.high %v2127, %v2127
    %v2150 = vcombine.high %v2134, %v2134
    %v2151 = vcombine.high %v2141, %v2141
    %v2152 = vcombine.high %v2148, %v2148
    %v2153 = vcombine.high %v2058, %v2058
    %v2155 = vunpack.c.l.s4 1966171168
    %v2156 = vunpack.c.0.s8 %v2155
    %v2157 = vlaneseq
    %v2158 = vshrl.u32 %v2157, 7
    %v2159 = vsub.s32 %v2156, %v2158
    %v2160 = vrot.slane %v2058, %v2159
    %v2162 = vunpack.c.l.s4 1966171168
    %v2163 = vunpack.c.0.s8 %v2162
    %v2164 = vlaneseq
    %v2165 = vshrl.u32 %v2164, 7
    %v2166 = vsub.s32 %v2163, %v2165
    %v2167 = vrot.slane %v2153, %v2166
    %v2168 = vcombine.high %v2160, %v2160
    %v2169 = vcombine.high %v2167, %v2167
    %v2171 = vunpack.c.l.s4 1966171168
    %v2172 = vunpack.c.0.s8 %v2171
    %v2173 = vlaneseq
    %v2174 = vshrl.u32 %v2173, 7
    %v2175 = vsub.s32 %v2172, %v2174
    %v2176 = vrot.slane %v2160, %v2175
    %v2178 = vunpack.c.l.s4 1966171168
    %v2179 = vunpack.c.0.s8 %v2178
    %v2180 = vlaneseq
    %v2181 = vshrl.u32 %v2180, 7
    %v2182 = vsub.s32 %v2179, %v2181
    %v2183 = vrot.slane %v2167, %v2182
    %v2185 = vunpack.c.l.s4 1966171168
    %v2186 = vunpack.c.0.s8 %v2185
    %v2187 = vlaneseq
    %v2188 = vshrl.u32 %v2187, 7
    %v2189 = vsub.s32 %v2186, %v2188
    %v2190 = vrot.slane %v2168, %v2189
    %v2192 = vunpack.c.l.s4 1966171168
    %v2193 = vunpack.c.0.s8 %v2192
    %v2194 = vlaneseq
    %v2195 = vshrl.u32 %v2194, 7
    %v2196 = vsub.s32 %v2193, %v2195
    %v2197 = vrot.slane %v2169, %v2196
    %v2198 = vcombine.high %v2176, %v2176
    %v2199 = vcombine.high %v2183, %v2183
    %v2200 = vcombine.high %v2190, %v2190
    %v2201 = vcombine.high %v2197, %v2197
    %v2202 = vcombine.high %v2059, %v2059
    %v2204 = vunpack.c.l.s4 1966171168
    %v2205 = vunpack.c.0.s8 %v2204
    %v2206 = vlaneseq
    %v2207 = vshrl.u32 %v2206, 7
    %v2208 = vsub.s32 %v2205, %v2207
    %v2209 = vrot.slane %v2059, %v2208
    %v2211 = vunpack.c.l.s4 1966171168
    %v2212 = vunpack.c.0.s8 %v2211
    %v2213 = vlaneseq
    %v2214 = vshrl.u32 %v2213, 7
    %v2215 = vsub.s32 %v2212, %v2214
    %v2216 = vrot.slane %v2202, %v2215
    %v2217 = vcombine.high %v2209, %v2209
    %v2218 = vcombine.high %v2216, %v2216
    %v2220 = vunpack.c.l.s4 1966171168
    %v2221 = vunpack.c.0.s8 %v2220
    %v2222 = vlaneseq
    %v2223 = vshrl.u32 %v2222, 7
    %v2224 = vsub.s32 %v2221, %v2223
    %v2225 = vrot.slane %v2209, %v2224
    %v2227 = vunpack.c.l.s4 1966171168
    %v2228 = vunpack.c.0.s8 %v2227
    %v2229 = vlaneseq
    %v2230 = vshrl.u32 %v2229, 7
    %v2231 = vsub.s32 %v2228, %v2230
    %v2232 = vrot.slane %v2216, %v2231
    %v2234 = vunpack.c.l.s4 1966171168
    %v2235 = vunpack.c.0.s8 %v2234
    %v2236 = vlaneseq
    %v2237 = vshrl.u32 %v2236, 7
    %v2238 = vsub.s32 %v2235, %v2237
    %v2239 = vrot.slane %v2217, %v2238
    %v2241 = vunpack.c.l.s4 1966171168
    %v2242 = vunpack.c.0.s8 %v2241
    %v2243 = vlaneseq
    %v2244 = vshrl.u32 %v2243, 7
    %v2245 = vsub.s32 %v2242, %v2244
    %v2246 = vrot.slane %v2218, %v2245
    %v2247 = vcombine.high %v2225, %v2225
    %v2248 = vcombine.high %v2232, %v2232
    %v2249 = vcombine.high %v2239, %v2239
    %v2250 = vcombine.high %v2246, %v2246
    %v2251 = vcombine.high %v2060, %v2060
    %v2253 = vunpack.c.l.s4 1966171168
    %v2254 = vunpack.c.0.s8 %v2253
    %v2255 = vlaneseq
    %v2256 = vshrl.u32 %v2255, 7
    %v2257 = vsub.s32 %v2254, %v2256
    %v2258 = vrot.slane %v2060, %v2257
    %v2260 = vunpack.c.l.s4 1966171168
    %v2261 = vunpack.c.0.s8 %v2260
    %v2262 = vlaneseq
    %v2263 = vshrl.u32 %v2262, 7
    %v2264 = vsub.s32 %v2261, %v2263
    %v2265 = vrot.slane %v2251, %v2264
    %v2266 = vcombine.high %v2258, %v2258
    %v2267 = vcombine.high %v2265, %v2265
    %v2269 = vunpack.c.l.s4 1966171168
    %v2270 = vunpack.c.0.s8 %v2269
    %v2271 = vlaneseq
    %v2272 = vshrl.u32 %v2271, 7
    %v2273 = vsub.s32 %v2270, %v2272
    %v2274 = vrot.slane %v2258, %v2273
    %v2276 = vunpack.c.l.s4 1966171168
    %v2277 = vunpack.c.0.s8 %v2276
    %v2278 = vlaneseq
    %v2279 = vshrl.u32 %v2278, 7
    %v2280 = vsub.s32 %v2277, %v2279
    %v2281 = vrot.slane %v2265, %v2280
    %v2283 = vunpack.c.l.s4 1966171168
    %v2284 = vunpack.c.0.s8 %v2283
    %v2285 = vlaneseq
    %v2286 = vshrl.u32 %v2285, 7
    %v2287 = vsub.s32 %v2284, %v2286
    %v2288 = vrot.slane %v2266, %v2287
    %v2290 = vunpack.c.l.s4 1966171168
    %v2291 = vunpack.c.0.s8 %v2290
    %v2292 = vlaneseq
    %v2293 = vshrl.u32 %v2292, 7
    %v2294 = vsub.s32 %v2291, %v2293
    %v2295 = vrot.slane %v2267, %v2294
    %v2296 = vcombine.high %v2274, %v2274
    %v2297 = vcombine.high %v2281, %v2281
    %v2298 = vcombine.high %v2288, %v2288
    %v2299 = vcombine.high %v2295, %v2295
    %v2364 = vunpack.c.l.b16 %v2061
    %v2365 = vunpack.c.h.b16 %v2061
    %v2366 = vunpack.c.l.b16 %v2062
    %v2367 = vunpack.c.h.b16 %v2062
    %v2368 = vunpack.c.l.b16 %v2063
    %v2369 = vunpack.c.h.b16 %v2063
    %v2370 = vunpack.c.l.b16 %v2064
    %v2371 = vunpack.c.h.b16 %v2064
    %v2372 = vunpack.c.l.b16 %v2065
    %v2373 = vunpack.c.h.b16 %v2065
    %v2374 = vunpack.c.l.b16 %v2066
    %v2375 = vunpack.c.h.b16 %v2066
    %v2376 = vunpack.c.l.b16 %v2067
    %v2377 = vunpack.c.h.b16 %v2067
    %v2378 = vunpack.c.l.b16 %v2068
    %v2379 = vunpack.c.h.b16 %v2068
    %v2380 = vunpack.c.l.b16 %v2069
    %v2381 = vunpack.c.h.b16 %v2069
    %v2382 = vunpack.c.l.b16 %v2070
    %v2383 = vunpack.c.h.b16 %v2070
    %v2384 = vunpack.c.l.b16 %v2071
    %v2385 = vunpack.c.h.b16 %v2071
    %v2386 = vunpack.c.l.b16 %v2072
    %v2387 = vunpack.c.h.b16 %v2072
    %v2388 = vunpack.c.l.b16 %v2073
    %v2389 = vunpack.c.h.b16 %v2073
    %v2390 = vunpack.c.l.b16 %v2074
    %v2391 = vunpack.c.h.b16 %v2074
    %v2392 = vunpack.c.l.b16 %v2075
    %v2393 = vunpack.c.h.b16 %v2075
    %v2394 = vunpack.c.l.b16 %v2076
    %v2395 = vunpack.c.h.b16 %v2076
    %v2396 = vunpack.c.l.b16 %v2077
    %v2397 = vunpack.c.h.b16 %v2077
    %v2398 = vunpack.c.l.b16 %v2078
    %v2399 = vunpack.c.h.b16 %v2078
    %v2400 = vunpack.c.l.b16 %v2079
    %v2401 = vunpack.c.h.b16 %v2079
    %v2402 = vunpack.c.l.b16 %v2080
    %v2403 = vunpack.c.h.b16 %v2080
    %v2404 = vunpack.c.l.b16 %v2081
    %v2405 = vunpack.c.h.b16 %v2081
    %v2406 = vunpack.c.l.b16 %v2082
    %v2407 = vunpack.c.h.b16 %v2082
    %v2408 = vunpack.c.l.b16 %v2083
    %v2409 = vunpack.c.h.b16 %v2083
    %v2410 = vunpack.c.l.b16 %v2084
    %v2411 = vunpack.c.h.b16 %v2084
    %v2412 = vunpack.c.l.b16 %v2085
    %v2413 = vunpack.c.h.b16 %v2085
    %v2414 = vunpack.c.l.b16 %v2086
    %v2415 = vunpack.c.h.b16 %v2086
    %v2416 = vunpack.c.l.b16 %v2087
    %v2417 = vunpack.c.h.b16 %v2087
    %v2418 = vunpack.c.l.b16 %v2088
    %v2419 = vunpack.c.h.b16 %v2088
    %v2420 = vunpack.c.l.b16 %v2089
    %v2421 = vunpack.c.h.b16 %v2089
    %v2422 = vunpack.c.l.b16 %v2090
    %v2423 = vunpack.c.h.b16 %v2090
    %v2424 = vunpack.c.l.b16 %v2091
    %v2425 = vunpack.c.h.b16 %v2091
    %v2426 = vunpack.c.l.b16 %v2092
    %v2427 = vunpack.c.h.b16 %v2092
    %v2428 = vpack.c.b16 %v2396, %v2364
    %v2429 = vpack.c.b16 %v2397, %v2365
    %v2430 = vpack.c.b16 %v2398, %v2366
    %v2431 = vpack.c.b16 %v2399, %v2367
    %v2432 = vpack.c.b16 %v2400, %v2368
    %v2433 = vpack.c.b16 %v2401, %v2369
    %v2434 = vpack.c.b16 %v2402, %v2370
    %v2435 = vpack.c.b16 %v2403, %v2371
    %v2436 = vpack.c.b16 %v2404, %v2372
    %v2437 = vpack.c.b16 %v2405, %v2373
    %v2438 = vpack.c.b16 %v2406, %v2374
    %v2439 = vpack.c.b16 %v2407, %v2375
    %v2440 = vpack.c.b16 %v2408, %v2376
    %v2441 = vpack.c.b16 %v2409, %v2377
    %v2442 = vpack.c.b16 %v2410, %v2378
    %v2443 = vpack.c.b16 %v2411, %v2379
    %v2444 = vpack.c.b16 %v2412, %v2380
    %v2445 = vpack.c.b16 %v2413, %v2381
    %v2446 = vpack.c.b16 %v2414, %v2382
    %v2447 = vpack.c.b16 %v2415, %v2383
    %v2448 = vpack.c.b16 %v2416, %v2384
    %v2449 = vpack.c.b16 %v2417, %v2385
    %v2450 = vpack.c.b16 %v2418, %v2386
    %v2451 = vpack.c.b16 %v2419, %v2387
    %v2452 = vpack.c.b16 %v2420, %v2388
    %v2453 = vpack.c.b16 %v2421, %v2389
    %v2454 = vpack.c.b16 %v2422, %v2390
    %v2455 = vpack.c.b16 %v2423, %v2391
    %v2456 = vpack.c.b16 %v2424, %v2392
    %v2457 = vpack.c.b16 %v2425, %v2393
    %v2458 = vpack.c.b16 %v2426, %v2394
    %v2459 = vpack.c.b16 %v2427, %v2395
    %2492 = vmatprep.subr.bf16.mxu0 %v2429
    %2493 = vmatpush1.bf16.xpose.msra.mxu0 %v2428
    %2494 = vmatprep.subr.bf16.mxu0 0
    %2495 = vmatpush1.bf16.xpose.msra.mxu0 0
    %2496 = vmatprep.subr.bf16.mxu0 0
    %2497 = vmatpush1.bf16.xpose.msra.mxu0 0
    %2498 = vmatprep.subr.bf16.mxu0 0
    %2499 = vmatpush1.bf16.xpose.msra.mxu0 0
    %2500 = vmatprep.subr.bf16.mxu0 0
    %2501 = vmatpush1.bf16.xpose.msra.mxu0 0
    %2502 = vmatprep.subr.bf16.mxu0 0
    %2503 = vmatpush1.bf16.xpose.msra.mxu0 0
    %2504 = vmatprep.subr.bf16.mxu0 0
    %2505 = vmatpush1.bf16.xpose.msra.mxu0 0
    %2506 = vmatprep.subr.bf16.mxu0 0
    %2507 = vmatpush1.bf16.xpose.msra.mxu0 0
    %2508 = vmatprep.subr.bf16.mxu0 0
    %2509 = vmatpush1.bf16.xpose.msra.mxu0 0
    %2510 = vmatprep.subr.bf16.mxu0 0
    %2511 = vmatpush1.bf16.xpose.msra.mxu0 0
    %2512 = vmatprep.subr.bf16.mxu0 0
    %2513 = vmatpush1.bf16.xpose.msra.mxu0 0
    %2514 = vmatprep.subr.bf16.mxu0 0
    %2515 = vmatpush1.bf16.xpose.msra.mxu0 0
    %2516 = vmatprep.subr.bf16.mxu0 0
    %2517 = vmatpush1.bf16.xpose.msra.mxu0 0
    %2518 = vmatprep.subr.bf16.mxu0 0
    %2519 = vmatpush1.bf16.xpose.msra.mxu0 0
    %2520 = vmatprep.subr.bf16.mxu0 0
    %2521 = vmatpush1.bf16.xpose.msra.mxu0 0
    %2522 = vmatprep.subr.bf16.mxu0 0
    %2523 = vmatpush1.bf16.xpose.msra.mxu0 0
    %2524 = vmatprep.mubr.bf16.mxu0 %v2141
    %2525 = vmatmul.mubr.bf16.gmra.mrb[0].mxu0 %v2127
    %v2526 = vpop.f32.mrb[0].mxu0
    %v2527 = vadd.f32 %v2098, %v2526
    %v2528 = vpop.f32.mrb[0].mxu0
    %v2529 = vpop.f32.mrb[0].mxu0
    %v2530 = vpop.f32.mrb[0].mxu0
    %2531 = vdwg.mxu0
    %2532 = vmatprep.subr.bf16.mxu0 %v2431
    %2533 = vmatpush1.bf16.xpose.msra.mxu0 %v2430
    %2534 = vmatprep.subr.bf16.mxu0 0
    %2535 = vmatpush1.bf16.xpose.msra.mxu0 0
    %2536 = vmatprep.subr.bf16.mxu0 0
    %2537 = vmatpush1.bf16.xpose.msra.mxu0 0
    %2538 = vmatprep.subr.bf16.mxu0 0
    %2539 = vmatpush1.bf16.xpose.msra.mxu0 0
    %2540 = vmatprep.subr.bf16.mxu0 0
    %2541 = vmatpush1.bf16.xpose.msra.mxu0 0
    %2542 = vmatprep.subr.bf16.mxu0 0
    %2543 = vmatpush1.bf16.xpose.msra.mxu0 0
    %2544 = vmatprep.subr.bf16.mxu0 0
    %2545 = vmatpush1.bf16.xpose.msra.mxu0 0
    %2546 = vmatprep.subr.bf16.mxu0 0
    %2547 = vmatpush1.bf16.xpose.msra.mxu0 0
    %2548 = vmatprep.subr.bf16.mxu0 0
    %2549 = vmatpush1.bf16.xpose.msra.mxu0 0
    %2550 = vmatprep.subr.bf16.mxu0 0
    %2551 = vmatpush1.bf16.xpose.msra.mxu0 0
    %2552 = vmatprep.subr.bf16.mxu0 0
    %2553 = vmatpush1.bf16.xpose.msra.mxu0 0
    %2554 = vmatprep.subr.bf16.mxu0 0
    %2555 = vmatpush1.bf16.xpose.msra.mxu0 0
    %2556 = vmatprep.subr.bf16.mxu0 0
    %2557 = vmatpush1.bf16.xpose.msra.mxu0 0
    %2558 = vmatprep.subr.bf16.mxu0 0
    %2559 = vmatpush1.bf16.xpose.msra.mxu0 0
    %2560 = vmatprep.subr.bf16.mxu0 0
    %2561 = vmatpush1.bf16.xpose.msra.mxu0 0
    %2562 = vmatprep.subr.bf16.mxu0 0
    %2563 = vmatpush1.bf16.xpose.msra.mxu0 0
    %2564 = vmatprep.mubr.bf16.mxu0 %v2151
    %2565 = vmatmul.mubr.bf16.gmra.mrb[0].mxu0 %v2149
    %v2566 = vpop.f32.mrb[0].mxu0
    %v2567 = vadd.f32 %v2527, %v2566
    %v2568 = vpop.f32.mrb[0].mxu0
    %v2569 = vpop.f32.mrb[0].mxu0
    %v2570 = vpop.f32.mrb[0].mxu0
    %2571 = vdwg.mxu0
    %2572 = vmatprep.subr.bf16.mxu0 %v2433
    %2573 = vmatpush1.bf16.xpose.msra.mxu0 %v2432
    %2574 = vmatprep.subr.bf16.mxu0 0
    %2575 = vmatpush1.bf16.xpose.msra.mxu0 0
    %2576 = vmatprep.subr.bf16.mxu0 0
    %2577 = vmatpush1.bf16.xpose.msra.mxu0 0
    %2578 = vmatprep.subr.bf16.mxu0 0
    %2579 = vmatpush1.bf16.xpose.msra.mxu0 0
    %2580 = vmatprep.subr.bf16.mxu0 0
    %2581 = vmatpush1.bf16.xpose.msra.mxu0 0
    %2582 = vmatprep.subr.bf16.mxu0 0
    %2583 = vmatpush1.bf16.xpose.msra.mxu0 0
    %2584 = vmatprep.subr.bf16.mxu0 0
    %2585 = vmatpush1.bf16.xpose.msra.mxu0 0
    %2586 = vmatprep.subr.bf16.mxu0 0
    %2587 = vmatpush1.bf16.xpose.msra.mxu0 0
    %2588 = vmatprep.subr.bf16.mxu0 0
    %2589 = vmatpush1.bf16.xpose.msra.mxu0 0
    %2590 = vmatprep.subr.bf16.mxu0 0
    %2591 = vmatpush1.bf16.xpose.msra.mxu0 0
    %2592 = vmatprep.subr.bf16.mxu0 0
    %2593 = vmatpush1.bf16.xpose.msra.mxu0 0
    %2594 = vmatprep.subr.bf16.mxu0 0
    %2595 = vmatpush1.bf16.xpose.msra.mxu0 0
    %2596 = vmatprep.subr.bf16.mxu0 0
    %2597 = vmatpush1.bf16.xpose.msra.mxu0 0
    %2598 = vmatprep.subr.bf16.mxu0 0
    %2599 = vmatpush1.bf16.xpose.msra.mxu0 0
    %2600 = vmatprep.subr.bf16.mxu0 0
    %2601 = vmatpush1.bf16.xpose.msra.mxu0 0
    %2602 = vmatprep.subr.bf16.mxu0 0
    %2603 = vmatpush1.bf16.xpose.msra.mxu0 0
    %2604 = vmatprep.mubr.bf16.mxu0 %v2148
    %2605 = vmatmul.mubr.bf16.gmra.mrb[0].mxu0 %v2134
    %v2606 = vpop.f32.mrb[0].mxu0
    %v2607 = vadd.f32 %v2567, %v2606
    %v2608 = vpop.f32.mrb[0].mxu0
    %v2609 = vpop.f32.mrb[0].mxu0
    %v2610 = vpop.f32.mrb[0].mxu0
    %2611 = vdwg.mxu0
    %2612 = vmatprep.subr.bf16.mxu0 %v2435
    %2613 = vmatpush1.bf16.xpose.msra.mxu0 %v2434
    %2614 = vmatprep.subr.bf16.mxu0 0
    %2615 = vmatpush1.bf16.xpose.msra.mxu0 0
    %2616 = vmatprep.subr.bf16.mxu0 0
    %2617 = vmatpush1.bf16.xpose.msra.mxu0 0
    %2618 = vmatprep.subr.bf16.mxu0 0
    %2619 = vmatpush1.bf16.xpose.msra.mxu0 0
    %2620 = vmatprep.subr.bf16.mxu0 0
    %2621 = vmatpush1.bf16.xpose.msra.mxu0 0
    %2622 = vmatprep.subr.bf16.mxu0 0
    %2623 = vmatpush1.bf16.xpose.msra.mxu0 0
    %2624 = vmatprep.subr.bf16.mxu0 0
    %2625 = vmatpush1.bf16.xpose.msra.mxu0 0
    %2626 = vmatprep.subr.bf16.mxu0 0
    %2627 = vmatpush1.bf16.xpose.msra.mxu0 0
    %2628 = vmatprep.subr.bf16.mxu0 0
    %2629 = vmatpush1.bf16.xpose.msra.mxu0 0
    %2630 = vmatprep.subr.bf16.mxu0 0
    %2631 = vmatpush1.bf16.xpose.msra.mxu0 0
    %2632 = vmatprep.subr.bf16.mxu0 0
    %2633 = vmatpush1.bf16.xpose.msra.mxu0 0
    %2634 = vmatprep.subr.bf16.mxu0 0
    %2635 = vmatpush1.bf16.xpose.msra.mxu0 0
    %2636 = vmatprep.subr.bf16.mxu0 0
    %2637 = vmatpush1.bf16.xpose.msra.mxu0 0
    %2638 = vmatprep.subr.bf16.mxu0 0
    %2639 = vmatpush1.bf16.xpose.msra.mxu0 0
    %2640 = vmatprep.subr.bf16.mxu0 0
    %2641 = vmatpush1.bf16.xpose.msra.mxu0 0
    %2642 = vmatprep.subr.bf16.mxu0 0
    %2643 = vmatpush1.bf16.xpose.msra.mxu0 0
    %2644 = vmatprep.mubr.bf16.mxu0 %v2152
    %2645 = vmatmul.mubr.bf16.gmra.mrb[0].mxu0 %v2150
    %v2646 = vpop.f32.mrb[0].mxu0
    %v2647 = vadd.f32 %v2607, %v2646
    %v2648 = vpop.f32.mrb[0].mxu0
    %v2649 = vpop.f32.mrb[0].mxu0
    %v2650 = vpop.f32.mrb[0].mxu0
    %2651 = vdwg.mxu0
    %2652 = vmatprep.subr.bf16.mxu0 %v2437
    %2653 = vmatpush1.bf16.xpose.msra.mxu0 %v2436
    %2654 = vmatprep.subr.bf16.mxu0 0
    %2655 = vmatpush1.bf16.xpose.msra.mxu0 0
    %2656 = vmatprep.subr.bf16.mxu0 0
    %2657 = vmatpush1.bf16.xpose.msra.mxu0 0
    %2658 = vmatprep.subr.bf16.mxu0 0
    %2659 = vmatpush1.bf16.xpose.msra.mxu0 0
    %2660 = vmatprep.subr.bf16.mxu0 0
    %2661 = vmatpush1.bf16.xpose.msra.mxu0 0
    %2662 = vmatprep.subr.bf16.mxu0 0
    %2663 = vmatpush1.bf16.xpose.msra.mxu0 0
    %2664 = vmatprep.subr.bf16.mxu0 0
    %2665 = vmatpush1.bf16.xpose.msra.mxu0 0
    %2666 = vmatprep.subr.bf16.mxu0 0
    %2667 = vmatpush1.bf16.xpose.msra.mxu0 0
    %2668 = vmatprep.subr.bf16.mxu0 0
    %2669 = vmatpush1.bf16.xpose.msra.mxu0 0
    %2670 = vmatprep.subr.bf16.mxu0 0
    %2671 = vmatpush1.bf16.xpose.msra.mxu0 0
    %2672 = vmatprep.subr.bf16.mxu0 0
    %2673 = vmatpush1.bf16.xpose.msra.mxu0 0
    %2674 = vmatprep.subr.bf16.mxu0 0
    %2675 = vmatpush1.bf16.xpose.msra.mxu0 0
    %2676 = vmatprep.subr.bf16.mxu0 0
    %2677 = vmatpush1.bf16.xpose.msra.mxu0 0
    %2678 = vmatprep.subr.bf16.mxu0 0
    %2679 = vmatpush1.bf16.xpose.msra.mxu0 0
    %2680 = vmatprep.subr.bf16.mxu0 0
    %2681 = vmatpush1.bf16.xpose.msra.mxu0 0
    %2682 = vmatprep.subr.bf16.mxu0 0
    %2683 = vmatpush1.bf16.xpose.msra.mxu0 0
    %2684 = vmatprep.mubr.bf16.mxu0 %v2190
    %2685 = vmatmul.mubr.bf16.gmra.mrb[0].mxu0 %v2176
    %v2686 = vpop.f32.mrb[0].mxu0
    %v2687 = vadd.f32 %v2647, %v2686
    %v2688 = vpop.f32.mrb[0].mxu0
    %v2689 = vpop.f32.mrb[0].mxu0
    %v2690 = vpop.f32.mrb[0].mxu0
    %2691 = vdwg.mxu0
    %2692 = vmatprep.subr.bf16.mxu0 %v2439
    %2693 = vmatpush1.bf16.xpose.msra.mxu0 %v2438
    %2694 = vmatprep.subr.bf16.mxu0 0
    %2695 = vmatpush1.bf16.xpose.msra.mxu0 0
    %2696 = vmatprep.subr.bf16.mxu0 0
    %2697 = vmatpush1.bf16.xpose.msra.mxu0 0
    %2698 = vmatprep.subr.bf16.mxu0 0
    %2699 = vmatpush1.bf16.xpose.msra.mxu0 0
    %2700 = vmatprep.subr.bf16.mxu0 0
    %2701 = vmatpush1.bf16.xpose.msra.mxu0 0
    %2702 = vmatprep.subr.bf16.mxu0 0
    %2703 = vmatpush1.bf16.xpose.msra.mxu0 0
    %2704 = vmatprep.subr.bf16.mxu0 0
    %2705 = vmatpush1.bf16.xpose.msra.mxu0 0
    %2706 = vmatprep.subr.bf16.mxu0 0
    %2707 = vmatpush1.bf16.xpose.msra.mxu0 0
    %2708 = vmatprep.subr.bf16.mxu0 0
    %2709 = vmatpush1.bf16.xpose.msra.mxu0 0
    %2710 = vmatprep.subr.bf16.mxu0 0
    %2711 = vmatpush1.bf16.xpose.msra.mxu0 0
    %2712 = vmatprep.subr.bf16.mxu0 0
    %2713 = vmatpush1.bf16.xpose.msra.mxu0 0
    %2714 = vmatprep.subr.bf16.mxu0 0
    %2715 = vmatpush1.bf16.xpose.msra.mxu0 0
    %2716 = vmatprep.subr.bf16.mxu0 0
    %2717 = vmatpush1.bf16.xpose.msra.mxu0 0
    %2718 = vmatprep.subr.bf16.mxu0 0
    %2719 = vmatpush1.bf16.xpose.msra.mxu0 0
    %2720 = vmatprep.subr.bf16.mxu0 0
    %2721 = vmatpush1.bf16.xpose.msra.mxu0 0
    %2722 = vmatprep.subr.bf16.mxu0 0
    %2723 = vmatpush1.bf16.xpose.msra.mxu0 0
    %2724 = vmatprep.mubr.bf16.mxu0 %v2200
    %2725 = vmatmul.mubr.bf16.gmra.mrb[0].mxu0 %v2198
    %v2726 = vpop.f32.mrb[0].mxu0
    %v2727 = vadd.f32 %v2687, %v2726
    %v2728 = vpop.f32.mrb[0].mxu0
    %v2729 = vpop.f32.mrb[0].mxu0
    %v2730 = vpop.f32.mrb[0].mxu0
    %2731 = vdwg.mxu0
    %2732 = vmatprep.subr.bf16.mxu0 %v2441
    %2733 = vmatpush1.bf16.xpose.msra.mxu0 %v2440
    %2734 = vmatprep.subr.bf16.mxu0 0
    %2735 = vmatpush1.bf16.xpose.msra.mxu0 0
    %2736 = vmatprep.subr.bf16.mxu0 0
    %2737 = vmatpush1.bf16.xpose.msra.mxu0 0
    %2738 = vmatprep.subr.bf16.mxu0 0
    %2739 = vmatpush1.bf16.xpose.msra.mxu0 0
    %2740 = vmatprep.subr.bf16.mxu0 0
    %2741 = vmatpush1.bf16.xpose.msra.mxu0 0
    %2742 = vmatprep.subr.bf16.mxu0 0
    %2743 = vmatpush1.bf16.xpose.msra.mxu0 0
    %2744 = vmatprep.subr.bf16.mxu0 0
    %2745 = vmatpush1.bf16.xpose.msra.mxu0 0
    %2746 = vmatprep.subr.bf16.mxu0 0
    %2747 = vmatpush1.bf16.xpose.msra.mxu0 0
    %2748 = vmatprep.subr.bf16.mxu0 0
    %2749 = vmatpush1.bf16.xpose.msra.mxu0 0
    %2750 = vmatprep.subr.bf16.mxu0 0
    %2751 = vmatpush1.bf16.xpose.msra.mxu0 0
    %2752 = vmatprep.subr.bf16.mxu0 0
    %2753 = vmatpush1.bf16.xpose.msra.mxu0 0
    %2754 = vmatprep.subr.bf16.mxu0 0
    %2755 = vmatpush1.bf16.xpose.msra.mxu0 0
    %2756 = vmatprep.subr.bf16.mxu0 0
    %2757 = vmatpush1.bf16.xpose.msra.mxu0 0
    %2758 = vmatprep.subr.bf16.mxu0 0
    %2759 = vmatpush1.bf16.xpose.msra.mxu0 0
    %2760 = vmatprep.subr.bf16.mxu0 0
    %2761 = vmatpush1.bf16.xpose.msra.mxu0 0
    %2762 = vmatprep.subr.bf16.mxu0 0
    %2763 = vmatpush1.bf16.xpose.msra.mxu0 0
    %2764 = vmatprep.mubr.bf16.mxu0 %v2197
    %2765 = vmatmul.mubr.bf16.gmra.mrb[0].mxu0 %v2183
    %v2766 = vpop.f32.mrb[0].mxu0
    %v2767 = vadd.f32 %v2727, %v2766
    %v2768 = vpop.f32.mrb[0].mxu0
    %v2769 = vpop.f32.mrb[0].mxu0
    %v2770 = vpop.f32.mrb[0].mxu0
    %2771 = vdwg.mxu0
    %2772 = vmatprep.subr.bf16.mxu0 %v2443
    %2773 = vmatpush1.bf16.xpose.msra.mxu0 %v2442
    %2774 = vmatprep.subr.bf16.mxu0 0
    %2775 = vmatpush1.bf16.xpose.msra.mxu0 0
    %2776 = vmatprep.subr.bf16.mxu0 0
    %2777 = vmatpush1.bf16.xpose.msra.mxu0 0
    %2778 = vmatprep.subr.bf16.mxu0 0
    %2779 = vmatpush1.bf16.xpose.msra.mxu0 0
    %2780 = vmatprep.subr.bf16.mxu0 0
    %2781 = vmatpush1.bf16.xpose.msra.mxu0 0
    %2782 = vmatprep.subr.bf16.mxu0 0
    %2783 = vmatpush1.bf16.xpose.msra.mxu0 0
    %2784 = vmatprep.subr.bf16.mxu0 0
    %2785 = vmatpush1.bf16.xpose.msra.mxu0 0
    %2786 = vmatprep.subr.bf16.mxu0 0
    %2787 = vmatpush1.bf16.xpose.msra.mxu0 0
    %2788 = vmatprep.subr.bf16.mxu0 0
    %2789 = vmatpush1.bf16.xpose.msra.mxu0 0
    %2790 = vmatprep.subr.bf16.mxu0 0
    %2791 = vmatpush1.bf16.xpose.msra.mxu0 0
    %2792 = vmatprep.subr.bf16.mxu0 0
    %2793 = vmatpush1.bf16.xpose.msra.mxu0 0
    %2794 = vmatprep.subr.bf16.mxu0 0
    %2795 = vmatpush1.bf16.xpose.msra.mxu0 0
    %2796 = vmatprep.subr.bf16.mxu0 0
    %2797 = vmatpush1.bf16.xpose.msra.mxu0 0
    %2798 = vmatprep.subr.bf16.mxu0 0
    %2799 = vmatpush1.bf16.xpose.msra.mxu0 0
    %2800 = vmatprep.subr.bf16.mxu0 0
    %2801 = vmatpush1.bf16.xpose.msra.mxu0 0
    %2802 = vmatprep.subr.bf16.mxu0 0
    %2803 = vmatpush1.bf16.xpose.msra.mxu0 0
    %2804 = vmatprep.mubr.bf16.mxu0 %v2201
    %2805 = vmatmul.mubr.bf16.gmra.mrb[0].mxu0 %v2199
    %v2806 = vpop.f32.mrb[0].mxu0
    %v2807 = vadd.f32 %v2767, %v2806
    %v2808 = vpop.f32.mrb[0].mxu0
    %v2809 = vpop.f32.mrb[0].mxu0
    %v2810 = vpop.f32.mrb[0].mxu0
    %2811 = vdwg.mxu0
    %2812 = vmatprep.subr.bf16.mxu0 %v2445
    %2813 = vmatpush1.bf16.xpose.msra.mxu0 %v2444
    %2814 = vmatprep.subr.bf16.mxu0 0
    %2815 = vmatpush1.bf16.xpose.msra.mxu0 0
    %2816 = vmatprep.subr.bf16.mxu0 0
    %2817 = vmatpush1.bf16.xpose.msra.mxu0 0
    %2818 = vmatprep.subr.bf16.mxu0 0
    %2819 = vmatpush1.bf16.xpose.msra.mxu0 0
    %2820 = vmatprep.subr.bf16.mxu0 0
    %2821 = vmatpush1.bf16.xpose.msra.mxu0 0
    %2822 = vmatprep.subr.bf16.mxu0 0
    %2823 = vmatpush1.bf16.xpose.msra.mxu0 0
    %2824 = vmatprep.subr.bf16.mxu0 0
    %2825 = vmatpush1.bf16.xpose.msra.mxu0 0
    %2826 = vmatprep.subr.bf16.mxu0 0
    %2827 = vmatpush1.bf16.xpose.msra.mxu0 0
    %2828 = vmatprep.subr.bf16.mxu0 0
    %2829 = vmatpush1.bf16.xpose.msra.mxu0 0
    %2830 = vmatprep.subr.bf16.mxu0 0
    %2831 = vmatpush1.bf16.xpose.msra.mxu0 0
    %2832 = vmatprep.subr.bf16.mxu0 0
    %2833 = vmatpush1.bf16.xpose.msra.mxu0 0
    %2834 = vmatprep.subr.bf16.mxu0 0
    %2835 = vmatpush1.bf16.xpose.msra.mxu0 0
    %2836 = vmatprep.subr.bf16.mxu0 0
    %2837 = vmatpush1.bf16.xpose.msra.mxu0 0
    %2838 = vmatprep.subr.bf16.mxu0 0
    %2839 = vmatpush1.bf16.xpose.msra.mxu0 0
    %2840 = vmatprep.subr.bf16.mxu0 0
    %2841 = vmatpush1.bf16.xpose.msra.mxu0 0
    %2842 = vmatprep.subr.bf16.mxu0 0
    %2843 = vmatpush1.bf16.xpose.msra.mxu0 0
    %2844 = vmatprep.mubr.bf16.mxu0 %v2239
    %2845 = vmatmul.mubr.bf16.gmra.mrb[0].mxu0 %v2225
    %v2846 = vpop.f32.mrb[0].mxu0
    %v2847 = vadd.f32 %v2807, %v2846
    %v2848 = vpop.f32.mrb[0].mxu0
    %v2849 = vpop.f32.mrb[0].mxu0
    %v2850 = vpop.f32.mrb[0].mxu0
    %2851 = vdwg.mxu0
    %2852 = vmatprep.subr.bf16.mxu0 %v2447
    %2853 = vmatpush1.bf16.xpose.msra.mxu0 %v2446
    %2854 = vmatprep.subr.bf16.mxu0 0
    %2855 = vmatpush1.bf16.xpose.msra.mxu0 0
    %2856 = vmatprep.subr.bf16.mxu0 0
    %2857 = vmatpush1.bf16.xpose.msra.mxu0 0
    %2858 = vmatprep.subr.bf16.mxu0 0
    %2859 = vmatpush1.bf16.xpose.msra.mxu0 0
    %2860 = vmatprep.subr.bf16.mxu0 0
    %2861 = vmatpush1.bf16.xpose.msra.mxu0 0
    %2862 = vmatprep.subr.bf16.mxu0 0
    %2863 = vmatpush1.bf16.xpose.msra.mxu0 0
    %2864 = vmatprep.subr.bf16.mxu0 0
    %2865 = vmatpush1.bf16.xpose.msra.mxu0 0
    %2866 = vmatprep.subr.bf16.mxu0 0
    %2867 = vmatpush1.bf16.xpose.msra.mxu0 0
    %2868 = vmatprep.subr.bf16.mxu0 0
    %2869 = vmatpush1.bf16.xpose.msra.mxu0 0
    %2870 = vmatprep.subr.bf16.mxu0 0
    %2871 = vmatpush1.bf16.xpose.msra.mxu0 0
    %2872 = vmatprep.subr.bf16.mxu0 0
    %2873 = vmatpush1.bf16.xpose.msra.mxu0 0
    %2874 = vmatprep.subr.bf16.mxu0 0
    %2875 = vmatpush1.bf16.xpose.msra.mxu0 0
    %2876 = vmatprep.subr.bf16.mxu0 0
    %2877 = vmatpush1.bf16.xpose.msra.mxu0 0
    %2878 = vmatprep.subr.bf16.mxu0 0
    %2879 = vmatpush1.bf16.xpose.msra.mxu0 0
    %2880 = vmatprep.subr.bf16.mxu0 0
    %2881 = vmatpush1.bf16.xpose.msra.mxu0 0
    %2882 = vmatprep.subr.bf16.mxu0 0
    %2883 = vmatpush1.bf16.xpose.msra.mxu0 0
    %2884 = vmatprep.mubr.bf16.mxu0 %v2249
    %2885 = vmatmul.mubr.bf16.gmra.mrb[0].mxu0 %v2247
    %v2886 = vpop.f32.mrb[0].mxu0
    %v2887 = vadd.f32 %v2847, %v2886
    %v2888 = vpop.f32.mrb[0].mxu0
    %v2889 = vpop.f32.mrb[0].mxu0
    %v2890 = vpop.f32.mrb[0].mxu0
    %2891 = vdwg.mxu0
    %2892 = vmatprep.subr.bf16.mxu0 %v2449
    %2893 = vmatpush1.bf16.xpose.msra.mxu0 %v2448
    %2894 = vmatprep.subr.bf16.mxu0 0
    %2895 = vmatpush1.bf16.xpose.msra.mxu0 0
    %2896 = vmatprep.subr.bf16.mxu0 0
    %2897 = vmatpush1.bf16.xpose.msra.mxu0 0
    %2898 = vmatprep.subr.bf16.mxu0 0
    %2899 = vmatpush1.bf16.xpose.msra.mxu0 0
    %2900 = vmatprep.subr.bf16.mxu0 0
    %2901 = vmatpush1.bf16.xpose.msra.mxu0 0
    %2902 = vmatprep.subr.bf16.mxu0 0
    %2903 = vmatpush1.bf16.xpose.msra.mxu0 0
    %2904 = vmatprep.subr.bf16.mxu0 0
    %2905 = vmatpush1.bf16.xpose.msra.mxu0 0
    %2906 = vmatprep.subr.bf16.mxu0 0
    %2907 = vmatpush1.bf16.xpose.msra.mxu0 0
    %2908 = vmatprep.subr.bf16.mxu0 0
    %2909 = vmatpush1.bf16.xpose.msra.mxu0 0
    %2910 = vmatprep.subr.bf16.mxu0 0
    %2911 = vmatpush1.bf16.xpose.msra.mxu0 0
    %2912 = vmatprep.subr.bf16.mxu0 0
    %2913 = vmatpush1.bf16.xpose.msra.mxu0 0
    %2914 = vmatprep.subr.bf16.mxu0 0
    %2915 = vmatpush1.bf16.xpose.msra.mxu0 0
    %2916 = vmatprep.subr.bf16.mxu0 0
    %2917 = vmatpush1.bf16.xpose.msra.mxu0 0
    %2918 = vmatprep.subr.bf16.mxu0 0
    %2919 = vmatpush1.bf16.xpose.msra.mxu0 0
    %2920 = vmatprep.subr.bf16.mxu0 0
    %2921 = vmatpush1.bf16.xpose.msra.mxu0 0
    %2922 = vmatprep.subr.bf16.mxu0 0
    %2923 = vmatpush1.bf16.xpose.msra.mxu0 0
    %2924 = vmatprep.mubr.bf16.mxu0 %v2246
    %2925 = vmatmul.mubr.bf16.gmra.mrb[0].mxu0 %v2232
    %v2926 = vpop.f32.mrb[0].mxu0
    %v2927 = vadd.f32 %v2887, %v2926
    %v2928 = vpop.f32.mrb[0].mxu0
    %v2929 = vpop.f32.mrb[0].mxu0
    %v2930 = vpop.f32.mrb[0].mxu0
    %2931 = vdwg.mxu0
    %2932 = vmatprep.subr.bf16.mxu0 %v2451
    %2933 = vmatpush1.bf16.xpose.msra.mxu0 %v2450
    %2934 = vmatprep.subr.bf16.mxu0 0
    %2935 = vmatpush1.bf16.xpose.msra.mxu0 0
    %2936 = vmatprep.subr.bf16.mxu0 0
    %2937 = vmatpush1.bf16.xpose.msra.mxu0 0
    %2938 = vmatprep.subr.bf16.mxu0 0
    %2939 = vmatpush1.bf16.xpose.msra.mxu0 0
    %2940 = vmatprep.subr.bf16.mxu0 0
    %2941 = vmatpush1.bf16.xpose.msra.mxu0 0
    %2942 = vmatprep.subr.bf16.mxu0 0
    %2943 = vmatpush1.bf16.xpose.msra.mxu0 0
    %2944 = vmatprep.subr.bf16.mxu0 0
    %2945 = vmatpush1.bf16.xpose.msra.mxu0 0
    %2946 = vmatprep.subr.bf16.mxu0 0
    %2947 = vmatpush1.bf16.xpose.msra.mxu0 0
    %2948 = vmatprep.subr.bf16.mxu0 0
    %2949 = vmatpush1.bf16.xpose.msra.mxu0 0
    %2950 = vmatprep.subr.bf16.mxu0 0
    %2951 = vmatpush1.bf16.xpose.msra.mxu0 0
    %2952 = vmatprep.subr.bf16.mxu0 0
    %2953 = vmatpush1.bf16.xpose.msra.mxu0 0
    %2954 = vmatprep.subr.bf16.mxu0 0
    %2955 = vmatpush1.bf16.xpose.msra.mxu0 0
    %2956 = vmatprep.subr.bf16.mxu0 0
    %2957 = vmatpush1.bf16.xpose.msra.mxu0 0
    %2958 = vmatprep.subr.bf16.mxu0 0
    %2959 = vmatpush1.bf16.xpose.msra.mxu0 0
    %2960 = vmatprep.subr.bf16.mxu0 0
    %2961 = vmatpush1.bf16.xpose.msra.mxu0 0
    %2962 = vmatprep.subr.bf16.mxu0 0
    %2963 = vmatpush1.bf16.xpose.msra.mxu0 0
    %2964 = vmatprep.mubr.bf16.mxu0 %v2250
    %2965 = vmatmul.mubr.bf16.gmra.mrb[0].mxu0 %v2248
    %v2966 = vpop.f32.mrb[0].mxu0
    %v2967 = vadd.f32 %v2927, %v2966
    %v2968 = vpop.f32.mrb[0].mxu0
    %v2969 = vpop.f32.mrb[0].mxu0
    %v2970 = vpop.f32.mrb[0].mxu0
    %2971 = vdwg.mxu0
    %2972 = vmatprep.subr.bf16.mxu0 %v2453
    %2973 = vmatpush1.bf16.xpose.msra.mxu0 %v2452
    %2974 = vmatprep.subr.bf16.mxu0 0
    %2975 = vmatpush1.bf16.xpose.msra.mxu0 0
    %2976 = vmatprep.subr.bf16.mxu0 0
    %2977 = vmatpush1.bf16.xpose.msra.mxu0 0
    %2978 = vmatprep.subr.bf16.mxu0 0
    %2979 = vmatpush1.bf16.xpose.msra.mxu0 0
    %2980 = vmatprep.subr.bf16.mxu0 0
    %2981 = vmatpush1.bf16.xpose.msra.mxu0 0
    %2982 = vmatprep.subr.bf16.mxu0 0
    %2983 = vmatpush1.bf16.xpose.msra.mxu0 0
    %2984 = vmatprep.subr.bf16.mxu0 0
    %2985 = vmatpush1.bf16.xpose.msra.mxu0 0
    %2986 = vmatprep.subr.bf16.mxu0 0
    %2987 = vmatpush1.bf16.xpose.msra.mxu0 0
    %2988 = vmatprep.subr.bf16.mxu0 0
    %2989 = vmatpush1.bf16.xpose.msra.mxu0 0
    %2990 = vmatprep.subr.bf16.mxu0 0
    %2991 = vmatpush1.bf16.xpose.msra.mxu0 0
    %2992 = vmatprep.subr.bf16.mxu0 0
    %2993 = vmatpush1.bf16.xpose.msra.mxu0 0
    %2994 = vmatprep.subr.bf16.mxu0 0
    %2995 = vmatpush1.bf16.xpose.msra.mxu0 0
    %2996 = vmatprep.subr.bf16.mxu0 0
    %2997 = vmatpush1.bf16.xpose.msra.mxu0 0
    %2998 = vmatprep.subr.bf16.mxu0 0
    %2999 = vmatpush1.bf16.xpose.msra.mxu0 0
    %3000 = vmatprep.subr.bf16.mxu0 0
    %3001 = vmatpush1.bf16.xpose.msra.mxu0 0
    %3002 = vmatprep.subr.bf16.mxu0 0
    %3003 = vmatpush1.bf16.xpose.msra.mxu0 0
    %3004 = vmatprep.mubr.bf16.mxu0 %v2288
    %3005 = vmatmul.mubr.bf16.gmra.mrb[0].mxu0 %v2274
    %v3006 = vpop.f32.mrb[0].mxu0
    %v3007 = vadd.f32 %v2967, %v3006
    %v3008 = vpop.f32.mrb[0].mxu0
    %v3009 = vpop.f32.mrb[0].mxu0
    %v3010 = vpop.f32.mrb[0].mxu0
    %3011 = vdwg.mxu0
    %3012 = vmatprep.subr.bf16.mxu0 %v2455
    %3013 = vmatpush1.bf16.xpose.msra.mxu0 %v2454
    %3014 = vmatprep.subr.bf16.mxu0 0
    %3015 = vmatpush1.bf16.xpose.msra.mxu0 0
    %3016 = vmatprep.subr.bf16.mxu0 0
    %3017 = vmatpush1.bf16.xpose.msra.mxu0 0
    %3018 = vmatprep.subr.bf16.mxu0 0
    %3019 = vmatpush1.bf16.xpose.msra.mxu0 0
    %3020 = vmatprep.subr.bf16.mxu0 0
    %3021 = vmatpush1.bf16.xpose.msra.mxu0 0
    %3022 = vmatprep.subr.bf16.mxu0 0
    %3023 = vmatpush1.bf16.xpose.msra.mxu0 0
    %3024 = vmatprep.subr.bf16.mxu0 0
    %3025 = vmatpush1.bf16.xpose.msra.mxu0 0
    %3026 = vmatprep.subr.bf16.mxu0 0
    %3027 = vmatpush1.bf16.xpose.msra.mxu0 0
    %3028 = vmatprep.subr.bf16.mxu0 0
    %3029 = vmatpush1.bf16.xpose.msra.mxu0 0
    %3030 = vmatprep.subr.bf16.mxu0 0
    %3031 = vmatpush1.bf16.xpose.msra.mxu0 0
    %3032 = vmatprep.subr.bf16.mxu0 0
    %3033 = vmatpush1.bf16.xpose.msra.mxu0 0
    %3034 = vmatprep.subr.bf16.mxu0 0
    %3035 = vmatpush1.bf16.xpose.msra.mxu0 0
    %3036 = vmatprep.subr.bf16.mxu0 0
    %3037 = vmatpush1.bf16.xpose.msra.mxu0 0
    %3038 = vmatprep.subr.bf16.mxu0 0
    %3039 = vmatpush1.bf16.xpose.msra.mxu0 0
    %3040 = vmatprep.subr.bf16.mxu0 0
    %3041 = vmatpush1.bf16.xpose.msra.mxu0 0
    %3042 = vmatprep.subr.bf16.mxu0 0
    %3043 = vmatpush1.bf16.xpose.msra.mxu0 0
    %3044 = vmatprep.mubr.bf16.mxu0 %v2298
    %3045 = vmatmul.mubr.bf16.gmra.mrb[0].mxu0 %v2296
    %v3046 = vpop.f32.mrb[0].mxu0
    %v3047 = vadd.f32 %v3007, %v3046
    %v3048 = vpop.f32.mrb[0].mxu0
    %v3049 = vpop.f32.mrb[0].mxu0
    %v3050 = vpop.f32.mrb[0].mxu0
    %3051 = vdwg.mxu0
    %3052 = vmatprep.subr.bf16.mxu0 %v2457
    %3053 = vmatpush1.bf16.xpose.msra.mxu0 %v2456
    %3054 = vmatprep.subr.bf16.mxu0 0
    %3055 = vmatpush1.bf16.xpose.msra.mxu0 0
    %3056 = vmatprep.subr.bf16.mxu0 0
    %3057 = vmatpush1.bf16.xpose.msra.mxu0 0
    %3058 = vmatprep.subr.bf16.mxu0 0
    %3059 = vmatpush1.bf16.xpose.msra.mxu0 0
    %3060 = vmatprep.subr.bf16.mxu0 0
    %3061 = vmatpush1.bf16.xpose.msra.mxu0 0
    %3062 = vmatprep.subr.bf16.mxu0 0
    %3063 = vmatpush1.bf16.xpose.msra.mxu0 0
    %3064 = vmatprep.subr.bf16.mxu0 0
    %3065 = vmatpush1.bf16.xpose.msra.mxu0 0
    %3066 = vmatprep.subr.bf16.mxu0 0
    %3067 = vmatpush1.bf16.xpose.msra.mxu0 0
    %3068 = vmatprep.subr.bf16.mxu0 0
    %3069 = vmatpush1.bf16.xpose.msra.mxu0 0
    %3070 = vmatprep.subr.bf16.mxu0 0
    %3071 = vmatpush1.bf16.xpose.msra.mxu0 0
    %3072 = vmatprep.subr.bf16.mxu0 0
    %3073 = vmatpush1.bf16.xpose.msra.mxu0 0
    %3074 = vmatprep.subr.bf16.mxu0 0
    %3075 = vmatpush1.bf16.xpose.msra.mxu0 0
    %3076 = vmatprep.subr.bf16.mxu0 0
    %3077 = vmatpush1.bf16.xpose.msra.mxu0 0
    %3078 = vmatprep.subr.bf16.mxu0 0
    %3079 = vmatpush1.bf16.xpose.msra.mxu0 0
    %3080 = vmatprep.subr.bf16.mxu0 0
    %3081 = vmatpush1.bf16.xpose.msra.mxu0 0
    %3082 = vmatprep.subr.bf16.mxu0 0
    %3083 = vmatpush1.bf16.xpose.msra.mxu0 0
    %3084 = vmatprep.mubr.bf16.mxu0 %v2295
    %3085 = vmatmul.mubr.bf16.gmra.mrb[0].mxu0 %v2281
    %v3086 = vpop.f32.mrb[0].mxu0
    %v3087 = vadd.f32 %v3047, %v3086
    %v3088 = vpop.f32.mrb[0].mxu0
    %v3089 = vpop.f32.mrb[0].mxu0
    %v3090 = vpop.f32.mrb[0].mxu0
    %3091 = vdwg.mxu0
    %3092 = vmatprep.subr.bf16.mxu0 %v2459
    %3093 = vmatpush1.bf16.xpose.msra.mxu0 %v2458
    %3094 = vmatprep.subr.bf16.mxu0 0
    %3095 = vmatpush1.bf16.xpose.msra.mxu0 0
    %3096 = vmatprep.subr.bf16.mxu0 0
    %3097 = vmatpush1.bf16.xpose.msra.mxu0 0
    %3098 = vmatprep.subr.bf16.mxu0 0
    %3099 = vmatpush1.bf16.xpose.msra.mxu0 0
    %3100 = vmatprep.subr.bf16.mxu0 0
    %3101 = vmatpush1.bf16.xpose.msra.mxu0 0
    %3102 = vmatprep.subr.bf16.mxu0 0
    %3103 = vmatpush1.bf16.xpose.msra.mxu0 0
    %3104 = vmatprep.subr.bf16.mxu0 0
    %3105 = vmatpush1.bf16.xpose.msra.mxu0 0
    %3106 = vmatprep.subr.bf16.mxu0 0
    %3107 = vmatpush1.bf16.xpose.msra.mxu0 0
    %3108 = vmatprep.subr.bf16.mxu0 0
    %3109 = vmatpush1.bf16.xpose.msra.mxu0 0
    %3110 = vmatprep.subr.bf16.mxu0 0
    %3111 = vmatpush1.bf16.xpose.msra.mxu0 0
    %3112 = vmatprep.subr.bf16.mxu0 0
    %3113 = vmatpush1.bf16.xpose.msra.mxu0 0
    %3114 = vmatprep.subr.bf16.mxu0 0
    %3115 = vmatpush1.bf16.xpose.msra.mxu0 0
    %3116 = vmatprep.subr.bf16.mxu0 0
    %3117 = vmatpush1.bf16.xpose.msra.mxu0 0
    %3118 = vmatprep.subr.bf16.mxu0 0
    %3119 = vmatpush1.bf16.xpose.msra.mxu0 0
    %3120 = vmatprep.subr.bf16.mxu0 0
    %3121 = vmatpush1.bf16.xpose.msra.mxu0 0
    %3122 = vmatprep.subr.bf16.mxu0 0
    %3123 = vmatpush1.bf16.xpose.msra.mxu0 0
    %3124 = vmatprep.mubr.bf16.mxu0 %v2299
    %3125 = vmatmul.mubr.bf16.gmra.mrb[0].mxu0 %v2297
    %v3126 = vpop.f32.mrb[0].mxu0
    %v3127 = vadd.f32 %v3087, %v3126
    %v3128 = vpop.f32.mrb[0].mxu0
    %v3129 = vpop.f32.mrb[0].mxu0
    %v3130 = vpop.f32.mrb[0].mxu0
    %3131 = vdwg.mxu0
    %vm3132 = vcmask 123904
    %3133 = vst.msk [vmem:[#allocation6] sm:$0x3] %vm3132, %v3127
    // Predicated region
    $region34: #{wide_model_forward.1} parent=1 // pred_check
      _
    $region35: #{wide_model_forward.1} parent=1 // pred_check_branch
      %3135 = sbr.rel (0) target = $region37
    $region36: #{wide_model_forward.1} parent=1 // pred_region
      %s3137 = ssub.s32 32, 32
      %3138 = vsyncadd [#allocation5], %s3137
      %s3140 = sshll.u32 [#allocation6], 4
      %s3141 = int_to_ptr.vmem [resolvable:$true] %s3140
      %3143 = dma.vmem_to_hbm [thread:$0]  %s3141, 32, %s7, [#allocation5]
    $region37: #{wide_model_forward.1} parent=1 // pred_fallthru
      _
    // Predicated region
    $region38: #{wide_model_forward.1} parent=1 // pred_check
      _
    $region39: #{wide_model_forward.1} parent=1 // pred_check_branch
      %3145 = sbr.rel (0) target = $region41
    $region40: #{wide_model_forward.1} parent=1 // pred_region
      %3146 = dma.done [#allocation5], 32
    $region41: #{wide_model_forward.1} parent=1 // pred_fallthru
      _
    %3147 = vsyncpa [#allocation4], 1
    %3148 = vsyncpa [#allocation5], 1

</llo_original>
